<compile_context>
chip_gen: v7x
topology: tpu7x:2x2x1
jax: 0.10.0
libtpu: 0.0.40
codegen_flags: <defaults>
</compile_context>

<pallas_src>
import jax
import jax.numpy as jnp
from jax.experimental import pallas as pl
from jax.experimental.pallas import tpu as pltpu

NEG_SLOPE = 0.01   # PyTorch LeakyReLU default negative_slope
EPS = 1e-5         # PyTorch BatchNorm2d default eps
C_IN = 128         # conv1 in/out channels (fixed by the module)
C_MID = 64         # conv2 out channels
C_OUT = 3          # conv3 out channels


# ----------------------------------------------------------------------------
# Pallas kernel: conv1(1x1)+BN+LReLU -> conv2(3x3,pad=1)+BN+LReLU -> conv3(1x1)+BN+LReLU
# ----------------------------------------------------------------------------
def _make_fused_kernel(Hu, Wu):
    M = Hu * Wu

    def leaky(v):
        return jnp.where(v >= 0.0, v, NEG_SLOPE * v)

    def kernel(xu_ref, w1_ref, b1_ref, w2_ref, b2_ref, w3_ref, b3_ref,
               o_ref, a1p_ref):
        # ---- stage 1: 1x1 conv (128->128) + folded BN + LeakyReLU ----------
        lhs1 = xu_ref[0].reshape(M, C_IN).astype(jnp.bfloat16)         # (256,128)
        a1 = jnp.dot(lhs1, w1_ref[...], preferred_element_type=jnp.float32)
        a1 = leaky(a1 + b1_ref[...])                                   # (256,128) f32

        # Write into a pre-zeroed VMEM scratch: the untouched 1-wide halo is
        # exactly the zero padding conv2 (padding=1) sees in PyTorch.
        a1p_ref[...] = jnp.zeros((Hu + 2, Wu + 2, C_IN), jnp.bfloat16)
        a1p_ref[1:Hu + 1, 1:Wu + 1, :] = a1.astype(jnp.bfloat16).reshape(Hu, Wu, C_IN)

        # ---- stage 2: 3x3 conv (128->64), pad=1, as 9 shifted MXU matmuls --
        acc = jnp.zeros((M, C_MID), jnp.float32)
        for idx in range(9):                       # static, unrolled taps
            kh, kw = idx // 3, idx % 3
            win = a1p_ref[kh:kh + Hu, kw:kw + Wu, :].reshape(M, C_IN)  # bf16
            acc = acc + jnp.dot(win, w2_ref[idx],
                                preferred_element_type=jnp.float32)
        a2 = leaky(acc + b2_ref[...])                                  # (256,64) f32

        # ---- stage 3: 1x1 conv (64->3) + folded BN + LeakyReLU -------------
        a3 = jnp.dot(a2.astype(jnp.bfloat16), w3_ref[...],
                     preferred_element_type=jnp.float32)               # (256,3)
        a3 = leaky(a3 + b3_ref[...])
        o_ref[0] = a3.reshape(Hu, Wu, C_OUT)

    return kernel


# ----------------------------------------------------------------------------
# Wrappers
# ----------------------------------------------------------------------------
def upsample2x_bilinear(x):
    """nn.Upsample(scale_factor=2, mode='bilinear', align_corners=False). NHWC."""
    def up_axis(v, axis):
        n = v.shape[axis]
        first = jax.lax.slice_in_dim(v, 0, 1, axis=axis)
        last = jax.lax.slice_in_dim(v, n - 1, n, axis=axis)
        prev = jnp.concatenate(
            [first, jax.lax.slice_in_dim(v, 0, n - 1, axis=axis)], axis=axis)
        nxt = jnp.concatenate(
            [jax.lax.slice_in_dim(v, 1, n, axis=axis), last], axis=axis)
        even = 0.75 * v + 0.25 * prev      # output index 2i
        odd = 0.75 * v + 0.25 * nxt        # output index 2i+1
        out = jnp.stack([even, odd], axis=axis + 1)
        new_shape = v.shape[:axis] + (2 * n,) + v.shape[axis + 1:]
        return out.reshape(new_shape)

    return up_axis(up_axis(x, 1), 2)


def albedo_generation_net_pallas(x, params):
    """x: (N,H,W,128) f32. Returns (N,2H,2W,3) f32."""
    N, H, W, c = x.shape
    assert c == C_IN
    Hu, Wu = 2 * H, 2 * W

    xu = upsample2x_bilinear(x)                          # (N, Hu, Wu, 128) XLA glue

    return pl.pallas_call(
        _make_fused_kernel(Hu, Wu),
        out_shape=jax.ShapeDtypeStruct((N, Hu, Wu, C_OUT), jnp.float32),
        grid=(N,),
        in_specs=[
            pl.BlockSpec((1, Hu, Wu, C_IN), lambda n: (n, 0, 0, 0)),
            pl.BlockSpec((C_IN, C_IN), lambda n: (0, 0)),
            pl.BlockSpec((1, C_IN), lambda n: (0, 0)),
            pl.BlockSpec((9, C_IN, C_MID), lambda n: (0, 0, 0)),
            pl.BlockSpec((1, C_MID), lambda n: (0, 0)),
            pl.BlockSpec((C_MID, C_OUT), lambda n: (0, 0)),
            pl.BlockSpec((1, C_OUT), lambda n: (0, 0)),
        ],
        out_specs=pl.BlockSpec((1, Hu, Wu, C_OUT), lambda n: (n, 0, 0, 0)),
        scratch_shapes=[pltpu.VMEM((Hu + 2, Wu + 2, C_IN), jnp.bfloat16)],
        compiler_params=pltpu.CompilerParams(dimension_semantics=("parallel",)),
    )(xu, params["w1"], params["b1"], params["w2"], params["b2"],
      params["w3"], params["b3"])


# ----------------------------------------------------------------------------
# Parameters (deterministic, synthetic) and eval-mode BN folding
# ----------------------------------------------------------------------------
def _init_conv_bn(key, cin, cout, k):
    kw_, kb_, kg, kbe, km, kv = jax.random.split(key, 6)
    fan_in = k * k * cin
    w = (1.0 / jnp.sqrt(fan_in)) * jax.random.normal(kw_, (k, k, cin, cout), jnp.float32)
    b = 0.05 * jax.random.normal(kb_, (cout,), jnp.float32)
    gamma = 1.0 + 0.1 * jax.random.normal(kg, (cout,), jnp.float32)
    beta = 0.1 * jax.random.normal(kbe, (cout,), jnp.float32)
    mean = 0.1 * jax.random.normal(km, (cout,), jnp.float32)
    var = 1.0 + 0.1 * jnp.abs(jax.random.normal(kv, (cout,), jnp.float32))
    return dict(w=w, b=b, gamma=gamma, beta=beta, mean=mean, var=var)


def init_raw_params(key):
    k1, k2, k3 = jax.random.split(key, 3)
    return dict(conv1=_init_conv_bn(k1, C_IN, C_IN, 1),
                conv2=_init_conv_bn(k2, C_IN, C_MID, 3),
                conv3=_init_conv_bn(k3, C_MID, C_OUT, 1))


def fold_params(raw):
    """Fold eval-mode BN into conv weight/bias; weights cast to bf16 for the MXU."""
    def fold(p):
        s = p["gamma"] / jnp.sqrt(p["var"] + EPS)
        w = p["w"] * s.reshape(1, 1, 1, -1)
        b = p["b"] * s + (p["beta"] - p["mean"] * s)
        return w, b

    w1, b1 = fold(raw["conv1"])
    w2, b2 = fold(raw["conv2"])
    w3, b3 = fold(raw["conv3"])
    return dict(
        w1=w1.reshape(C_IN, C_IN).astype(jnp.bfloat16),
        b1=b1.reshape(1, C_IN),
        w2=w2.reshape(9, C_IN, C_MID).astype(jnp.bfloat16),   # tap idx = kh*3+kw (HWIO)
        b2=b2.reshape(1, C_MID),
        w3=w3.reshape(C_MID, C_OUT).astype(jnp.bfloat16),
        b3=b3.reshape(1, C_OUT),
    )


# ----------------------------------------------------------------------------
# Pure-JAX reference (unfolded conv -> BN -> LeakyReLU, all f32)
# ----------------------------------------------------------------------------
def albedo_generation_net_ref(x, raw):
    def lrelu(v):
        return jnp.where(v >= 0, v, NEG_SLOPE * v)

    def block(v, p, padding):
        y = jax.lax.conv_general_dilated(
            v, p["w"], window_strides=(1, 1), padding=padding,
            dimension_numbers=("NHWC", "HWIO", "NHWC"))
        y = y + p["b"].reshape(1, 1, 1, -1)
        s = p["gamma"] / jnp.sqrt(p["var"] + EPS)
        t = p["beta"] - p["mean"] * s
        return lrelu(y * s.reshape(1, 1, 1, -1) + t.reshape(1, 1, 1, -1))

    out = upsample2x_bilinear(x)
    out = block(out, raw["conv1"], "VALID")   # 1x1
    out = block(out, raw["conv2"], "SAME")    # 3x3, padding=1
    out = block(out, raw["conv3"], "VALID")   # 1x1
    return out


if __name__ == "__main__":
    key = jax.random.PRNGKey(0)
    kx, kp = jax.random.split(key)

    N, H, W = 2, 8, 8                                       # upsampled to 16x16
    x = jax.random.normal(kx, (N, H, W, C_IN), jnp.float32)  # NHWC == NCHW [2,128,8,8]

    raw = init_raw_params(kp)
    params = fold_params(raw)

    out = albedo_generation_net_pallas(x, params)
    out = jax.block_until_ready(out)

    ref = albedo_generation_net_ref(x, raw)
    assert out.shape == (N, 2 * H, 2 * W, C_OUT)
    # bf16 weights/LHS with f32 accumulation -> allow a small bf16 tolerance.
    assert jnp.allclose(out, ref, atol=2e-2, rtol=2e-2), "mismatch vs reference"

    print("KERNEL_OK")
</pallas_src>

<mosaic_0001>
module attributes {stable_mosaic.version = 11 : i64} {
  func.func @kernel(%arg0: i32, %arg1: memref<1x16x16x128xf32, #tpu.memory_space<vmem>>, %arg2: memref<128x128xbf16, #tpu.memory_space<vmem>>, %arg3: memref<1x128xf32, #tpu.memory_space<vmem>>, %arg4: memref<9x128x64xbf16, #tpu.memory_space<vmem>>, %arg5: memref<1x64xf32, #tpu.memory_space<vmem>>, %arg6: memref<64x3xbf16, #tpu.memory_space<vmem>>, %arg7: memref<1x3xf32, #tpu.memory_space<vmem>>, %arg8: memref<1x16x16x3xf32, #tpu.memory_space<vmem>>, %arg9: memref<18x18x128xbf16, #tpu.memory_space<vmem>>) attributes {dimension_semantics = [#tpu.dimension_semantics<parallel>], iteration_bounds = array<i64: 2>, scalar_prefetch = 0 : i64, scratch_operands = 1 : i64, tpu.core_type = #tpu.core_type<tc>, window_params = [{transform_indices = @transform_0, window_bounds = array<i64: 1, 16, 16, 128>}, {pipeline_mode = #tpu.pipeline_mode<synchronous>, transform_indices = @transform_1, window_bounds = array<i64: 128, 128>}, {pipeline_mode = #tpu.pipeline_mode<synchronous>, transform_indices = @transform_2, window_bounds = array<i64: 1, 128>}, {pipeline_mode = #tpu.pipeline_mode<synchronous>, transform_indices = @transform_3, window_bounds = array<i64: 9, 128, 64>}, {pipeline_mode = #tpu.pipeline_mode<synchronous>, transform_indices = @transform_4, window_bounds = array<i64: 1, 64>}, {pipeline_mode = #tpu.pipeline_mode<synchronous>, transform_indices = @transform_5, window_bounds = array<i64: 64, 3>}, {pipeline_mode = #tpu.pipeline_mode<synchronous>, transform_indices = @transform_6, window_bounds = array<i64: 1, 3>}, {transform_indices = @transform_7, window_bounds = array<i64: 1, 16, 16, 3>}]} {
    %c0 = arith.constant 0 : index
    %c0_0 = arith.constant 0 : index
    %c0_1 = arith.constant 0 : index
    %c0_2 = arith.constant 0 : index
    %0 = vector.load %arg1[%c0, %c0_0, %c0_1, %c0_2] : memref<1x16x16x128xf32, #tpu.memory_space<vmem>>, vector<1x16x16x128xf32>
    %1 = vector.shape_cast %0 : vector<1x16x16x128xf32> to vector<16x16x128xf32>
    %2 = vector.shape_cast %1 : vector<16x16x128xf32> to vector<256x128xf32>
    %3 = arith.truncf %2 : vector<256x128xf32> to vector<256x128xbf16>
    %c0_3 = arith.constant 0 : index
    %c0_4 = arith.constant 0 : index
    %4 = vector.load %arg2[%c0_3, %c0_4] : memref<128x128xbf16, #tpu.memory_space<vmem>>, vector<128x128xbf16>
    %cst = arith.constant dense<0.000000e+00> : vector<256x128xf32>
    %5 = tpu.matmul %3, %4, %cst {dimension_numbers = #tpu.dot_dimension_numbers<[1], [0], [0], [1], [0, 0, 1, 1], [], []>} : vector<256x128xbf16>, vector<128x128xbf16>, vector<256x128xf32> -> vector<256x128xf32>
    %c0_5 = arith.constant 0 : index
    %c0_6 = arith.constant 0 : index
    %6 = vector.load %arg3[%c0_5, %c0_6] : memref<1x128xf32, #tpu.memory_space<vmem>>, vector<1x128xf32>
    %7 = vector.broadcast %6 : vector<1x128xf32> to vector<256x128xf32>
    %8 = arith.addf %5, %7 : vector<256x128xf32>
    %cst_7 = arith.constant 0.000000e+00 : f32
    %9 = vector.broadcast %cst_7 : f32 to vector<256x128xf32>
    %10 = arith.cmpf oge, %8, %9 : vector<256x128xf32>
    %cst_8 = arith.constant 0.00999999977 : f32
    %11 = vector.broadcast %cst_8 : f32 to vector<256x128xf32>
    %12 = arith.mulf %11, %8 : vector<256x128xf32>
    %13 = arith.select %10, %8, %12 : vector<256x128xi1>, vector<256x128xf32>
    %cst_9 = arith.constant 0.000000e+00 : bf16
    %14 = vector.broadcast %cst_9 : bf16 to vector<18x18x128xbf16>
    %c0_10 = arith.constant 0 : index
    %c0_11 = arith.constant 0 : index
    %c0_12 = arith.constant 0 : index
    %15 = vector.load %arg9[%c0_10, %c0_11, %c0_12] : memref<18x18x128xbf16, #tpu.memory_space<vmem>>, vector<18x18x128xbf16>
    tpu.vector_store %arg9[%c0_10, %c0_11, %c0_12], %14 {strides = array<i32>} : memref<18x18x128xbf16, #tpu.memory_space<vmem>>, vector<18x18x128xbf16>,
    %16 = arith.truncf %13 : vector<256x128xf32> to vector<256x128xbf16>
    %17 = vector.shape_cast %16 : vector<256x128xbf16> to vector<16x16x128xbf16>
    %c1 = arith.constant 1 : index
    %c1_13 = arith.constant 1 : index
    %c0_14 = arith.constant 0 : index
    %18 = vector.load %arg9[%c1, %c1_13, %c0_14] : memref<18x18x128xbf16, #tpu.memory_space<vmem>>, vector<16x16x128xbf16>
    tpu.vector_store %arg9[%c1, %c1_13, %c0_14], %17 {strides = array<i32>} : memref<18x18x128xbf16, #tpu.memory_space<vmem>>, vector<16x16x128xbf16>,
    %cst_15 = arith.constant 0.000000e+00 : f32
    %19 = vector.broadcast %cst_15 : f32 to vector<256x64xf32>
    %c0_16 = arith.constant 0 : index
    %c0_17 = arith.constant 0 : index
    %c0_18 = arith.constant 0 : index
    %20 = vector.load %arg9[%c0_16, %c0_17, %c0_18] : memref<18x18x128xbf16, #tpu.memory_space<vmem>>, vector<16x16x128xbf16>
    %21 = vector.shape_cast %20 : vector<16x16x128xbf16> to vector<256x128xbf16>
    %c0_19 = arith.constant 0 : index
    %c0_20 = arith.constant 0 : index
    %c0_21 = arith.constant 0 : index
    %22 = vector.load %arg4[%c0_19, %c0_20, %c0_21] : memref<9x128x64xbf16, #tpu.memory_space<vmem>>, vector<1x128x64xbf16>
    %23 = vector.shape_cast %22 : vector<1x128x64xbf16> to vector<128x64xbf16>
    %cst_22 = arith.constant dense<0.000000e+00> : vector<256x64xf32>
    %24 = tpu.matmul %21, %23, %cst_22 {dimension_numbers = #tpu.dot_dimension_numbers<[1], [0], [0], [1], [0, 0, 1, 1], [], []>} : vector<256x128xbf16>, vector<128x64xbf16>, vector<256x64xf32> -> vector<256x64xf32>
    %25 = arith.addf %19, %24 : vector<256x64xf32>
    %c0_23 = arith.constant 0 : index
    %c1_24 = arith.constant 1 : index
    %c0_25 = arith.constant 0 : index
    %26 = vector.load %arg9[%c0_23, %c1_24, %c0_25] : memref<18x18x128xbf16, #tpu.memory_space<vmem>>, vector<16x16x128xbf16>
    %27 = vector.shape_cast %26 : vector<16x16x128xbf16> to vector<256x128xbf16>
    %c1_26 = arith.constant 1 : index
    %c0_27 = arith.constant 0 : index
    %c0_28 = arith.constant 0 : index
    %28 = vector.load %arg4[%c1_26, %c0_27, %c0_28] : memref<9x128x64xbf16, #tpu.memory_space<vmem>>, vector<1x128x64xbf16>
    %29 = vector.shape_cast %28 : vector<1x128x64xbf16> to vector<128x64xbf16>
    %cst_29 = arith.constant dense<0.000000e+00> : vector<256x64xf32>
    %30 = tpu.matmul %27, %29, %cst_29 {dimension_numbers = #tpu.dot_dimension_numbers<[1], [0], [0], [1], [0, 0, 1, 1], [], []>} : vector<256x128xbf16>, vector<128x64xbf16>, vector<256x64xf32> -> vector<256x64xf32>
    %31 = arith.addf %25, %30 : vector<256x64xf32>
    %c0_30 = arith.constant 0 : index
    %c2 = arith.constant 2 : index
    %c0_31 = arith.constant 0 : index
    %32 = vector.load %arg9[%c0_30, %c2, %c0_31] : memref<18x18x128xbf16, #tpu.memory_space<vmem>>, vector<16x16x128xbf16>
    %33 = vector.shape_cast %32 : vector<16x16x128xbf16> to vector<256x128xbf16>
    %c2_32 = arith.constant 2 : index
    %c0_33 = arith.constant 0 : index
    %c0_34 = arith.constant 0 : index
    %34 = vector.load %arg4[%c2_32, %c0_33, %c0_34] : memref<9x128x64xbf16, #tpu.memory_space<vmem>>, vector<1x128x64xbf16>
    %35 = vector.shape_cast %34 : vector<1x128x64xbf16> to vector<128x64xbf16>
    %cst_35 = arith.constant dense<0.000000e+00> : vector<256x64xf32>
    %36 = tpu.matmul %33, %35, %cst_35 {dimension_numbers = #tpu.dot_dimension_numbers<[1], [0], [0], [1], [0, 0, 1, 1], [], []>} : vector<256x128xbf16>, vector<128x64xbf16>, vector<256x64xf32> -> vector<256x64xf32>
    %37 = arith.addf %31, %36 : vector<256x64xf32>
    %c1_36 = arith.constant 1 : index
    %c0_37 = arith.constant 0 : index
    %c0_38 = arith.constant 0 : index
    %38 = vector.load %arg9[%c1_36, %c0_37, %c0_38] : memref<18x18x128xbf16, #tpu.memory_space<vmem>>, vector<16x16x128xbf16>
    %39 = vector.shape_cast %38 : vector<16x16x128xbf16> to vector<256x128xbf16>
    %c3 = arith.constant 3 : index
    %c0_39 = arith.constant 0 : index
    %c0_40 = arith.constant 0 : index
    %40 = vector.load %arg4[%c3, %c0_39, %c0_40] : memref<9x128x64xbf16, #tpu.memory_space<vmem>>, vector<1x128x64xbf16>
    %41 = vector.shape_cast %40 : vector<1x128x64xbf16> to vector<128x64xbf16>
    %cst_41 = arith.constant dense<0.000000e+00> : vector<256x64xf32>
    %42 = tpu.matmul %39, %41, %cst_41 {dimension_numbers = #tpu.dot_dimension_numbers<[1], [0], [0], [1], [0, 0, 1, 1], [], []>} : vector<256x128xbf16>, vector<128x64xbf16>, vector<256x64xf32> -> vector<256x64xf32>
    %43 = arith.addf %37, %42 : vector<256x64xf32>
    %c1_42 = arith.constant 1 : index
    %c1_43 = arith.constant 1 : index
    %c0_44 = arith.constant 0 : index
    %44 = vector.load %arg9[%c1_42, %c1_43, %c0_44] : memref<18x18x128xbf16, #tpu.memory_space<vmem>>, vector<16x16x128xbf16>
    %45 = vector.shape_cast %44 : vector<16x16x128xbf16> to vector<256x128xbf16>
    %c4 = arith.constant 4 : index
    %c0_45 = arith.constant 0 : index
    %c0_46 = arith.constant 0 : index
    %46 = vector.load %arg4[%c4, %c0_45, %c0_46] : memref<9x128x64xbf16, #tpu.memory_space<vmem>>, vector<1x128x64xbf16>
    %47 = vector.shape_cast %46 : vector<1x128x64xbf16> to vector<128x64xbf16>
    %cst_47 = arith.constant dense<0.000000e+00> : vector<256x64xf32>
    %48 = tpu.matmul %45, %47, %cst_47 {dimension_numbers = #tpu.dot_dimension_numbers<[1], [0], [0], [1], [0, 0, 1, 1], [], []>} : vector<256x128xbf16>, vector<128x64xbf16>, vector<256x64xf32> -> vector<256x64xf32>
    %49 = arith.addf %43, %48 : vector<256x64xf32>
    %c1_48 = arith.constant 1 : index
    %c2_49 = arith.constant 2 : index
    %c0_50 = arith.constant 0 : index
    %50 = vector.load %arg9[%c1_48, %c2_49, %c0_50] : memref<18x18x128xbf16, #tpu.memory_space<vmem>>, vector<16x16x128xbf16>
    %51 = vector.shape_cast %50 : vector<16x16x128xbf16> to vector<256x128xbf16>
    %c5 = arith.constant 5 : index
    %c0_51 = arith.constant 0 : index
    %c0_52 = arith.constant 0 : index
    %52 = vector.load %arg4[%c5, %c0_51, %c0_52] : memref<9x128x64xbf16, #tpu.memory_space<vmem>>, vector<1x128x64xbf16>
    %53 = vector.shape_cast %52 : vector<1x128x64xbf16> to vector<128x64xbf16>
    %cst_53 = arith.constant dense<0.000000e+00> : vector<256x64xf32>
    %54 = tpu.matmul %51, %53, %cst_53 {dimension_numbers = #tpu.dot_dimension_numbers<[1], [0], [0], [1], [0, 0, 1, 1], [], []>} : vector<256x128xbf16>, vector<128x64xbf16>, vector<256x64xf32> -> vector<256x64xf32>
    %55 = arith.addf %49, %54 : vector<256x64xf32>
    %c2_54 = arith.constant 2 : index
    %c0_55 = arith.constant 0 : index
    %c0_56 = arith.constant 0 : index
    %56 = vector.load %arg9[%c2_54, %c0_55, %c0_56] : memref<18x18x128xbf16, #tpu.memory_space<vmem>>, vector<16x16x128xbf16>
    %57 = vector.shape_cast %56 : vector<16x16x128xbf16> to vector<256x128xbf16>
    %c6 = arith.constant 6 : index
    %c0_57 = arith.constant 0 : index
    %c0_58 = arith.constant 0 : index
    %58 = vector.load %arg4[%c6, %c0_57, %c0_58] : memref<9x128x64xbf16, #tpu.memory_space<vmem>>, vector<1x128x64xbf16>
    %59 = vector.shape_cast %58 : vector<1x128x64xbf16> to vector<128x64xbf16>
    %cst_59 = arith.constant dense<0.000000e+00> : vector<256x64xf32>
    %60 = tpu.matmul %57, %59, %cst_59 {dimension_numbers = #tpu.dot_dimension_numbers<[1], [0], [0], [1], [0, 0, 1, 1], [], []>} : vector<256x128xbf16>, vector<128x64xbf16>, vector<256x64xf32> -> vector<256x64xf32>
    %61 = arith.addf %55, %60 : vector<256x64xf32>
    %c2_60 = arith.constant 2 : index
    %c1_61 = arith.constant 1 : index
    %c0_62 = arith.constant 0 : index
    %62 = vector.load %arg9[%c2_60, %c1_61, %c0_62] : memref<18x18x128xbf16, #tpu.memory_space<vmem>>, vector<16x16x128xbf16>
    %63 = vector.shape_cast %62 : vector<16x16x128xbf16> to vector<256x128xbf16>
    %c7 = arith.constant 7 : index
    %c0_63 = arith.constant 0 : index
    %c0_64 = arith.constant 0 : index
    %64 = vector.load %arg4[%c7, %c0_63, %c0_64] : memref<9x128x64xbf16, #tpu.memory_space<vmem>>, vector<1x128x64xbf16>
    %65 = vector.shape_cast %64 : vector<1x128x64xbf16> to vector<128x64xbf16>
    %cst_65 = arith.constant dense<0.000000e+00> : vector<256x64xf32>
    %66 = tpu.matmul %63, %65, %cst_65 {dimension_numbers = #tpu.dot_dimension_numbers<[1], [0], [0], [1], [0, 0, 1, 1], [], []>} : vector<256x128xbf16>, vector<128x64xbf16>, vector<256x64xf32> -> vector<256x64xf32>
    %67 = arith.addf %61, %66 : vector<256x64xf32>
    %c2_66 = arith.constant 2 : index
    %c2_67 = arith.constant 2 : index
    %c0_68 = arith.constant 0 : index
    %68 = vector.load %arg9[%c2_66, %c2_67, %c0_68] : memref<18x18x128xbf16, #tpu.memory_space<vmem>>, vector<16x16x128xbf16>
    %69 = vector.shape_cast %68 : vector<16x16x128xbf16> to vector<256x128xbf16>
    %c8 = arith.constant 8 : index
    %c0_69 = arith.constant 0 : index
    %c0_70 = arith.constant 0 : index
    %70 = vector.load %arg4[%c8, %c0_69, %c0_70] : memref<9x128x64xbf16, #tpu.memory_space<vmem>>, vector<1x128x64xbf16>
    %71 = vector.shape_cast %70 : vector<1x128x64xbf16> to vector<128x64xbf16>
    %cst_71 = arith.constant dense<0.000000e+00> : vector<256x64xf32>
    %72 = tpu.matmul %69, %71, %cst_71 {dimension_numbers = #tpu.dot_dimension_numbers<[1], [0], [0], [1], [0, 0, 1, 1], [], []>} : vector<256x128xbf16>, vector<128x64xbf16>, vector<256x64xf32> -> vector<256x64xf32>
    %73 = arith.addf %67, %72 : vector<256x64xf32>
    %c0_72 = arith.constant 0 : index
    %c0_73 = arith.constant 0 : index
    %74 = vector.load %arg5[%c0_72, %c0_73] : memref<1x64xf32, #tpu.memory_space<vmem>>, vector<1x64xf32>
    %75 = vector.broadcast %74 : vector<1x64xf32> to vector<256x64xf32>
    %76 = arith.addf %73, %75 : vector<256x64xf32>
    %cst_74 = arith.constant 0.000000e+00 : f32
    %77 = vector.broadcast %cst_74 : f32 to vector<256x64xf32>
    %78 = arith.cmpf oge, %76, %77 : vector<256x64xf32>
    %cst_75 = arith.constant 0.00999999977 : f32
    %79 = vector.broadcast %cst_75 : f32 to vector<256x64xf32>
    %80 = arith.mulf %79, %76 : vector<256x64xf32>
    %81 = arith.select %78, %76, %80 : vector<256x64xi1>, vector<256x64xf32>
    %82 = arith.truncf %81 : vector<256x64xf32> to vector<256x64xbf16>
    %c0_76 = arith.constant 0 : index
    %c0_77 = arith.constant 0 : index
    %83 = vector.load %arg6[%c0_76, %c0_77] : memref<64x3xbf16, #tpu.memory_space<vmem>>, vector<64x3xbf16>
    %cst_78 = arith.constant dense<0.000000e+00> : vector<256x3xf32>
    %84 = tpu.matmul %82, %83, %cst_78 {dimension_numbers = #tpu.dot_dimension_numbers<[1], [0], [0], [1], [0, 0, 1, 1], [], []>} : vector<256x64xbf16>, vector<64x3xbf16>, vector<256x3xf32> -> vector<256x3xf32>
    %c0_79 = arith.constant 0 : index
    %c0_80 = arith.constant 0 : index
    %85 = vector.load %arg7[%c0_79, %c0_80] : memref<1x3xf32, #tpu.memory_space<vmem>>, vector<1x3xf32>
    %86 = vector.broadcast %85 : vector<1x3xf32> to vector<256x3xf32>
    %87 = arith.addf %84, %86 : vector<256x3xf32>
    %cst_81 = arith.constant 0.000000e+00 : f32
    %88 = vector.broadcast %cst_81 : f32 to vector<256x3xf32>
    %89 = arith.cmpf oge, %87, %88 : vector<256x3xf32>
    %cst_82 = arith.constant 0.00999999977 : f32
    %90 = vector.broadcast %cst_82 : f32 to vector<256x3xf32>
    %91 = arith.mulf %90, %87 : vector<256x3xf32>
    %92 = arith.select %89, %87, %91 : vector<256x3xi1>, vector<256x3xf32>
    %93 = vector.shape_cast %92 : vector<256x3xf32> to vector<16x16x3xf32>
    %c0_83 = arith.constant 0 : index
    %c0_84 = arith.constant 0 : index
    %c0_85 = arith.constant 0 : index
    %c0_86 = arith.constant 0 : index
    %94 = vector.load %arg8[%c0_83, %c0_84, %c0_85, %c0_86] : memref<1x16x16x3xf32, #tpu.memory_space<vmem>>, vector<1x16x16x3xf32>
    %95 = vector.shape_cast %94 : vector<1x16x16x3xf32> to vector<16x16x3xf32>
    %96 = vector.shape_cast %93 : vector<16x16x3xf32> to vector<1x16x16x3xf32>
    tpu.vector_store %arg8[%c0_83, %c0_84, %c0_85, %c0_86], %96 {strides = array<i32>} : memref<1x16x16x3xf32, #tpu.memory_space<vmem>>, vector<1x16x16x3xf32>,
    return
  }
  func.func @transform_0(%arg0: i32) -> (i32, i32, i32, i32) {
    %c0_i32 = arith.constant 0 : i32
    %c0_i32_0 = arith.constant 0 : i32
    %c0_i32_1 = arith.constant 0 : i32
    %c0_i32_2 = arith.constant 0 : i32
    return %arg0, %c0_i32, %c0_i32_0, %c0_i32_1 : i32, i32, i32, i32
  }
  func.func @transform_1(%arg0: i32) -> (i32, i32) {
    %c0_i32 = arith.constant 0 : i32
    %c0_i32_0 = arith.constant 0 : i32
    %c0_i32_1 = arith.constant 0 : i32
    return %c0_i32, %c0_i32_0 : i32, i32
  }
  func.func @transform_2(%arg0: i32) -> (i32, i32) {
    %c0_i32 = arith.constant 0 : i32
    %c0_i32_0 = arith.constant 0 : i32
    %c0_i32_1 = arith.constant 0 : i32
    return %c0_i32, %c0_i32_0 : i32, i32
  }
  func.func @transform_3(%arg0: i32) -> (i32, i32, i32) {
    %c0_i32 = arith.constant 0 : i32
    %c0_i32_0 = arith.constant 0 : i32
    %c0_i32_1 = arith.constant 0 : i32
    %c0_i32_2 = arith.constant 0 : i32
    return %c0_i32, %c0_i32_0, %c0_i32_1 : i32, i32, i32
  }
  func.func @transform_4(%arg0: i32) -> (i32, i32) {
    %c0_i32 = arith.constant 0 : i32
    %c0_i32_0 = arith.constant 0 : i32
    %c0_i32_1 = arith.constant 0 : i32
    return %c0_i32, %c0_i32_0 : i32, i32
  }
  func.func @transform_5(%arg0: i32) -> (i32, i32) {
    %c0_i32 = arith.constant 0 : i32
    %c0_i32_0 = arith.constant 0 : i32
    %c0_i32_1 = arith.constant 0 : i32
    return %c0_i32, %c0_i32_0 : i32, i32
  }
  func.func @transform_6(%arg0: i32) -> (i32, i32) {
    %c0_i32 = arith.constant 0 : i32
    %c0_i32_0 = arith.constant 0 : i32
    %c0_i32_1 = arith.constant 0 : i32
    return %c0_i32, %c0_i32_0 : i32, i32
  }
  func.func @transform_7(%arg0: i32) -> (i32, i32, i32, i32) {
    %c0_i32 = arith.constant 0 : i32
    %c0_i32_0 = arith.constant 0 : i32
    %c0_i32_1 = arith.constant 0 : i32
    %c0_i32_2 = arith.constant 0 : i32
    return %arg0, %c0_i32, %c0_i32_0, %c0_i32_1 : i32, i32, i32, i32
  }
}

</mosaic_0001>

<llo_original>
// kernel: tpu_custom_call.1
$region0: #{tpu_custom_call.1}
  #allocation0 [shape = 'u32[]', space=smem, size = 0x4, offset = 0x4, fixed_abs, tag = 'smem constant byte address 0x4 - core index']
  #allocation1 [shape = 'u32[144,128]{1,0:T(1,128)}', space=vmem, size = 0x12000, scoped, tag = 'internal scratch']
  #allocation2 [shape = 'bf16[18,18,128]{2,1,0:T(8,128)(2,1)}', space=vmem, size = 0x1b000, scoped, tag = 'scratch operand']
  %s0 = inlined_call_operand.vmem [shape: f32[2,16,16,128], index: 0, kind: input, shape index: {}]
  %s1 = inlined_call_operand.vmem [shape: bf16[128,128], index: 1, kind: input, shape index: {}]
  %s2 = inlined_call_operand.vmem [shape: f32[1,128], index: 2, kind: input, shape index: {}]
  %s3 = inlined_call_operand.vmem [shape: bf16[9,128,64], index: 3, kind: input, shape index: {}]
  %s4 = inlined_call_operand.vmem [shape: f32[1,64], index: 4, kind: input, shape index: {}]
  %s5 = inlined_call_operand.vmem [shape: bf16[64,3], index: 5, kind: input, shape index: {}]
  %s6 = inlined_call_operand.vmem [shape: f32[1,3], index: 6, kind: input, shape index: {}]
  %s7 = inlined_call_operand.vmem [shape: f32[2,16,16,3], index: 7, kind: output, shape index: {}]
  %s8 = sld [smem:[#allocation0]]
  $region61: #{tpu_custom_call.1} parent=0
    _
  %s10 = ssub.s32 1, %s8
  %s11 = scalar_select 0, %s10, %s8
  loop: start=0, step=1, limit=4
  $region2: #{tpu_custom_call.1} parent=0 // loop_pre_header
    _
  $region3: #{tpu_custom_call.1} parent=0 // loop_header
    %s13 = sphi 0, %s17
    %p14 = scmp.ge.s32.totalorder %s13, 4
    %s23 = sphi 0, %s25
    %s26 = sphi 0, %s23
    %s27 = sphi 0, %s26
    %s43 = sphi 0, %s27
    %s47 = sphi 0, %s47
    %s49 = sphi 0, %s47
    %s50 = sphi 0, %s49
    %s64 = sphi 0, %s50
    %s68 = sphi 0, %s68
    %s70 = sphi 0, %s68
    %s71 = sphi 0, %s70
    %s85 = sphi 0, %s71
    %s89 = sphi 0, %s89
    %s91 = sphi 0, %s89
    %s92 = sphi 0, %s91
    %s106 = sphi 0, %s92
    %s110 = sphi 0, %s110
    %s112 = sphi 0, %s110
    %s113 = sphi 0, %s112
    %s127 = sphi 0, %s113
    %s131 = sphi 0, %s131
    %s133 = sphi 0, %s131
    %s134 = sphi 0, %s133
    %s148 = sphi 0, %s134
    %s152 = sphi 0, %s152
    %s154 = sphi 0, %s152
    %s155 = sphi 0, %s154
    %s169 = sphi 0, %s155
    %s175 = sphi 0, %s177
    %s178 = sphi 0, %s175
    %s179 = sphi 0, %s178
    %s195 = sphi 0, %s179
  $region4: #{tpu_custom_call.1} parent=0 // loop_header_branch
    %16 = sbr.rel (%p14) target = $region8
  $region5: #{tpu_custom_call.1} parent=0 // loop_body
    %s18 = ssub.s32 %s13, 1
    %s19 = ssub.s32 %s13, 2
    %s20 = sadd.s32 %s13, 1
    %s21 = ssub.s32 %s13, %s20
    %p22 = scmp.eq.s32.totalorder %s21, 0
    %s24 = sadd.s32 %s23, 1
    %s25 = scalar_select %p22, %s23, %s24
    %p28 = pneg %p22
    %p29 = scmp.eq.s32.totalorder %s13, 1
    %p30 = por %p28, %p29
    %p31 = scmp.ne.s32.totalorder %s23, %s26
    %p32 = scmp.eq.s32.totalorder %s13, 0
    %p33 = por %p31, %p32
    %p34 = scmp.ne.s32.totalorder %s23, %s26
    %p35 = scmp.eq.s32.totalorder %s18, 1
    %p36 = por %p34, %p35
    %p37 = scmp.ne.s32.totalorder %s26, %s27
    %p38 = scmp.eq.s32.totalorder %s18, 0
    %p39 = por %p37, %p38
    %p40 = scmp.ne.s32.totalorder %s26, %s27
    %p41 = scmp.eq.s32.totalorder %s19, 1
    %p42 = por %p40, %p41
    %p44 = scmp.ne.s32.totalorder %s27, %s43
    %p45 = scmp.eq.s32.totalorder %s19, 0
    %p46 = por %p44, %p45
    %s48 = sadd.s32 %s47, 1
    %p51 = scmp.eq.s32.totalorder %s13, 1
    %p52 = scmp.ne.s32.totalorder %s47, %s49
    %p53 = scmp.eq.s32.totalorder %s13, 0
    %p54 = por %p52, %p53
    %p55 = scmp.ne.s32.totalorder %s47, %s49
    %p56 = scmp.eq.s32.totalorder %s18, 1
    %p57 = por %p55, %p56
    %p58 = scmp.ne.s32.totalorder %s49, %s50
    %p59 = scmp.eq.s32.totalorder %s18, 0
    %p60 = por %p58, %p59
    %p61 = scmp.ne.s32.totalorder %s49, %s50
    %p62 = scmp.eq.s32.totalorder %s19, 1
    %p63 = por %p61, %p62
    %p65 = scmp.ne.s32.totalorder %s50, %s64
    %p66 = scmp.eq.s32.totalorder %s19, 0
    %p67 = por %p65, %p66
    %s69 = sadd.s32 %s68, 1
    %p72 = scmp.eq.s32.totalorder %s13, 1
    %p73 = scmp.ne.s32.totalorder %s68, %s70
    %p74 = scmp.eq.s32.totalorder %s13, 0
    %p75 = por %p73, %p74
    %p76 = scmp.ne.s32.totalorder %s68, %s70
    %p77 = scmp.eq.s32.totalorder %s18, 1
    %p78 = por %p76, %p77
    %p79 = scmp.ne.s32.totalorder %s70, %s71
    %p80 = scmp.eq.s32.totalorder %s18, 0
    %p81 = por %p79, %p80
    %p82 = scmp.ne.s32.totalorder %s70, %s71
    %p83 = scmp.eq.s32.totalorder %s19, 1
    %p84 = por %p82, %p83
    %p86 = scmp.ne.s32.totalorder %s71, %s85
    %p87 = scmp.eq.s32.totalorder %s19, 0
    %p88 = por %p86, %p87
    %s90 = sadd.s32 %s89, 1
    %p93 = scmp.eq.s32.totalorder %s13, 1
    %p94 = scmp.ne.s32.totalorder %s89, %s91
    %p95 = scmp.eq.s32.totalorder %s13, 0
    %p96 = por %p94, %p95
    %p97 = scmp.ne.s32.totalorder %s89, %s91
    %p98 = scmp.eq.s32.totalorder %s18, 1
    %p99 = por %p97, %p98
    %p100 = scmp.ne.s32.totalorder %s91, %s92
    %p101 = scmp.eq.s32.totalorder %s18, 0
    %p102 = por %p100, %p101
    %p103 = scmp.ne.s32.totalorder %s91, %s92
    %p104 = scmp.eq.s32.totalorder %s19, 1
    %p105 = por %p103, %p104
    %p107 = scmp.ne.s32.totalorder %s92, %s106
    %p108 = scmp.eq.s32.totalorder %s19, 0
    %p109 = por %p107, %p108
    %s111 = sadd.s32 %s110, 1
    %p114 = scmp.eq.s32.totalorder %s13, 1
    %p115 = scmp.ne.s32.totalorder %s110, %s112
    %p116 = scmp.eq.s32.totalorder %s13, 0
    %p117 = por %p115, %p116
    %p118 = scmp.ne.s32.totalorder %s110, %s112
    %p119 = scmp.eq.s32.totalorder %s18, 1
    %p120 = por %p118, %p119
    %p121 = scmp.ne.s32.totalorder %s112, %s113
    %p122 = scmp.eq.s32.totalorder %s18, 0
    %p123 = por %p121, %p122
    %p124 = scmp.ne.s32.totalorder %s112, %s113
    %p125 = scmp.eq.s32.totalorder %s19, 1
    %p126 = por %p124, %p125
    %p128 = scmp.ne.s32.totalorder %s113, %s127
    %p129 = scmp.eq.s32.totalorder %s19, 0
    %p130 = por %p128, %p129
    %s132 = sadd.s32 %s131, 1
    %p135 = scmp.eq.s32.totalorder %s13, 1
    %p136 = scmp.ne.s32.totalorder %s131, %s133
    %p137 = scmp.eq.s32.totalorder %s13, 0
    %p138 = por %p136, %p137
    %p139 = scmp.ne.s32.totalorder %s131, %s133
    %p140 = scmp.eq.s32.totalorder %s18, 1
    %p141 = por %p139, %p140
    %p142 = scmp.ne.s32.totalorder %s133, %s134
    %p143 = scmp.eq.s32.totalorder %s18, 0
    %p144 = por %p142, %p143
    %p145 = scmp.ne.s32.totalorder %s133, %s134
    %p146 = scmp.eq.s32.totalorder %s19, 1
    %p147 = por %p145, %p146
    %p149 = scmp.ne.s32.totalorder %s134, %s148
    %p150 = scmp.eq.s32.totalorder %s19, 0
    %p151 = por %p149, %p150
    %s153 = sadd.s32 %s152, 1
    %p156 = scmp.eq.s32.totalorder %s13, 1
    %p157 = scmp.ne.s32.totalorder %s152, %s154
    %p158 = scmp.eq.s32.totalorder %s13, 0
    %p159 = por %p157, %p158
    %p160 = scmp.ne.s32.totalorder %s152, %s154
    %p161 = scmp.eq.s32.totalorder %s18, 1
    %p162 = por %p160, %p161
    %p163 = scmp.ne.s32.totalorder %s154, %s155
    %p164 = scmp.eq.s32.totalorder %s18, 0
    %p165 = por %p163, %p164
    %p166 = scmp.ne.s32.totalorder %s154, %s155
    %p167 = scmp.eq.s32.totalorder %s19, 1
    %p168 = por %p166, %p167
    %p170 = scmp.ne.s32.totalorder %s155, %s169
    %p171 = scmp.eq.s32.totalorder %s19, 0
    %p172 = por %p170, %p171
    %s173 = ssub.s32 %s13, %s20
    %p174 = scmp.eq.s32.totalorder %s173, 0
    %s176 = sadd.s32 %s175, 1
    %s177 = scalar_select %p174, %s175, %s176
    %p180 = pneg %p174
    %p181 = scmp.eq.s32.totalorder %s13, 1
    %p182 = por %p180, %p181
    %p183 = scmp.ne.s32.totalorder %s175, %s178
    %p184 = scmp.eq.s32.totalorder %s13, 0
    %p185 = por %p183, %p184
    %p186 = scmp.ne.s32.totalorder %s175, %s178
    %p187 = scmp.eq.s32.totalorder %s18, 1
    %p188 = por %p186, %p187
    %p189 = scmp.ne.s32.totalorder %s178, %s179
    %p190 = scmp.eq.s32.totalorder %s18, 0
    %p191 = por %p189, %p190
    %p192 = scmp.ne.s32.totalorder %s178, %s179
    %p193 = scmp.eq.s32.totalorder %s19, 1
    %p194 = por %p192, %p193
    %p196 = scmp.ne.s32.totalorder %s179, %s195
    %p197 = scmp.eq.s32.totalorder %s19, 0
    %p198 = por %p196, %p197
    %p199 = scmp.le.s32.totalorder 1, %s13
    %p200 = scmp.lt.s32.totalorder %s13, 3
    %p201 = pnand %p199, %p200
    %p202 = pneg %p201
    // Predicated region
    $region9: #{tpu_custom_call.1} parent=5 // pred_check
      _
    $region10: #{tpu_custom_call.1} parent=5 // pred_check_branch
      %204 = sbr.rel (%p201) target = $region12
    $region11: #{tpu_custom_call.1} parent=5 // pred_region
      %s205 = ssub.s32 %s13, 1
      // Predicated region
      $region13: #{tpu_custom_call.1} parent=11 // pred_check
        %p206 = pneg %p60
      $region14: #{tpu_custom_call.1} parent=11 // pred_check_branch
        %208 = sbr.rel (%p206) target = $region16
      $region15: #{tpu_custom_call.1} parent=11 // pred_region
        _
      $region16: #{tpu_custom_call.1} parent=11 // pred_fallthru
        _
      // Predicated region
      $region17: #{tpu_custom_call.1} parent=11 // pred_check
        %p209 = pneg %p81
      $region18: #{tpu_custom_call.1} parent=11 // pred_check_branch
        %211 = sbr.rel (%p209) target = $region20
      $region19: #{tpu_custom_call.1} parent=11 // pred_region
        _
      $region20: #{tpu_custom_call.1} parent=11 // pred_fallthru
        _
      // Predicated region
      $region21: #{tpu_custom_call.1} parent=11 // pred_check
        %p212 = pneg %p102
      $region22: #{tpu_custom_call.1} parent=11 // pred_check_branch
        %214 = sbr.rel (%p212) target = $region24
      $region23: #{tpu_custom_call.1} parent=11 // pred_region
        _
      $region24: #{tpu_custom_call.1} parent=11 // pred_fallthru
        _
      // Predicated region
      $region25: #{tpu_custom_call.1} parent=11 // pred_check
        %p215 = pneg %p123
      $region26: #{tpu_custom_call.1} parent=11 // pred_check_branch
        %217 = sbr.rel (%p215) target = $region28
      $region27: #{tpu_custom_call.1} parent=11 // pred_region
        _
      $region28: #{tpu_custom_call.1} parent=11 // pred_fallthru
        _
      // Predicated region
      $region29: #{tpu_custom_call.1} parent=11 // pred_check
        %p218 = pneg %p144
      $region30: #{tpu_custom_call.1} parent=11 // pred_check_branch
        %220 = sbr.rel (%p218) target = $region32
      $region31: #{tpu_custom_call.1} parent=11 // pred_region
        _
      $region32: #{tpu_custom_call.1} parent=11 // pred_fallthru
        _
      // Predicated region
      $region33: #{tpu_custom_call.1} parent=11 // pred_check
        %p221 = pneg %p165
      $region34: #{tpu_custom_call.1} parent=11 // pred_check_branch
        %223 = sbr.rel (%p221) target = $region36
      $region35: #{tpu_custom_call.1} parent=11 // pred_region
        _
      $region36: #{tpu_custom_call.1} parent=11 // pred_fallthru
        _
    $region12: #{tpu_custom_call.1} parent=5 // pred_fallthru
      _
    %p224 = scmp.lt.s32.totalorder %s13, 2
    // Predicated region
    $region37: #{tpu_custom_call.1} parent=5 // pred_check
      %p225 = pneg %p224
    $region38: #{tpu_custom_call.1} parent=5 // pred_check_branch
      %227 = sbr.rel (%p225) target = $region40
    $region39: #{tpu_custom_call.1} parent=5 // pred_region
      // Predicated region
      $region41: #{tpu_custom_call.1} parent=39 // pred_check
        %p228 = pneg %p33
      $region42: #{tpu_custom_call.1} parent=39 // pred_check_branch
        %230 = sbr.rel (%p228) target = $region44
      $region43: #{tpu_custom_call.1} parent=39 // pred_region
        %p231 = scmp.lt.s32.totalorder %s13, 1
        %s232 = scalar_select %p231, %s13, 1
        %s233 = smul.addr %s232, 32
        %s234 = smul.addr %s233, 8
        %s235 = scalar_lea.vmem %s0, %s234
      $region44: #{tpu_custom_call.1} parent=39 // pred_fallthru
        _
    $region40: #{tpu_custom_call.1} parent=5 // pred_fallthru
      _
    %p236 = scmp.le.s32.totalorder 1, %s13
    %p237 = scmp.lt.s32.totalorder %s13, 3
    %p238 = pnand %p236, %p237
    %p239 = pneg %p238
    // Predicated region
    $region45: #{tpu_custom_call.1} parent=5 // pred_check
      _
    $region46: #{tpu_custom_call.1} parent=5 // pred_check_branch
      %241 = sbr.rel (%p238) target = $region48
    $region47: #{tpu_custom_call.1} parent=5 // pred_region
      %s242 = ssub.s32 %s13, 1
      %p243 = scmp.lt.s32.totalorder %s18, 1
      %s244 = scalar_select %p243, %s18, 1
      %s245 = smul.addr %s244, 32
      %s246 = smul.addr %s245, 8
      %s247 = scalar_lea.vmem %s0, %s246
      %p248 = pneg %p39
      %p249 = pneg %p36
      %p250 = pneg %p60
      %p251 = pneg %p57
      %p252 = pneg %p81
      %p253 = pneg %p78
      %p254 = pneg %p102
      %p255 = pneg %p99
      %p256 = pneg %p123
      %p257 = pneg %p120
      %p258 = pneg %p144
      %p259 = pneg %p141
      %p260 = pneg %p165
      %p261 = pneg %p162
      %p262 = pneg %p191
      %p263 = pneg %p188
      %p264 = scmp.lt.s32.totalorder %s18, 1
      %s265 = scalar_select %p264, %s18, 1
      %s266 = smul.addr %s265, 32
      %s267 = smul.addr %s266, 8
      %s268 = scalar_lea.vmem %s7, %s267
      %p269 = scmp.lt.s32.totalorder %s18, 1
      %s270 = scalar_select %p269, %s18, 1
      %s271 = smul.addr %s270, 32
      %s272 = smul.addr %s271, 8
      %s273 = scalar_lea.vmem %s0, %s272
      %p274 = scmp.lt.s32.totalorder %s18, 1
      %s275 = scalar_select %p274, %s18, 1
      %s276 = smul.addr %s275, 32
      %s277 = smul.addr %s276, 8
      %s278 = scalar_lea.vmem %s7, %s277
      %v280 = vld [vmem:[%s273] sm:$0xff]
      %v281 = vld [vmem:[%s273 + $0x8] sm:$0xff]
      %v282 = vld [vmem:[%s273 + $0x10] sm:$0xff]
      %v283 = vld [vmem:[%s273 + $0x18] sm:$0xff]
      %v284 = vld [vmem:[%s273 + $0x20] sm:$0xff]
      %v285 = vld [vmem:[%s273 + $0x28] sm:$0xff]
      %v286 = vld [vmem:[%s273 + $0x30] sm:$0xff]
      %v287 = vld [vmem:[%s273 + $0x38] sm:$0xff]
      %v288 = vld [vmem:[%s273 + $0x40] sm:$0xff]
      %v289 = vld [vmem:[%s273 + $0x48] sm:$0xff]
      %v290 = vld [vmem:[%s273 + $0x50] sm:$0xff]
      %v291 = vld [vmem:[%s273 + $0x58] sm:$0xff]
      %v292 = vld [vmem:[%s273 + $0x60] sm:$0xff]
      %v293 = vld [vmem:[%s273 + $0x68] sm:$0xff]
      %v294 = vld [vmem:[%s273 + $0x70] sm:$0xff]
      %v295 = vld [vmem:[%s273 + $0x78] sm:$0xff]
      %v296 = vld [vmem:[%s273 + $0x80] sm:$0xff]
      %v297 = vld [vmem:[%s273 + $0x88] sm:$0xff]
      %v298 = vld [vmem:[%s273 + $0x90] sm:$0xff]
      %v299 = vld [vmem:[%s273 + $0x98] sm:$0xff]
      %v300 = vld [vmem:[%s273 + $0xa0] sm:$0xff]
      %v301 = vld [vmem:[%s273 + $0xa8] sm:$0xff]
      %v302 = vld [vmem:[%s273 + $0xb0] sm:$0xff]
      %v303 = vld [vmem:[%s273 + $0xb8] sm:$0xff]
      %v304 = vld [vmem:[%s273 + $0xc0] sm:$0xff]
      %v305 = vld [vmem:[%s273 + $0xc8] sm:$0xff]
      %v306 = vld [vmem:[%s273 + $0xd0] sm:$0xff]
      %v307 = vld [vmem:[%s273 + $0xd8] sm:$0xff]
      %v308 = vld [vmem:[%s273 + $0xe0] sm:$0xff]
      %v309 = vld [vmem:[%s273 + $0xe8] sm:$0xff]
      %v310 = vld [vmem:[%s273 + $0xf0] sm:$0xff]
      %v311 = vld [vmem:[%s273 + $0xf8] sm:$0xff]
      %v312 = vpack.c.bf16 %v281, %v280
      %v313 = vpack.c.bf16 %v283, %v282
      %v314 = vpack.c.bf16 %v285, %v284
      %v315 = vpack.c.bf16 %v287, %v286
      %v316 = vpack.c.bf16 %v289, %v288
      %v317 = vpack.c.bf16 %v291, %v290
      %v318 = vpack.c.bf16 %v293, %v292
      %v319 = vpack.c.bf16 %v295, %v294
      %v320 = vpack.c.bf16 %v297, %v296
      %v321 = vpack.c.bf16 %v299, %v298
      %v322 = vpack.c.bf16 %v301, %v300
      %v323 = vpack.c.bf16 %v303, %v302
      %v324 = vpack.c.bf16 %v305, %v304
      %v325 = vpack.c.bf16 %v307, %v306
      %v326 = vpack.c.bf16 %v309, %v308
      %v327 = vpack.c.bf16 %v311, %v310
      %v328 = vld [vmem:[%s1] sm:$0xf]
      %v329 = vld [vmem:[%s1 + $0x4] sm:$0xf]
      %v330 = vld [vmem:[%s1 + $0x8] sm:$0xf]
      %v331 = vld [vmem:[%s1 + $0xc] sm:$0xf]
      %v332 = vld [vmem:[%s1 + $0x10] sm:$0xf]
      %v333 = vld [vmem:[%s1 + $0x14] sm:$0xf]
      %v334 = vld [vmem:[%s1 + $0x18] sm:$0xf]
      %v335 = vld [vmem:[%s1 + $0x1c] sm:$0xf]
      %v336 = vld [vmem:[%s1 + $0x20] sm:$0xf]
      %v337 = vld [vmem:[%s1 + $0x24] sm:$0xf]
      %v338 = vld [vmem:[%s1 + $0x28] sm:$0xf]
      %v339 = vld [vmem:[%s1 + $0x2c] sm:$0xf]
      %v340 = vld [vmem:[%s1 + $0x30] sm:$0xf]
      %v341 = vld [vmem:[%s1 + $0x34] sm:$0xf]
      %v342 = vld [vmem:[%s1 + $0x38] sm:$0xf]
      %v343 = vld [vmem:[%s1 + $0x3c] sm:$0xf]
      %v344 = vld [vmem:[%s2] sm:$0x1]
      %v346 = vlaneseq
      %v347 = vshrl.u32 %v346, 7
      %v348 = vsub.s32 0, %v347
      %v349 = vrot.slane %v344, %v348
      %v367 = vunpack.c.l.b16 %v328
      %v368 = vunpack.c.l.b16 %v329
      %v369 = vunpack.c.l.b16 %v330
      %v370 = vunpack.c.l.b16 %v331
      %v371 = vunpack.c.l.b16 %v332
      %v372 = vunpack.c.l.b16 %v333
      %v373 = vunpack.c.l.b16 %v334
      %v374 = vunpack.c.l.b16 %v335
      %v375 = vunpack.c.l.b16 %v336
      %v376 = vunpack.c.l.b16 %v337
      %v377 = vunpack.c.l.b16 %v338
      %v378 = vunpack.c.l.b16 %v339
      %v379 = vunpack.c.l.b16 %v340
      %v380 = vunpack.c.l.b16 %v341
      %v381 = vunpack.c.l.b16 %v342
      %v382 = vunpack.c.l.b16 %v343
      %v383 = vpack.c.b16 %v368, %v367
      %v384 = vpack.c.b16 %v370, %v369
      %v385 = vpack.c.b16 %v372, %v371
      %v386 = vpack.c.b16 %v374, %v373
      %v387 = vpack.c.b16 %v376, %v375
      %v388 = vpack.c.b16 %v378, %v377
      %v389 = vpack.c.b16 %v380, %v379
      %v390 = vpack.c.b16 %v382, %v381
      %399 = vmatprep.subr.bf16.mxu0 0
      %400 = vmatpush1.bf16.msra.mxu0 %v383
      %401 = vmatprep.subr.bf16.mxu0 0
      %402 = vmatpush1.bf16.msra.mxu0 %v384
      %403 = vmatprep.subr.bf16.mxu0 0
      %404 = vmatpush1.bf16.msra.mxu0 %v385
      %405 = vmatprep.subr.bf16.mxu0 0
      %406 = vmatpush1.bf16.msra.mxu0 %v386
      %407 = vmatprep.subr.bf16.mxu0 0
      %408 = vmatpush1.bf16.msra.mxu0 %v387
      %409 = vmatprep.subr.bf16.mxu0 0
      %410 = vmatpush1.bf16.msra.mxu0 %v388
      %411 = vmatprep.subr.bf16.mxu0 0
      %412 = vmatpush1.bf16.msra.mxu0 %v389
      %413 = vmatprep.subr.bf16.mxu0 0
      %414 = vmatpush1.bf16.msra.mxu0 %v390
      %415 = vmatprep.subr.bf16.mxu0 0
      %416 = vmatpush1.bf16.msra.mxu0 0
      %417 = vmatprep.subr.bf16.mxu0 0
      %418 = vmatpush1.bf16.msra.mxu0 0
      %419 = vmatprep.subr.bf16.mxu0 0
      %420 = vmatpush1.bf16.msra.mxu0 0
      %421 = vmatprep.subr.bf16.mxu0 0
      %422 = vmatpush1.bf16.msra.mxu0 0
      %423 = vmatprep.subr.bf16.mxu0 0
      %424 = vmatpush1.bf16.msra.mxu0 0
      %425 = vmatprep.subr.bf16.mxu0 0
      %426 = vmatpush1.bf16.msra.mxu0 0
      %427 = vmatprep.subr.bf16.mxu0 0
      %428 = vmatpush1.bf16.msra.mxu0 0
      %429 = vmatprep.subr.bf16.mxu0 0
      %430 = vmatpush1.bf16.msra.mxu0 0
      %431 = vmatprep.mubr.bf16.mxu0 0
      %432 = vmatmul.mubr.bf16.gmra.mrb[0].mxu0 %v312
      %v433 = vpop.f32.mrb[0].mxu0
      %v434 = vadd.f32 %v349, %v433
      %v435 = vpop.f32.mrb[0].mxu0
      %v436 = vpop.f32.mrb[0].mxu0
      %v437 = vadd.f32 %v349, %v436
      %v438 = vpop.f32.mrb[0].mxu0
      %439 = vmatprep.mubr.bf16.mxu0 0
      %440 = vmatmul.mubr.bf16.gmra.mrb[0].mxu0 %v313
      %v441 = vpop.f32.mrb[0].mxu0
      %v442 = vadd.f32 %v349, %v441
      %v443 = vpop.f32.mrb[0].mxu0
      %v444 = vpop.f32.mrb[0].mxu0
      %v445 = vadd.f32 %v349, %v444
      %v446 = vpop.f32.mrb[0].mxu0
      %447 = vmatprep.mubr.bf16.mxu0 0
      %448 = vmatmul.mubr.bf16.gmra.mrb[0].mxu0 %v314
      %v449 = vpop.f32.mrb[0].mxu0
      %v450 = vadd.f32 %v349, %v449
      %v451 = vpop.f32.mrb[0].mxu0
      %v452 = vpop.f32.mrb[0].mxu0
      %v453 = vadd.f32 %v349, %v452
      %v454 = vpop.f32.mrb[0].mxu0
      %455 = vmatprep.mubr.bf16.mxu0 0
      %456 = vmatmul.mubr.bf16.gmra.mrb[0].mxu0 %v315
      %v457 = vpop.f32.mrb[0].mxu0
      %v458 = vadd.f32 %v349, %v457
      %v459 = vpop.f32.mrb[0].mxu0
      %v460 = vpop.f32.mrb[0].mxu0
      %v461 = vadd.f32 %v349, %v460
      %v462 = vpop.f32.mrb[0].mxu0
      %463 = vmatprep.mubr.bf16.mxu0 0
      %464 = vmatmul.mubr.bf16.gmra.mrb[0].mxu0 %v316
      %v465 = vpop.f32.mrb[0].mxu0
      %v466 = vadd.f32 %v349, %v465
      %v467 = vpop.f32.mrb[0].mxu0
      %v468 = vpop.f32.mrb[0].mxu0
      %v469 = vadd.f32 %v349, %v468
      %v470 = vpop.f32.mrb[0].mxu0
      %471 = vmatprep.mubr.bf16.mxu0 0
      %472 = vmatmul.mubr.bf16.gmra.mrb[0].mxu0 %v317
      %v473 = vpop.f32.mrb[0].mxu0
      %v474 = vadd.f32 %v349, %v473
      %v475 = vpop.f32.mrb[0].mxu0
      %v476 = vpop.f32.mrb[0].mxu0
      %v477 = vadd.f32 %v349, %v476
      %v478 = vpop.f32.mrb[0].mxu0
      %479 = vmatprep.mubr.bf16.mxu0 0
      %480 = vmatmul.mubr.bf16.gmra.mrb[0].mxu0 %v318
      %v481 = vpop.f32.mrb[0].mxu0
      %v482 = vadd.f32 %v349, %v481
      %v483 = vpop.f32.mrb[0].mxu0
      %v484 = vpop.f32.mrb[0].mxu0
      %v485 = vadd.f32 %v349, %v484
      %v486 = vpop.f32.mrb[0].mxu0
      %487 = vmatprep.mubr.bf16.mxu0 0
      %488 = vmatmul.mubr.bf16.gmra.mrb[0].mxu0 %v319
      %v489 = vpop.f32.mrb[0].mxu0
      %v490 = vadd.f32 %v349, %v489
      %v491 = vpop.f32.mrb[0].mxu0
      %v492 = vpop.f32.mrb[0].mxu0
      %v493 = vadd.f32 %v349, %v492
      %v494 = vpop.f32.mrb[0].mxu0
      %495 = vmatprep.mubr.bf16.mxu0 0
      %496 = vmatmul.mubr.bf16.gmra.mrb[0].mxu0 %v320
      %v497 = vpop.f32.mrb[0].mxu0
      %v498 = vadd.f32 %v349, %v497
      %v499 = vpop.f32.mrb[0].mxu0
      %v500 = vpop.f32.mrb[0].mxu0
      %v501 = vadd.f32 %v349, %v500
      %v502 = vpop.f32.mrb[0].mxu0
      %503 = vmatprep.mubr.bf16.mxu0 0
      %504 = vmatmul.mubr.bf16.gmra.mrb[0].mxu0 %v321
      %v505 = vpop.f32.mrb[0].mxu0
      %v506 = vadd.f32 %v349, %v505
      %v507 = vpop.f32.mrb[0].mxu0
      %v508 = vpop.f32.mrb[0].mxu0
      %v509 = vadd.f32 %v349, %v508
      %v510 = vpop.f32.mrb[0].mxu0
      %511 = vmatprep.mubr.bf16.mxu0 0
      %512 = vmatmul.mubr.bf16.gmra.mrb[0].mxu0 %v322
      %v513 = vpop.f32.mrb[0].mxu0
      %v514 = vadd.f32 %v349, %v513
      %v515 = vpop.f32.mrb[0].mxu0
      %v516 = vpop.f32.mrb[0].mxu0
      %v517 = vadd.f32 %v349, %v516
      %v518 = vpop.f32.mrb[0].mxu0
      %519 = vmatprep.mubr.bf16.mxu0 0
      %520 = vmatmul.mubr.bf16.gmra.mrb[0].mxu0 %v323
      %v521 = vpop.f32.mrb[0].mxu0
      %v522 = vadd.f32 %v349, %v521
      %v523 = vpop.f32.mrb[0].mxu0
      %v524 = vpop.f32.mrb[0].mxu0
      %v525 = vadd.f32 %v349, %v524
      %v526 = vpop.f32.mrb[0].mxu0
      %527 = vmatprep.mubr.bf16.mxu0 0
      %528 = vmatmul.mubr.bf16.gmra.mrb[0].mxu0 %v324
      %v529 = vpop.f32.mrb[0].mxu0
      %v530 = vadd.f32 %v349, %v529
      %v531 = vpop.f32.mrb[0].mxu0
      %v532 = vpop.f32.mrb[0].mxu0
      %v533 = vadd.f32 %v349, %v532
      %v534 = vpop.f32.mrb[0].mxu0
      %535 = vmatprep.mubr.bf16.mxu0 0
      %536 = vmatmul.mubr.bf16.gmra.mrb[0].mxu0 %v325
      %v537 = vpop.f32.mrb[0].mxu0
      %v538 = vadd.f32 %v349, %v537
      %v539 = vpop.f32.mrb[0].mxu0
      %v540 = vpop.f32.mrb[0].mxu0
      %v541 = vadd.f32 %v349, %v540
      %v542 = vpop.f32.mrb[0].mxu0
      %543 = vmatprep.mubr.bf16.mxu0 0
      %544 = vmatmul.mubr.bf16.gmra.mrb[0].mxu0 %v326
      %v545 = vpop.f32.mrb[0].mxu0
      %v546 = vadd.f32 %v349, %v545
      %v547 = vpop.f32.mrb[0].mxu0
      %v548 = vpop.f32.mrb[0].mxu0
      %v549 = vadd.f32 %v349, %v548
      %v550 = vpop.f32.mrb[0].mxu0
      %551 = vmatprep.mubr.bf16.mxu0 0
      %552 = vmatmul.mubr.bf16.gmra.mrb[0].mxu0 %v327
      %v553 = vpop.f32.mrb[0].mxu0
      %v554 = vadd.f32 %v349, %v553
      %v555 = vpop.f32.mrb[0].mxu0
      %v556 = vpop.f32.mrb[0].mxu0
      %v557 = vadd.f32 %v349, %v556
      %v558 = vpop.f32.mrb[0].mxu0
      %559 = vdwg.mxu0
      %vm560 = vcmp.ge.f32.partialorder %v434, 0.0
      %vm561 = vcmp.ge.f32.partialorder %v437, 0.0
      %vm562 = vcmp.ge.f32.partialorder %v442, 0.0
      %vm563 = vcmp.ge.f32.partialorder %v445, 0.0
      %vm564 = vcmp.ge.f32.partialorder %v450, 0.0
      %vm565 = vcmp.ge.f32.partialorder %v453, 0.0
      %vm566 = vcmp.ge.f32.partialorder %v458, 0.0
      %vm567 = vcmp.ge.f32.partialorder %v461, 0.0
      %vm568 = vcmp.ge.f32.partialorder %v466, 0.0
      %vm569 = vcmp.ge.f32.partialorder %v469, 0.0
      %vm570 = vcmp.ge.f32.partialorder %v474, 0.0
      %vm571 = vcmp.ge.f32.partialorder %v477, 0.0
      %vm572 = vcmp.ge.f32.partialorder %v482, 0.0
      %vm573 = vcmp.ge.f32.partialorder %v485, 0.0
      %vm574 = vcmp.ge.f32.partialorder %v490, 0.0
      %vm575 = vcmp.ge.f32.partialorder %v493, 0.0
      %vm576 = vcmp.ge.f32.partialorder %v498, 0.0
      %vm577 = vcmp.ge.f32.partialorder %v501, 0.0
      %vm578 = vcmp.ge.f32.partialorder %v506, 0.0
      %vm579 = vcmp.ge.f32.partialorder %v509, 0.0
      %vm580 = vcmp.ge.f32.partialorder %v514, 0.0
      %vm581 = vcmp.ge.f32.partialorder %v517, 0.0
      %vm582 = vcmp.ge.f32.partialorder %v522, 0.0
      %vm583 = vcmp.ge.f32.partialorder %v525, 0.0
      %vm584 = vcmp.ge.f32.partialorder %v530, 0.0
      %vm585 = vcmp.ge.f32.partialorder %v533, 0.0
      %vm586 = vcmp.ge.f32.partialorder %v538, 0.0
      %vm587 = vcmp.ge.f32.partialorder %v541, 0.0
      %vm588 = vcmp.ge.f32.partialorder %v546, 0.0
      %vm589 = vcmp.ge.f32.partialorder %v549, 0.0
      %vm590 = vcmp.ge.f32.partialorder %v554, 0.0
      %vm591 = vcmp.ge.f32.partialorder %v557, 0.0
      %v592 = vmul.f32 %v434, 0.01
      %v593 = vmul.f32 %v437, 0.01
      %v594 = vmul.f32 %v442, 0.01
      %v595 = vmul.f32 %v445, 0.01
      %v596 = vmul.f32 %v450, 0.01
      %v597 = vmul.f32 %v453, 0.01
      %v598 = vmul.f32 %v458, 0.01
      %v599 = vmul.f32 %v461, 0.01
      %v600 = vmul.f32 %v466, 0.01
      %v601 = vmul.f32 %v469, 0.01
      %v602 = vmul.f32 %v474, 0.01
      %v603 = vmul.f32 %v477, 0.01
      %v604 = vmul.f32 %v482, 0.01
      %v605 = vmul.f32 %v485, 0.01
      %v606 = vmul.f32 %v490, 0.01
      %v607 = vmul.f32 %v493, 0.01
      %v608 = vmul.f32 %v498, 0.01
      %v609 = vmul.f32 %v501, 0.01
      %v610 = vmul.f32 %v506, 0.01
      %v611 = vmul.f32 %v509, 0.01
      %v612 = vmul.f32 %v514, 0.01
      %v613 = vmul.f32 %v517, 0.01
      %v614 = vmul.f32 %v522, 0.01
      %v615 = vmul.f32 %v525, 0.01
      %v616 = vmul.f32 %v530, 0.01
      %v617 = vmul.f32 %v533, 0.01
      %v618 = vmul.f32 %v538, 0.01
      %v619 = vmul.f32 %v541, 0.01
      %v620 = vmul.f32 %v546, 0.01
      %v621 = vmul.f32 %v549, 0.01
      %v622 = vmul.f32 %v554, 0.01
      %v623 = vmul.f32 %v557, 0.01
      %v624 = vsel %vm560, %v434, %v592
      %v625 = vsel %vm561, %v437, %v593
      %v626 = vsel %vm562, %v442, %v594
      %v627 = vsel %vm563, %v445, %v595
      %v628 = vsel %vm564, %v450, %v596
      %v629 = vsel %vm565, %v453, %v597
      %v630 = vsel %vm566, %v458, %v598
      %v631 = vsel %vm567, %v461, %v599
      %v632 = vsel %vm568, %v466, %v600
      %v633 = vsel %vm569, %v469, %v601
      %v634 = vsel %vm570, %v474, %v602
      %v635 = vsel %vm571, %v477, %v603
      %v636 = vsel %vm572, %v482, %v604
      %v637 = vsel %vm573, %v485, %v605
      %v638 = vsel %vm574, %v490, %v606
      %v639 = vsel %vm575, %v493, %v607
      %v640 = vsel %vm576, %v498, %v608
      %v641 = vsel %vm577, %v501, %v609
      %v642 = vsel %vm578, %v506, %v610
      %v643 = vsel %vm579, %v509, %v611
      %v644 = vsel %vm580, %v514, %v612
      %v645 = vsel %vm581, %v517, %v613
      %v646 = vsel %vm582, %v522, %v614
      %v647 = vsel %vm583, %v525, %v615
      %v648 = vsel %vm584, %v530, %v616
      %v649 = vsel %vm585, %v533, %v617
      %v650 = vsel %vm586, %v538, %v618
      %v651 = vsel %vm587, %v541, %v619
      %v652 = vsel %vm588, %v546, %v620
      %v653 = vsel %vm589, %v549, %v621
      %v654 = vsel %vm590, %v554, %v622
      %v655 = vsel %vm591, %v557, %v623
      %656 = vst [vmem:[#allocation2] sm:$0xf] 0
      %657 = vst [vmem:[#allocation2 + $0x4] sm:$0xf] 0
      %658 = vst [vmem:[#allocation2 + $0x8] sm:$0x1] 0
      %659 = vst [vmem:[#allocation2 + $0xc] sm:$0xf] 0
      %660 = vst [vmem:[#allocation2 + $0x10] sm:$0xf] 0
      %661 = vst [vmem:[#allocation2 + $0x14] sm:$0x1] 0
      %662 = vst [vmem:[#allocation2 + $0x18] sm:$0xf] 0
      %663 = vst [vmem:[#allocation2 + $0x1c] sm:$0xf] 0
      %664 = vst [vmem:[#allocation2 + $0x20] sm:$0x1] 0
      %665 = vst [vmem:[#allocation2 + $0x24] sm:$0xf] 0
      %666 = vst [vmem:[#allocation2 + $0x28] sm:$0xf] 0
      %667 = vst [vmem:[#allocation2 + $0x2c] sm:$0x1] 0
      %668 = vst [vmem:[#allocation2 + $0x30] sm:$0xf] 0
      %669 = vst [vmem:[#allocation2 + $0x34] sm:$0xf] 0
      %670 = vst [vmem:[#allocation2 + $0x38] sm:$0x1] 0
      %671 = vst [vmem:[#allocation2 + $0x3c] sm:$0xf] 0
      %672 = vst [vmem:[#allocation2 + $0x40] sm:$0xf] 0
      %673 = vst [vmem:[#allocation2 + $0x44] sm:$0x1] 0
      %674 = vst [vmem:[#allocation2 + $0x48] sm:$0xf] 0
      %675 = vst [vmem:[#allocation2 + $0x4c] sm:$0xf] 0
      %676 = vst [vmem:[#allocation2 + $0x50] sm:$0x1] 0
      %677 = vst [vmem:[#allocation2 + $0x54] sm:$0xf] 0
      %678 = vst [vmem:[#allocation2 + $0x58] sm:$0xf] 0
      %679 = vst [vmem:[#allocation2 + $0x5c] sm:$0x1] 0
      %680 = vst [vmem:[#allocation2 + $0x60] sm:$0xf] 0
      %681 = vst [vmem:[#allocation2 + $0x64] sm:$0xf] 0
      %682 = vst [vmem:[#allocation2 + $0x68] sm:$0x1] 0
      %683 = vst [vmem:[#allocation2 + $0x6c] sm:$0xf] 0
      %684 = vst [vmem:[#allocation2 + $0x70] sm:$0xf] 0
      %685 = vst [vmem:[#allocation2 + $0x74] sm:$0x1] 0
      %686 = vst [vmem:[#allocation2 + $0x78] sm:$0xf] 0
      %687 = vst [vmem:[#allocation2 + $0x7c] sm:$0xf] 0
      %688 = vst [vmem:[#allocation2 + $0x80] sm:$0x1] 0
      %689 = vst [vmem:[#allocation2 + $0x84] sm:$0xf] 0
      %690 = vst [vmem:[#allocation2 + $0x88] sm:$0xf] 0
      %691 = vst [vmem:[#allocation2 + $0x8c] sm:$0x1] 0
      %692 = vst [vmem:[#allocation2 + $0x90] sm:$0xf] 0
      %693 = vst [vmem:[#allocation2 + $0x94] sm:$0xf] 0
      %694 = vst [vmem:[#allocation2 + $0x98] sm:$0x1] 0
      %695 = vst [vmem:[#allocation2 + $0x9c] sm:$0xf] 0
      %696 = vst [vmem:[#allocation2 + $0xa0] sm:$0xf] 0
      %697 = vst [vmem:[#allocation2 + $0xa4] sm:$0x1] 0
      %698 = vst [vmem:[#allocation2 + $0xa8] sm:$0xf] 0
      %699 = vst [vmem:[#allocation2 + $0xac] sm:$0xf] 0
      %700 = vst [vmem:[#allocation2 + $0xb0] sm:$0x1] 0
      %701 = vst [vmem:[#allocation2 + $0xb4] sm:$0xf] 0
      %702 = vst [vmem:[#allocation2 + $0xb8] sm:$0xf] 0
      %703 = vst [vmem:[#allocation2 + $0xbc] sm:$0x1] 0
      %704 = vst [vmem:[#allocation2 + $0xc0] sm:$0xf] 0
      %705 = vst [vmem:[#allocation2 + $0xc4] sm:$0xf] 0
      %706 = vst [vmem:[#allocation2 + $0xc8] sm:$0x1] 0
      %707 = vst [vmem:[#allocation2 + $0xcc] sm:$0xf] 0
      %708 = vst [vmem:[#allocation2 + $0xd0] sm:$0xf] 0
      %709 = vst [vmem:[#allocation2 + $0xd4] sm:$0x1] 0
      %v710 = vpack.c.bf16 %v625, %v624
      %v711 = vpack.c.bf16 %v627, %v626
      %v712 = vpack.c.bf16 %v629, %v628
      %v713 = vpack.c.bf16 %v631, %v630
      %v714 = vpack.c.bf16 %v633, %v632
      %v715 = vpack.c.bf16 %v635, %v634
      %v716 = vpack.c.bf16 %v637, %v636
      %v717 = vpack.c.bf16 %v639, %v638
      %v718 = vpack.c.bf16 %v641, %v640
      %v719 = vpack.c.bf16 %v643, %v642
      %v720 = vpack.c.bf16 %v645, %v644
      %v721 = vpack.c.bf16 %v647, %v646
      %v722 = vpack.c.bf16 %v649, %v648
      %v723 = vpack.c.bf16 %v651, %v650
      %v724 = vpack.c.bf16 %v653, %v652
      %v725 = vpack.c.bf16 %v655, %v654
      %v742 = vunpack.c.l.b16 %v710
      %v743 = vunpack.c.h.b16 %v710
      %v744 = vunpack.c.l.b16 %v711
      %v745 = vunpack.c.h.b16 %v711
      %v746 = vunpack.c.l.b16 %v712
      %v747 = vunpack.c.h.b16 %v712
      %v748 = vunpack.c.l.b16 %v713
      %v749 = vunpack.c.h.b16 %v713
      %v750 = vunpack.c.l.b16 %v714
      %v751 = vunpack.c.h.b16 %v714
      %v752 = vunpack.c.l.b16 %v715
      %v753 = vunpack.c.h.b16 %v715
      %v754 = vunpack.c.l.b16 %v716
      %v755 = vunpack.c.h.b16 %v716
      %v756 = vunpack.c.l.b16 %v717
      %v757 = vunpack.c.h.b16 %v717
      %v758 = vunpack.c.l.b16 %v718
      %v759 = vunpack.c.h.b16 %v718
      %v760 = vunpack.c.l.b16 %v719
      %v761 = vunpack.c.h.b16 %v719
      %v762 = vunpack.c.l.b16 %v720
      %v763 = vunpack.c.h.b16 %v720
      %v764 = vunpack.c.l.b16 %v721
      %v765 = vunpack.c.h.b16 %v721
      %v766 = vunpack.c.l.b16 %v722
      %v767 = vunpack.c.h.b16 %v722
      %v768 = vunpack.c.l.b16 %v723
      %v769 = vunpack.c.h.b16 %v723
      %v770 = vunpack.c.l.b16 %v724
      %v771 = vunpack.c.h.b16 %v724
      %v772 = vunpack.c.l.b16 %v725
      %v773 = vunpack.c.h.b16 %v725
      %v774 = vpack.c.b16 %v742, %v742
      %v775 = vpack.c.b16 %v743, %v743
      %v776 = vpack.c.b16 %v744, %v744
      %v777 = vpack.c.b16 %v745, %v745
      %v778 = vpack.c.b16 %v746, %v746
      %v779 = vpack.c.b16 %v747, %v747
      %v780 = vpack.c.b16 %v748, %v748
      %v781 = vpack.c.b16 %v749, %v749
      %v782 = vpack.c.b16 %v750, %v750
      %v783 = vpack.c.b16 %v751, %v751
      %v784 = vpack.c.b16 %v752, %v752
      %v785 = vpack.c.b16 %v753, %v753
      %v786 = vpack.c.b16 %v754, %v754
      %v787 = vpack.c.b16 %v755, %v755
      %v788 = vpack.c.b16 %v756, %v756
      %v789 = vpack.c.b16 %v757, %v757
      %v790 = vpack.c.b16 %v758, %v758
      %v791 = vpack.c.b16 %v759, %v759
      %v792 = vpack.c.b16 %v760, %v760
      %v793 = vpack.c.b16 %v761, %v761
      %v794 = vpack.c.b16 %v762, %v762
      %v795 = vpack.c.b16 %v763, %v763
      %v796 = vpack.c.b16 %v764, %v764
      %v797 = vpack.c.b16 %v765, %v765
      %v798 = vpack.c.b16 %v766, %v766
      %v799 = vpack.c.b16 %v767, %v767
      %v800 = vpack.c.b16 %v768, %v768
      %v801 = vpack.c.b16 %v769, %v769
      %v802 = vpack.c.b16 %v770, %v770
      %v803 = vpack.c.b16 %v771, %v771
      %v804 = vpack.c.b16 %v772, %v772
      %v805 = vpack.c.b16 %v773, %v773
      %vm806 = vsmask.f32 256
      %vm807 = vsmask.f32 4368
      %vm808 = vmor %vm806, %vm807
      %v810 = vshrl.u32 %v774, 16
      %v812 = vrot.slane %v810, 7
      %v813 = vshll.u32 %v774, 16
      %v815 = vor.u32 %v812, %v813
      %v816 = vrot.slane %v812, 4
      %v818 = vshrl.u32 %v775, 16
      %v820 = vrot.slane %v818, 7
      %v821 = vshll.u32 %v775, 16
      %v823 = vor.u32 %v820, %v821
      %v824 = vsel %vm808, %v816, %v823
      %v825 = vrot.slane %v820, 4
      %v827 = vshrl.u32 %v776, 16
      %v829 = vrot.slane %v827, 7
      %v830 = vshll.u32 %v776, 16
      %v832 = vor.u32 %v829, %v830
      %v833 = vrot.slane %v829, 4
      %v835 = vshrl.u32 %v777, 16
      %v837 = vrot.slane %v835, 7
      %v838 = vshll.u32 %v777, 16
      %v840 = vor.u32 %v837, %v838
      %v841 = vsel %vm808, %v833, %v840
      %v842 = vrot.slane %v837, 4
      %v844 = vshrl.u32 %v778, 16
      %v846 = vrot.slane %v844, 7
      %v847 = vshll.u32 %v778, 16
      %v849 = vor.u32 %v846, %v847
      %v850 = vrot.slane %v846, 4
      %v852 = vshrl.u32 %v779, 16
      %v854 = vrot.slane %v852, 7
      %v855 = vshll.u32 %v779, 16
      %v857 = vor.u32 %v854, %v855
      %v858 = vsel %vm808, %v850, %v857
      %v859 = vrot.slane %v854, 4
      %v861 = vshrl.u32 %v780, 16
      %v863 = vrot.slane %v861, 7
      %v864 = vshll.u32 %v780, 16
      %v866 = vor.u32 %v863, %v864
      %v867 = vrot.slane %v863, 4
      %v869 = vshrl.u32 %v781, 16
      %v871 = vrot.slane %v869, 7
      %v872 = vshll.u32 %v781, 16
      %v874 = vor.u32 %v871, %v872
      %v875 = vsel %vm808, %v867, %v874
      %v876 = vrot.slane %v871, 4
      %v878 = vshrl.u32 %v782, 16
      %v880 = vrot.slane %v878, 7
      %v881 = vshll.u32 %v782, 16
      %v883 = vor.u32 %v880, %v881
      %v884 = vrot.slane %v880, 4
      %v886 = vshrl.u32 %v783, 16
      %v888 = vrot.slane %v886, 7
      %v889 = vshll.u32 %v783, 16
      %v891 = vor.u32 %v888, %v889
      %v892 = vsel %vm808, %v884, %v891
      %v893 = vrot.slane %v888, 4
      %v895 = vshrl.u32 %v784, 16
      %v897 = vrot.slane %v895, 7
      %v898 = vshll.u32 %v784, 16
      %v900 = vor.u32 %v897, %v898
      %v901 = vrot.slane %v897, 4
      %v903 = vshrl.u32 %v785, 16
      %v905 = vrot.slane %v903, 7
      %v906 = vshll.u32 %v785, 16
      %v908 = vor.u32 %v905, %v906
      %v909 = vsel %vm808, %v901, %v908
      %v910 = vrot.slane %v905, 4
      %v912 = vshrl.u32 %v786, 16
      %v914 = vrot.slane %v912, 7
      %v915 = vshll.u32 %v786, 16
      %v917 = vor.u32 %v914, %v915
      %v918 = vrot.slane %v914, 4
      %v920 = vshrl.u32 %v787, 16
      %v922 = vrot.slane %v920, 7
      %v923 = vshll.u32 %v787, 16
      %v925 = vor.u32 %v922, %v923
      %v926 = vsel %vm808, %v918, %v925
      %v927 = vrot.slane %v922, 4
      %v929 = vshrl.u32 %v788, 16
      %v931 = vrot.slane %v929, 7
      %v932 = vshll.u32 %v788, 16
      %v934 = vor.u32 %v931, %v932
      %v935 = vrot.slane %v931, 4
      %v937 = vshrl.u32 %v789, 16
      %v939 = vrot.slane %v937, 7
      %v940 = vshll.u32 %v789, 16
      %v942 = vor.u32 %v939, %v940
      %v943 = vsel %vm808, %v935, %v942
      %v944 = vrot.slane %v939, 4
      %v946 = vshrl.u32 %v790, 16
      %v948 = vrot.slane %v946, 7
      %v949 = vshll.u32 %v790, 16
      %v951 = vor.u32 %v948, %v949
      %v952 = vrot.slane %v948, 4
      %v954 = vshrl.u32 %v791, 16
      %v956 = vrot.slane %v954, 7
      %v957 = vshll.u32 %v791, 16
      %v959 = vor.u32 %v956, %v957
      %v960 = vsel %vm808, %v952, %v959
      %v961 = vrot.slane %v956, 4
      %v963 = vshrl.u32 %v792, 16
      %v965 = vrot.slane %v963, 7
      %v966 = vshll.u32 %v792, 16
      %v968 = vor.u32 %v965, %v966
      %v969 = vrot.slane %v965, 4
      %v971 = vshrl.u32 %v793, 16
      %v973 = vrot.slane %v971, 7
      %v974 = vshll.u32 %v793, 16
      %v976 = vor.u32 %v973, %v974
      %v977 = vsel %vm808, %v969, %v976
      %v978 = vrot.slane %v973, 4
      %v980 = vshrl.u32 %v794, 16
      %v982 = vrot.slane %v980, 7
      %v983 = vshll.u32 %v794, 16
      %v985 = vor.u32 %v982, %v983
      %v986 = vrot.slane %v982, 4
      %v988 = vshrl.u32 %v795, 16
      %v990 = vrot.slane %v988, 7
      %v991 = vshll.u32 %v795, 16
      %v993 = vor.u32 %v990, %v991
      %v994 = vsel %vm808, %v986, %v993
      %v995 = vrot.slane %v990, 4
      %v997 = vshrl.u32 %v796, 16
      %v999 = vrot.slane %v997, 7
      %v1000 = vshll.u32 %v796, 16
      %v1002 = vor.u32 %v999, %v1000
      %v1003 = vrot.slane %v999, 4
      %v1005 = vshrl.u32 %v797, 16
      %v1007 = vrot.slane %v1005, 7
      %v1008 = vshll.u32 %v797, 16
      %v1010 = vor.u32 %v1007, %v1008
      %v1011 = vsel %vm808, %v1003, %v1010
      %v1012 = vrot.slane %v1007, 4
      %v1014 = vshrl.u32 %v798, 16
      %v1016 = vrot.slane %v1014, 7
      %v1017 = vshll.u32 %v798, 16
      %v1019 = vor.u32 %v1016, %v1017
      %v1020 = vrot.slane %v1016, 4
      %v1022 = vshrl.u32 %v799, 16
      %v1024 = vrot.slane %v1022, 7
      %v1025 = vshll.u32 %v799, 16
      %v1027 = vor.u32 %v1024, %v1025
      %v1028 = vsel %vm808, %v1020, %v1027
      %v1029 = vrot.slane %v1024, 4
      %v1031 = vshrl.u32 %v800, 16
      %v1033 = vrot.slane %v1031, 7
      %v1034 = vshll.u32 %v800, 16
      %v1036 = vor.u32 %v1033, %v1034
      %v1037 = vrot.slane %v1033, 4
      %v1039 = vshrl.u32 %v801, 16
      %v1041 = vrot.slane %v1039, 7
      %v1042 = vshll.u32 %v801, 16
      %v1044 = vor.u32 %v1041, %v1042
      %v1045 = vsel %vm808, %v1037, %v1044
      %v1046 = vrot.slane %v1041, 4
      %v1048 = vshrl.u32 %v802, 16
      %v1050 = vrot.slane %v1048, 7
      %v1051 = vshll.u32 %v802, 16
      %v1053 = vor.u32 %v1050, %v1051
      %v1054 = vrot.slane %v1050, 4
      %v1056 = vshrl.u32 %v803, 16
      %v1058 = vrot.slane %v1056, 7
      %v1059 = vshll.u32 %v803, 16
      %v1061 = vor.u32 %v1058, %v1059
      %v1062 = vsel %vm808, %v1054, %v1061
      %v1063 = vrot.slane %v1058, 4
      %v1065 = vshrl.u32 %v804, 16
      %v1067 = vrot.slane %v1065, 7
      %v1068 = vshll.u32 %v804, 16
      %v1070 = vor.u32 %v1067, %v1068
      %v1071 = vrot.slane %v1067, 4
      %v1073 = vshrl.u32 %v805, 16
      %v1075 = vrot.slane %v1073, 7
      %v1076 = vshll.u32 %v805, 16
      %v1078 = vor.u32 %v1075, %v1076
      %v1079 = vsel %vm808, %v1071, %v1078
      %v1080 = vrot.slane %v1075, 4
      %s1129 = scalar_lea.vmem [#allocation2], 12
      %vm1130 = vcmask 1043456
      %vm1131 = vsmask.f32 7938
      %vm1132 = vmand %vm1130, %vm1131
      %v1133 = vld [vmem:[%s1129] sm:$0xf]
      %v1134 = vsel %vm1132, %v815, %v1133
      %1135 = vst [vmem:[%s1129] sm:$0xf] %v1134
      %1136 = vst [vmem:[%s1129 + $0x4] sm:$0xf] %v824
      %vm1137 = vcmask 1040384
      %vm1138 = vmand %vm1137, %vm806
      %v1139 = vld [vmem:[%s1129 + $0x8] sm:$0x1]
      %v1140 = vsel %vm1138, %v825, %v1139
      %1141 = vst [vmem:[%s1129 + $0x8] sm:$0x1] %v1140
      %v1142 = vld [vmem:[%s1129 + $0xc] sm:$0xf]
      %v1143 = vsel %vm1132, %v832, %v1142
      %1144 = vst [vmem:[%s1129 + $0xc] sm:$0xf] %v1143
      %1145 = vst [vmem:[%s1129 + $0x10] sm:$0xf] %v841
      %v1146 = vld [vmem:[%s1129 + $0x14] sm:$0x1]
      %v1147 = vsel %vm1138, %v842, %v1146
      %1148 = vst [vmem:[%s1129 + $0x14] sm:$0x1] %v1147
      %v1149 = vld [vmem:[%s1129 + $0x18] sm:$0xf]
      %v1150 = vsel %vm1132, %v849, %v1149
      %1151 = vst [vmem:[%s1129 + $0x18] sm:$0xf] %v1150
      %1152 = vst [vmem:[%s1129 + $0x1c] sm:$0xf] %v858
      %v1153 = vld [vmem:[%s1129 + $0x20] sm:$0x1]
      %v1154 = vsel %vm1138, %v859, %v1153
      %1155 = vst [vmem:[%s1129 + $0x20] sm:$0x1] %v1154
      %v1156 = vld [vmem:[%s1129 + $0x24] sm:$0xf]
      %v1157 = vsel %vm1132, %v866, %v1156
      %1158 = vst [vmem:[%s1129 + $0x24] sm:$0xf] %v1157
      %1159 = vst [vmem:[%s1129 + $0x28] sm:$0xf] %v875
      %v1160 = vld [vmem:[%s1129 + $0x2c] sm:$0x1]
      %v1161 = vsel %vm1138, %v876, %v1160
      %1162 = vst [vmem:[%s1129 + $0x2c] sm:$0x1] %v1161
      %v1163 = vld [vmem:[%s1129 + $0x30] sm:$0xf]
      %v1164 = vsel %vm1132, %v883, %v1163
      %1165 = vst [vmem:[%s1129 + $0x30] sm:$0xf] %v1164
      %1166 = vst [vmem:[%s1129 + $0x34] sm:$0xf] %v892
      %v1167 = vld [vmem:[%s1129 + $0x38] sm:$0x1]
      %v1168 = vsel %vm1138, %v893, %v1167
      %1169 = vst [vmem:[%s1129 + $0x38] sm:$0x1] %v1168
      %v1170 = vld [vmem:[%s1129 + $0x3c] sm:$0xf]
      %v1171 = vsel %vm1132, %v900, %v1170
      %1172 = vst [vmem:[%s1129 + $0x3c] sm:$0xf] %v1171
      %1173 = vst [vmem:[%s1129 + $0x40] sm:$0xf] %v909
      %v1174 = vld [vmem:[%s1129 + $0x44] sm:$0x1]
      %v1175 = vsel %vm1138, %v910, %v1174
      %1176 = vst [vmem:[%s1129 + $0x44] sm:$0x1] %v1175
      %v1177 = vld [vmem:[%s1129 + $0x48] sm:$0xf]
      %v1178 = vsel %vm1132, %v917, %v1177
      %1179 = vst [vmem:[%s1129 + $0x48] sm:$0xf] %v1178
      %1180 = vst [vmem:[%s1129 + $0x4c] sm:$0xf] %v926
      %v1181 = vld [vmem:[%s1129 + $0x50] sm:$0x1]
      %v1182 = vsel %vm1138, %v927, %v1181
      %1183 = vst [vmem:[%s1129 + $0x50] sm:$0x1] %v1182
      %v1184 = vld [vmem:[%s1129 + $0x54] sm:$0xf]
      %v1185 = vsel %vm1132, %v934, %v1184
      %1186 = vst [vmem:[%s1129 + $0x54] sm:$0xf] %v1185
      %1187 = vst [vmem:[%s1129 + $0x58] sm:$0xf] %v943
      %v1188 = vld [vmem:[%s1129 + $0x5c] sm:$0x1]
      %v1189 = vsel %vm1138, %v944, %v1188
      %1190 = vst [vmem:[%s1129 + $0x5c] sm:$0x1] %v1189
      %v1191 = vld [vmem:[%s1129 + $0x60] sm:$0xf]
      %v1192 = vsel %vm1132, %v951, %v1191
      %1193 = vst [vmem:[%s1129 + $0x60] sm:$0xf] %v1192
      %1194 = vst [vmem:[%s1129 + $0x64] sm:$0xf] %v960
      %v1195 = vld [vmem:[%s1129 + $0x68] sm:$0x1]
      %v1196 = vsel %vm1138, %v961, %v1195
      %1197 = vst [vmem:[%s1129 + $0x68] sm:$0x1] %v1196
      %v1198 = vld [vmem:[%s1129 + $0x6c] sm:$0xf]
      %v1199 = vsel %vm1132, %v968, %v1198
      %1200 = vst [vmem:[%s1129 + $0x6c] sm:$0xf] %v1199
      %1201 = vst [vmem:[%s1129 + $0x70] sm:$0xf] %v977
      %v1202 = vld [vmem:[%s1129 + $0x74] sm:$0x1]
      %v1203 = vsel %vm1138, %v978, %v1202
      %1204 = vst [vmem:[%s1129 + $0x74] sm:$0x1] %v1203
      %v1205 = vld [vmem:[%s1129 + $0x78] sm:$0xf]
      %v1206 = vsel %vm1132, %v985, %v1205
      %1207 = vst [vmem:[%s1129 + $0x78] sm:$0xf] %v1206
      %1208 = vst [vmem:[%s1129 + $0x7c] sm:$0xf] %v994
      %v1209 = vld [vmem:[%s1129 + $0x80] sm:$0x1]
      %v1210 = vsel %vm1138, %v995, %v1209
      %1211 = vst [vmem:[%s1129 + $0x80] sm:$0x1] %v1210
      %v1212 = vld [vmem:[%s1129 + $0x84] sm:$0xf]
      %v1213 = vsel %vm1132, %v1002, %v1212
      %1214 = vst [vmem:[%s1129 + $0x84] sm:$0xf] %v1213
      %1215 = vst [vmem:[%s1129 + $0x88] sm:$0xf] %v1011
      %v1216 = vld [vmem:[%s1129 + $0x8c] sm:$0x1]
      %v1217 = vsel %vm1138, %v1012, %v1216
      %1218 = vst [vmem:[%s1129 + $0x8c] sm:$0x1] %v1217
      %v1219 = vld [vmem:[%s1129 + $0x90] sm:$0xf]
      %v1220 = vsel %vm1132, %v1019, %v1219
      %1221 = vst [vmem:[%s1129 + $0x90] sm:$0xf] %v1220
      %1222 = vst [vmem:[%s1129 + $0x94] sm:$0xf] %v1028
      %v1223 = vld [vmem:[%s1129 + $0x98] sm:$0x1]
      %v1224 = vsel %vm1138, %v1029, %v1223
      %1225 = vst [vmem:[%s1129 + $0x98] sm:$0x1] %v1224
      %v1226 = vld [vmem:[%s1129 + $0x9c] sm:$0xf]
      %v1227 = vsel %vm1132, %v1036, %v1226
      %1228 = vst [vmem:[%s1129 + $0x9c] sm:$0xf] %v1227
      %1229 = vst [vmem:[%s1129 + $0xa0] sm:$0xf] %v1045
      %v1230 = vld [vmem:[%s1129 + $0xa4] sm:$0x1]
      %v1231 = vsel %vm1138, %v1046, %v1230
      %1232 = vst [vmem:[%s1129 + $0xa4] sm:$0x1] %v1231
      %v1233 = vld [vmem:[%s1129 + $0xa8] sm:$0xf]
      %v1234 = vsel %vm1132, %v1053, %v1233
      %1235 = vst [vmem:[%s1129 + $0xa8] sm:$0xf] %v1234
      %1236 = vst [vmem:[%s1129 + $0xac] sm:$0xf] %v1062
      %v1237 = vld [vmem:[%s1129 + $0xb0] sm:$0x1]
      %v1238 = vsel %vm1138, %v1063, %v1237
      %1239 = vst [vmem:[%s1129 + $0xb0] sm:$0x1] %v1238
      %v1240 = vld [vmem:[%s1129 + $0xb4] sm:$0xf]
      %v1241 = vsel %vm1132, %v1070, %v1240
      %1242 = vst [vmem:[%s1129 + $0xb4] sm:$0xf] %v1241
      %1243 = vst [vmem:[%s1129 + $0xb8] sm:$0xf] %v1079
      %v1244 = vld [vmem:[%s1129 + $0xbc] sm:$0x1]
      %v1245 = vsel %vm1138, %v1080, %v1244
      %1246 = vst [vmem:[%s1129 + $0xbc] sm:$0x1] %v1245
      %v1247 = vld [vmem:[#allocation2] sm:$0xf]
      %v1248 = vld [vmem:[#allocation2 + $0x4] sm:$0xf]
      %v1249 = vld [vmem:[#allocation2 + $0xc] sm:$0xf]
      %v1250 = vld [vmem:[#allocation2 + $0x10] sm:$0xf]
      %v1251 = vld [vmem:[#allocation2 + $0x18] sm:$0xf]
      %v1252 = vld [vmem:[#allocation2 + $0x1c] sm:$0xf]
      %v1253 = vld [vmem:[#allocation2 + $0x24] sm:$0xf]
      %v1254 = vld [vmem:[#allocation2 + $0x28] sm:$0xf]
      %v1255 = vld [vmem:[#allocation2 + $0x30] sm:$0xf]
      %v1256 = vld [vmem:[#allocation2 + $0x34] sm:$0xf]
      %v1257 = vld [vmem:[#allocation2 + $0x3c] sm:$0xf]
      %v1258 = vld [vmem:[#allocation2 + $0x40] sm:$0xf]
      %v1259 = vld [vmem:[#allocation2 + $0x48] sm:$0xf]
      %v1260 = vld [vmem:[#allocation2 + $0x4c] sm:$0xf]
      %v1261 = vld [vmem:[#allocation2 + $0x54] sm:$0xf]
      %v1262 = vld [vmem:[#allocation2 + $0x58] sm:$0xf]
      %v1263 = vld [vmem:[#allocation2 + $0x60] sm:$0xf]
      %v1264 = vld [vmem:[#allocation2 + $0x64] sm:$0xf]
      %v1265 = vld [vmem:[#allocation2 + $0x6c] sm:$0xf]
      %v1266 = vld [vmem:[#allocation2 + $0x70] sm:$0xf]
      %v1267 = vld [vmem:[#allocation2 + $0x78] sm:$0xf]
      %v1268 = vld [vmem:[#allocation2 + $0x7c] sm:$0xf]
      %v1269 = vld [vmem:[#allocation2 + $0x84] sm:$0xf]
      %v1270 = vld [vmem:[#allocation2 + $0x88] sm:$0xf]
      %v1271 = vld [vmem:[#allocation2 + $0x90] sm:$0xf]
      %v1272 = vld [vmem:[#allocation2 + $0x94] sm:$0xf]
      %v1273 = vld [vmem:[#allocation2 + $0x9c] sm:$0xf]
      %v1274 = vld [vmem:[#allocation2 + $0xa0] sm:$0xf]
      %v1275 = vld [vmem:[#allocation2 + $0xa8] sm:$0xf]
      %v1276 = vld [vmem:[#allocation2 + $0xac] sm:$0xf]
      %v1277 = vld [vmem:[#allocation2 + $0xb4] sm:$0xf]
      %v1278 = vld [vmem:[#allocation2 + $0xb8] sm:$0xf]
      %v1279 = vld [vmem:[%s3] sm:$0xf]
      %v1280 = vld [vmem:[%s3 + $0x4] sm:$0xf]
      %v1281 = vld [vmem:[%s3 + $0x8] sm:$0xf]
      %v1282 = vld [vmem:[%s3 + $0xc] sm:$0xf]
      %v1283 = vld [vmem:[%s3 + $0x10] sm:$0xf]
      %v1284 = vld [vmem:[%s3 + $0x14] sm:$0xf]
      %v1285 = vld [vmem:[%s3 + $0x18] sm:$0xf]
      %v1286 = vld [vmem:[%s3 + $0x1c] sm:$0xf]
      %v1287 = vld [vmem:[%s3 + $0x20] sm:$0xf]
      %v1288 = vld [vmem:[%s3 + $0x24] sm:$0xf]
      %v1289 = vld [vmem:[%s3 + $0x28] sm:$0xf]
      %v1290 = vld [vmem:[%s3 + $0x2c] sm:$0xf]
      %v1291 = vld [vmem:[%s3 + $0x30] sm:$0xf]
      %v1292 = vld [vmem:[%s3 + $0x34] sm:$0xf]
      %v1293 = vld [vmem:[%s3 + $0x38] sm:$0xf]
      %v1294 = vld [vmem:[%s3 + $0x3c] sm:$0xf]
      %v1295 = vld [vmem:[#allocation2 + $0x8] sm:$0x1]
      %v1296 = vld [vmem:[#allocation2 + $0x14] sm:$0x1]
      %v1297 = vld [vmem:[#allocation2 + $0x20] sm:$0x1]
      %v1298 = vld [vmem:[#allocation2 + $0x2c] sm:$0x1]
      %v1299 = vld [vmem:[#allocation2 + $0x38] sm:$0x1]
      %v1300 = vld [vmem:[#allocation2 + $0x44] sm:$0x1]
      %v1301 = vld [vmem:[#allocation2 + $0x50] sm:$0x1]
      %v1302 = vld [vmem:[#allocation2 + $0x5c] sm:$0x1]
      %v1303 = vld [vmem:[#allocation2 + $0x68] sm:$0x1]
      %v1304 = vld [vmem:[#allocation2 + $0x74] sm:$0x1]
      %v1305 = vld [vmem:[#allocation2 + $0x80] sm:$0x1]
      %v1306 = vld [vmem:[#allocation2 + $0x8c] sm:$0x1]
      %v1307 = vld [vmem:[#allocation2 + $0x98] sm:$0x1]
      %v1308 = vld [vmem:[#allocation2 + $0xa4] sm:$0x1]
      %v1309 = vld [vmem:[#allocation2 + $0xb0] sm:$0x1]
      %v1310 = vld [vmem:[#allocation2 + $0xbc] sm:$0x1]
      %vm1311 = vsmask.f32 3328
      %vm1312 = vsmask.f32 7440
      %vm1313 = vmor %vm1311, %vm1312
      %v1315 = vshrl.u32 %v1247, 16
      %v1317 = vrot.slane %v1315, 4
      %v1318 = vshll.u32 %v1247, 16
      %v1320 = vrot.slane %v1318, 5
      %v1321 = vor.u32 %v1317, %v1320
      %v1322 = vrot.slane %v1321, 4
      %v1324 = vshll.u32 %v1248, 16
      %v1326 = vrot.slane %v1324, 5
      %v1327 = vsel %vm1313, %v1322, %v1326
      %v1328 = vshrl.u32 %v1248, 16
      %v1330 = vrot.slane %v1328, 4
      %v1331 = vor.u32 %v1330, %v1326
      %v1332 = vrot.slane %v1331, 4
      %v1334 = vshll.u32 %v1295, 16
      %v1336 = vrot.slane %v1334, 5
      %v1337 = vsel %vm1313, %v1332, %v1336
      %v1339 = vshrl.u32 %v1249, 16
      %v1341 = vrot.slane %v1339, 4
      %v1342 = vshll.u32 %v1249, 16
      %v1344 = vrot.slane %v1342, 5
      %v1345 = vor.u32 %v1341, %v1344
      %v1346 = vrot.slane %v1345, 4
      %v1348 = vshll.u32 %v1250, 16
      %v1350 = vrot.slane %v1348, 5
      %v1351 = vsel %vm1313, %v1346, %v1350
      %v1352 = vshrl.u32 %v1250, 16
      %v1354 = vrot.slane %v1352, 4
      %v1355 = vor.u32 %v1354, %v1350
      %v1356 = vrot.slane %v1355, 4
      %v1358 = vshll.u32 %v1296, 16
      %v1360 = vrot.slane %v1358, 5
      %v1361 = vsel %vm1313, %v1356, %v1360
      %v1363 = vshrl.u32 %v1251, 16
      %v1365 = vrot.slane %v1363, 4
      %v1366 = vshll.u32 %v1251, 16
      %v1368 = vrot.slane %v1366, 5
      %v1369 = vor.u32 %v1365, %v1368
      %v1370 = vrot.slane %v1369, 4
      %v1372 = vshll.u32 %v1252, 16
      %v1374 = vrot.slane %v1372, 5
      %v1375 = vsel %vm1313, %v1370, %v1374
      %v1376 = vshrl.u32 %v1252, 16
      %v1378 = vrot.slane %v1376, 4
      %v1379 = vor.u32 %v1378, %v1374
      %v1380 = vrot.slane %v1379, 4
      %v1382 = vshll.u32 %v1297, 16
      %v1384 = vrot.slane %v1382, 5
      %v1385 = vsel %vm1313, %v1380, %v1384
      %v1387 = vshrl.u32 %v1253, 16
      %v1389 = vrot.slane %v1387, 4
      %v1390 = vshll.u32 %v1253, 16
      %v1392 = vrot.slane %v1390, 5
      %v1393 = vor.u32 %v1389, %v1392
      %v1394 = vrot.slane %v1393, 4
      %v1396 = vshll.u32 %v1254, 16
      %v1398 = vrot.slane %v1396, 5
      %v1399 = vsel %vm1313, %v1394, %v1398
      %v1400 = vshrl.u32 %v1254, 16
      %v1402 = vrot.slane %v1400, 4
      %v1403 = vor.u32 %v1402, %v1398
      %v1404 = vrot.slane %v1403, 4
      %v1406 = vshll.u32 %v1298, 16
      %v1408 = vrot.slane %v1406, 5
      %v1409 = vsel %vm1313, %v1404, %v1408
      %v1411 = vshrl.u32 %v1255, 16
      %v1413 = vrot.slane %v1411, 4
      %v1414 = vshll.u32 %v1255, 16
      %v1416 = vrot.slane %v1414, 5
      %v1417 = vor.u32 %v1413, %v1416
      %v1418 = vrot.slane %v1417, 4
      %v1420 = vshll.u32 %v1256, 16
      %v1422 = vrot.slane %v1420, 5
      %v1423 = vsel %vm1313, %v1418, %v1422
      %v1424 = vshrl.u32 %v1256, 16
      %v1426 = vrot.slane %v1424, 4
      %v1427 = vor.u32 %v1426, %v1422
      %v1428 = vrot.slane %v1427, 4
      %v1430 = vshll.u32 %v1299, 16
      %v1432 = vrot.slane %v1430, 5
      %v1433 = vsel %vm1313, %v1428, %v1432
      %v1435 = vshrl.u32 %v1257, 16
      %v1437 = vrot.slane %v1435, 4
      %v1438 = vshll.u32 %v1257, 16
      %v1440 = vrot.slane %v1438, 5
      %v1441 = vor.u32 %v1437, %v1440
      %v1442 = vrot.slane %v1441, 4
      %v1444 = vshll.u32 %v1258, 16
      %v1446 = vrot.slane %v1444, 5
      %v1447 = vsel %vm1313, %v1442, %v1446
      %v1448 = vshrl.u32 %v1258, 16
      %v1450 = vrot.slane %v1448, 4
      %v1451 = vor.u32 %v1450, %v1446
      %v1452 = vrot.slane %v1451, 4
      %v1454 = vshll.u32 %v1300, 16
      %v1456 = vrot.slane %v1454, 5
      %v1457 = vsel %vm1313, %v1452, %v1456
      %v1459 = vshrl.u32 %v1259, 16
      %v1461 = vrot.slane %v1459, 4
      %v1462 = vshll.u32 %v1259, 16
      %v1464 = vrot.slane %v1462, 5
      %v1465 = vor.u32 %v1461, %v1464
      %v1466 = vrot.slane %v1465, 4
      %v1468 = vshll.u32 %v1260, 16
      %v1470 = vrot.slane %v1468, 5
      %v1471 = vsel %vm1313, %v1466, %v1470
      %v1472 = vshrl.u32 %v1260, 16
      %v1474 = vrot.slane %v1472, 4
      %v1475 = vor.u32 %v1474, %v1470
      %v1476 = vrot.slane %v1475, 4
      %v1478 = vshll.u32 %v1301, 16
      %v1480 = vrot.slane %v1478, 5
      %v1481 = vsel %vm1313, %v1476, %v1480
      %v1483 = vshrl.u32 %v1261, 16
      %v1485 = vrot.slane %v1483, 4
      %v1486 = vshll.u32 %v1261, 16
      %v1488 = vrot.slane %v1486, 5
      %v1489 = vor.u32 %v1485, %v1488
      %v1490 = vrot.slane %v1489, 4
      %v1492 = vshll.u32 %v1262, 16
      %v1494 = vrot.slane %v1492, 5
      %v1495 = vsel %vm1313, %v1490, %v1494
      %v1496 = vshrl.u32 %v1262, 16
      %v1498 = vrot.slane %v1496, 4
      %v1499 = vor.u32 %v1498, %v1494
      %v1500 = vrot.slane %v1499, 4
      %v1502 = vshll.u32 %v1302, 16
      %v1504 = vrot.slane %v1502, 5
      %v1505 = vsel %vm1313, %v1500, %v1504
      %v1507 = vshrl.u32 %v1263, 16
      %v1509 = vrot.slane %v1507, 4
      %v1510 = vshll.u32 %v1263, 16
      %v1512 = vrot.slane %v1510, 5
      %v1513 = vor.u32 %v1509, %v1512
      %v1514 = vrot.slane %v1513, 4
      %v1516 = vshll.u32 %v1264, 16
      %v1518 = vrot.slane %v1516, 5
      %v1519 = vsel %vm1313, %v1514, %v1518
      %v1520 = vshrl.u32 %v1264, 16
      %v1522 = vrot.slane %v1520, 4
      %v1523 = vor.u32 %v1522, %v1518
      %v1524 = vrot.slane %v1523, 4
      %v1526 = vshll.u32 %v1303, 16
      %v1528 = vrot.slane %v1526, 5
      %v1529 = vsel %vm1313, %v1524, %v1528
      %v1531 = vshrl.u32 %v1265, 16
      %v1533 = vrot.slane %v1531, 4
      %v1534 = vshll.u32 %v1265, 16
      %v1536 = vrot.slane %v1534, 5
      %v1537 = vor.u32 %v1533, %v1536
      %v1538 = vrot.slane %v1537, 4
      %v1540 = vshll.u32 %v1266, 16
      %v1542 = vrot.slane %v1540, 5
      %v1543 = vsel %vm1313, %v1538, %v1542
      %v1544 = vshrl.u32 %v1266, 16
      %v1546 = vrot.slane %v1544, 4
      %v1547 = vor.u32 %v1546, %v1542
      %v1548 = vrot.slane %v1547, 4
      %v1550 = vshll.u32 %v1304, 16
      %v1552 = vrot.slane %v1550, 5
      %v1553 = vsel %vm1313, %v1548, %v1552
      %v1555 = vshrl.u32 %v1267, 16
      %v1557 = vrot.slane %v1555, 4
      %v1558 = vshll.u32 %v1267, 16
      %v1560 = vrot.slane %v1558, 5
      %v1561 = vor.u32 %v1557, %v1560
      %v1562 = vrot.slane %v1561, 4
      %v1564 = vshll.u32 %v1268, 16
      %v1566 = vrot.slane %v1564, 5
      %v1567 = vsel %vm1313, %v1562, %v1566
      %v1568 = vshrl.u32 %v1268, 16
      %v1570 = vrot.slane %v1568, 4
      %v1571 = vor.u32 %v1570, %v1566
      %v1572 = vrot.slane %v1571, 4
      %v1574 = vshll.u32 %v1305, 16
      %v1576 = vrot.slane %v1574, 5
      %v1577 = vsel %vm1313, %v1572, %v1576
      %v1579 = vshrl.u32 %v1269, 16
      %v1581 = vrot.slane %v1579, 4
      %v1582 = vshll.u32 %v1269, 16
      %v1584 = vrot.slane %v1582, 5
      %v1585 = vor.u32 %v1581, %v1584
      %v1586 = vrot.slane %v1585, 4
      %v1588 = vshll.u32 %v1270, 16
      %v1590 = vrot.slane %v1588, 5
      %v1591 = vsel %vm1313, %v1586, %v1590
      %v1592 = vshrl.u32 %v1270, 16
      %v1594 = vrot.slane %v1592, 4
      %v1595 = vor.u32 %v1594, %v1590
      %v1596 = vrot.slane %v1595, 4
      %v1598 = vshll.u32 %v1306, 16
      %v1600 = vrot.slane %v1598, 5
      %v1601 = vsel %vm1313, %v1596, %v1600
      %v1603 = vshrl.u32 %v1271, 16
      %v1605 = vrot.slane %v1603, 4
      %v1606 = vshll.u32 %v1271, 16
      %v1608 = vrot.slane %v1606, 5
      %v1609 = vor.u32 %v1605, %v1608
      %v1610 = vrot.slane %v1609, 4
      %v1612 = vshll.u32 %v1272, 16
      %v1614 = vrot.slane %v1612, 5
      %v1615 = vsel %vm1313, %v1610, %v1614
      %v1616 = vshrl.u32 %v1272, 16
      %v1618 = vrot.slane %v1616, 4
      %v1619 = vor.u32 %v1618, %v1614
      %v1620 = vrot.slane %v1619, 4
      %v1622 = vshll.u32 %v1307, 16
      %v1624 = vrot.slane %v1622, 5
      %v1625 = vsel %vm1313, %v1620, %v1624
      %v1627 = vshrl.u32 %v1273, 16
      %v1629 = vrot.slane %v1627, 4
      %v1630 = vshll.u32 %v1273, 16
      %v1632 = vrot.slane %v1630, 5
      %v1633 = vor.u32 %v1629, %v1632
      %v1634 = vrot.slane %v1633, 4
      %v1636 = vshll.u32 %v1274, 16
      %v1638 = vrot.slane %v1636, 5
      %v1639 = vsel %vm1313, %v1634, %v1638
      %v1640 = vshrl.u32 %v1274, 16
      %v1642 = vrot.slane %v1640, 4
      %v1643 = vor.u32 %v1642, %v1638
      %v1644 = vrot.slane %v1643, 4
      %v1646 = vshll.u32 %v1308, 16
      %v1648 = vrot.slane %v1646, 5
      %v1649 = vsel %vm1313, %v1644, %v1648
      %v1651 = vshrl.u32 %v1275, 16
      %v1653 = vrot.slane %v1651, 4
      %v1654 = vshll.u32 %v1275, 16
      %v1656 = vrot.slane %v1654, 5
      %v1657 = vor.u32 %v1653, %v1656
      %v1658 = vrot.slane %v1657, 4
      %v1660 = vshll.u32 %v1276, 16
      %v1662 = vrot.slane %v1660, 5
      %v1663 = vsel %vm1313, %v1658, %v1662
      %v1664 = vshrl.u32 %v1276, 16
      %v1666 = vrot.slane %v1664, 4
      %v1667 = vor.u32 %v1666, %v1662
      %v1668 = vrot.slane %v1667, 4
      %v1670 = vshll.u32 %v1309, 16
      %v1672 = vrot.slane %v1670, 5
      %v1673 = vsel %vm1313, %v1668, %v1672
      %v1675 = vshrl.u32 %v1277, 16
      %v1677 = vrot.slane %v1675, 4
      %v1678 = vshll.u32 %v1277, 16
      %v1680 = vrot.slane %v1678, 5
      %v1681 = vor.u32 %v1677, %v1680
      %v1682 = vrot.slane %v1681, 4
      %v1684 = vshll.u32 %v1278, 16
      %v1686 = vrot.slane %v1684, 5
      %v1687 = vsel %vm1313, %v1682, %v1686
      %v1688 = vshrl.u32 %v1278, 16
      %v1690 = vrot.slane %v1688, 4
      %v1691 = vor.u32 %v1690, %v1686
      %v1692 = vrot.slane %v1691, 4
      %v1694 = vshll.u32 %v1310, 16
      %v1696 = vrot.slane %v1694, 5
      %v1697 = vsel %vm1313, %v1692, %v1696
      %s1698 = scalar_lea.vmem %s3, 64
      %v1699 = vld [vmem:[%s1698] sm:$0xf]
      %v1700 = vld [vmem:[%s1698 + $0x4] sm:$0xf]
      %v1701 = vld [vmem:[%s1698 + $0x8] sm:$0xf]
      %v1702 = vld [vmem:[%s1698 + $0xc] sm:$0xf]
      %v1703 = vld [vmem:[%s1698 + $0x10] sm:$0xf]
      %v1704 = vld [vmem:[%s1698 + $0x14] sm:$0xf]
      %v1705 = vld [vmem:[%s1698 + $0x18] sm:$0xf]
      %v1706 = vld [vmem:[%s1698 + $0x1c] sm:$0xf]
      %v1707 = vld [vmem:[%s1698 + $0x20] sm:$0xf]
      %v1708 = vld [vmem:[%s1698 + $0x24] sm:$0xf]
      %v1709 = vld [vmem:[%s1698 + $0x28] sm:$0xf]
      %v1710 = vld [vmem:[%s1698 + $0x2c] sm:$0xf]
      %v1711 = vld [vmem:[%s1698 + $0x30] sm:$0xf]
      %v1712 = vld [vmem:[%s1698 + $0x34] sm:$0xf]
      %v1713 = vld [vmem:[%s1698 + $0x38] sm:$0xf]
      %v1714 = vld [vmem:[%s1698 + $0x3c] sm:$0xf]
      %v1715 = vunpack.c.l.b16 %v1327
      %v1716 = vunpack.c.l.b16 %v1337
      %v1717 = vunpack.c.l.b16 %v1351
      %v1718 = vunpack.c.l.b16 %v1361
      %v1719 = vunpack.c.l.b16 %v1375
      %v1720 = vunpack.c.l.b16 %v1385
      %v1721 = vunpack.c.l.b16 %v1399
      %v1722 = vunpack.c.l.b16 %v1409
      %v1723 = vunpack.c.l.b16 %v1423
      %v1724 = vunpack.c.l.b16 %v1433
      %v1725 = vunpack.c.l.b16 %v1447
      %v1726 = vunpack.c.l.b16 %v1457
      %v1727 = vunpack.c.l.b16 %v1471
      %v1728 = vunpack.c.l.b16 %v1481
      %v1729 = vunpack.c.l.b16 %v1495
      %v1730 = vunpack.c.l.b16 %v1505
      %v1731 = vunpack.c.l.b16 %v1519
      %v1732 = vunpack.c.l.b16 %v1529
      %v1733 = vunpack.c.l.b16 %v1543
      %v1734 = vunpack.c.l.b16 %v1553
      %v1735 = vunpack.c.l.b16 %v1567
      %v1736 = vunpack.c.l.b16 %v1577
      %v1737 = vunpack.c.l.b16 %v1591
      %v1738 = vunpack.c.l.b16 %v1601
      %v1739 = vunpack.c.l.b16 %v1615
      %v1740 = vunpack.c.l.b16 %v1625
      %v1741 = vunpack.c.l.b16 %v1639
      %v1742 = vunpack.c.l.b16 %v1649
      %v1743 = vunpack.c.l.b16 %v1663
      %v1744 = vunpack.c.l.b16 %v1673
      %v1745 = vunpack.c.l.b16 %v1687
      %v1746 = vunpack.c.l.b16 %v1697
      %v1747 = vpack.c.b16 %v1716, %v1715
      %v1748 = vpack.c.b16 %v1718, %v1717
      %v1749 = vpack.c.b16 %v1720, %v1719
      %v1750 = vpack.c.b16 %v1722, %v1721
      %v1751 = vpack.c.b16 %v1724, %v1723
      %v1752 = vpack.c.b16 %v1726, %v1725
      %v1753 = vpack.c.b16 %v1728, %v1727
      %v1754 = vpack.c.b16 %v1730, %v1729
      %v1755 = vpack.c.b16 %v1732, %v1731
      %v1756 = vpack.c.b16 %v1734, %v1733
      %v1757 = vpack.c.b16 %v1736, %v1735
      %v1758 = vpack.c.b16 %v1738, %v1737
      %v1759 = vpack.c.b16 %v1740, %v1739
      %v1760 = vpack.c.b16 %v1742, %v1741
      %v1761 = vpack.c.b16 %v1744, %v1743
      %v1762 = vpack.c.b16 %v1746, %v1745
      %v1795 = vunpack.c.l.b16 %v1699
      %v1796 = vunpack.c.l.b16 %v1700
      %v1797 = vunpack.c.l.b16 %v1701
      %v1798 = vunpack.c.l.b16 %v1702
      %v1799 = vunpack.c.l.b16 %v1703
      %v1800 = vunpack.c.l.b16 %v1704
      %v1801 = vunpack.c.l.b16 %v1705
      %v1802 = vunpack.c.l.b16 %v1706
      %v1803 = vunpack.c.l.b16 %v1707
      %v1804 = vunpack.c.l.b16 %v1708
      %v1805 = vunpack.c.l.b16 %v1709
      %v1806 = vunpack.c.l.b16 %v1710
      %v1807 = vunpack.c.l.b16 %v1711
      %v1808 = vunpack.c.l.b16 %v1712
      %v1809 = vunpack.c.l.b16 %v1713
      %v1810 = vunpack.c.l.b16 %v1714
      %v1811 = vpack.c.b16 %v1796, %v1795
      %v1812 = vpack.c.b16 %v1798, %v1797
      %v1813 = vpack.c.b16 %v1800, %v1799
      %v1814 = vpack.c.b16 %v1802, %v1801
      %v1815 = vpack.c.b16 %v1804, %v1803
      %v1816 = vpack.c.b16 %v1806, %v1805
      %v1817 = vpack.c.b16 %v1808, %v1807
      %v1818 = vpack.c.b16 %v1810, %v1809
      %1827 = vmatprep.subr.bf16.mxu0 0
      %1828 = vmatpush1.bf16.msra.mxu0 %v1811
      %1829 = vmatprep.subr.bf16.mxu0 0
      %1830 = vmatpush1.bf16.msra.mxu0 %v1812
      %1831 = vmatprep.subr.bf16.mxu0 0
      %1832 = vmatpush1.bf16.msra.mxu0 %v1813
      %1833 = vmatprep.subr.bf16.mxu0 0
      %1834 = vmatpush1.bf16.msra.mxu0 %v1814
      %1835 = vmatprep.subr.bf16.mxu0 0
      %1836 = vmatpush1.bf16.msra.mxu0 %v1815
      %1837 = vmatprep.subr.bf16.mxu0 0
      %1838 = vmatpush1.bf16.msra.mxu0 %v1816
      %1839 = vmatprep.subr.bf16.mxu0 0
      %1840 = vmatpush1.bf16.msra.mxu0 %v1817
      %1841 = vmatprep.subr.bf16.mxu0 0
      %1842 = vmatpush1.bf16.msra.mxu0 %v1818
      %1843 = vmatprep.subr.bf16.mxu0 0
      %1844 = vmatpush1.bf16.msra.mxu0 0
      %1845 = vmatprep.subr.bf16.mxu0 0
      %1846 = vmatpush1.bf16.msra.mxu0 0
      %1847 = vmatprep.subr.bf16.mxu0 0
      %1848 = vmatpush1.bf16.msra.mxu0 0
      %1849 = vmatprep.subr.bf16.mxu0 0
      %1850 = vmatpush1.bf16.msra.mxu0 0
      %1851 = vmatprep.subr.bf16.mxu0 0
      %1852 = vmatpush1.bf16.msra.mxu0 0
      %1853 = vmatprep.subr.bf16.mxu0 0
      %1854 = vmatpush1.bf16.msra.mxu0 0
      %1855 = vmatprep.subr.bf16.mxu0 0
      %1856 = vmatpush1.bf16.msra.mxu0 0
      %1857 = vmatprep.subr.bf16.mxu0 0
      %1858 = vmatpush1.bf16.msra.mxu0 0
      %1859 = vmatprep.mubr.bf16.mxu0 0
      %1860 = vmatmul.mubr.bf16.gmra.mrb[0].mxu0 %v1747
      %v1861 = vpop.f32.mrb[0].mxu0
      %v1862 = vadd.f32 0.0, %v1861
      %v1863 = vpop.f32.mrb[0].mxu0
      %v1864 = vpop.f32.mrb[0].mxu0
      %v1865 = vadd.f32 0.0, %v1864
      %v1866 = vpop.f32.mrb[0].mxu0
      %1867 = vmatprep.mubr.bf16.mxu0 0
      %1868 = vmatmul.mubr.bf16.gmra.mrb[0].mxu0 %v1748
      %v1869 = vpop.f32.mrb[0].mxu0
      %v1870 = vadd.f32 0.0, %v1869
      %v1871 = vpop.f32.mrb[0].mxu0
      %v1872 = vpop.f32.mrb[0].mxu0
      %v1873 = vadd.f32 0.0, %v1872
      %v1874 = vpop.f32.mrb[0].mxu0
      %1875 = vmatprep.mubr.bf16.mxu0 0
      %1876 = vmatmul.mubr.bf16.gmra.mrb[0].mxu0 %v1749
      %v1877 = vpop.f32.mrb[0].mxu0
      %v1878 = vadd.f32 0.0, %v1877
      %v1879 = vpop.f32.mrb[0].mxu0
      %v1880 = vpop.f32.mrb[0].mxu0
      %v1881 = vadd.f32 0.0, %v1880
      %v1882 = vpop.f32.mrb[0].mxu0
      %1883 = vmatprep.mubr.bf16.mxu0 0
      %1884 = vmatmul.mubr.bf16.gmra.mrb[0].mxu0 %v1750
      %v1885 = vpop.f32.mrb[0].mxu0
      %v1886 = vadd.f32 0.0, %v1885
      %v1887 = vpop.f32.mrb[0].mxu0
      %v1888 = vpop.f32.mrb[0].mxu0
      %v1889 = vadd.f32 0.0, %v1888
      %v1890 = vpop.f32.mrb[0].mxu0
      %1891 = vmatprep.mubr.bf16.mxu0 0
      %1892 = vmatmul.mubr.bf16.gmra.mrb[0].mxu0 %v1751
      %v1893 = vpop.f32.mrb[0].mxu0
      %v1894 = vadd.f32 0.0, %v1893
      %v1895 = vpop.f32.mrb[0].mxu0
      %v1896 = vpop.f32.mrb[0].mxu0
      %v1897 = vadd.f32 0.0, %v1896
      %v1898 = vpop.f32.mrb[0].mxu0
      %1899 = vmatprep.mubr.bf16.mxu0 0
      %1900 = vmatmul.mubr.bf16.gmra.mrb[0].mxu0 %v1752
      %v1901 = vpop.f32.mrb[0].mxu0
      %v1902 = vadd.f32 0.0, %v1901
      %v1903 = vpop.f32.mrb[0].mxu0
      %v1904 = vpop.f32.mrb[0].mxu0
      %v1905 = vadd.f32 0.0, %v1904
      %v1906 = vpop.f32.mrb[0].mxu0
      %1907 = vmatprep.mubr.bf16.mxu0 0
      %1908 = vmatmul.mubr.bf16.gmra.mrb[0].mxu0 %v1753
      %v1909 = vpop.f32.mrb[0].mxu0
      %v1910 = vadd.f32 0.0, %v1909
      %v1911 = vpop.f32.mrb[0].mxu0
      %v1912 = vpop.f32.mrb[0].mxu0
      %v1913 = vadd.f32 0.0, %v1912
      %v1914 = vpop.f32.mrb[0].mxu0
      %1915 = vmatprep.mubr.bf16.mxu0 0
      %1916 = vmatmul.mubr.bf16.gmra.mrb[0].mxu0 %v1754
      %v1917 = vpop.f32.mrb[0].mxu0
      %v1918 = vadd.f32 0.0, %v1917
      %v1919 = vpop.f32.mrb[0].mxu0
      %v1920 = vpop.f32.mrb[0].mxu0
      %v1921 = vadd.f32 0.0, %v1920
      %v1922 = vpop.f32.mrb[0].mxu0
      %1923 = vmatprep.mubr.bf16.mxu0 0
      %1924 = vmatmul.mubr.bf16.gmra.mrb[0].mxu0 %v1755
      %v1925 = vpop.f32.mrb[0].mxu0
      %v1926 = vadd.f32 0.0, %v1925
      %v1927 = vpop.f32.mrb[0].mxu0
      %v1928 = vpop.f32.mrb[0].mxu0
      %v1929 = vadd.f32 0.0, %v1928
      %v1930 = vpop.f32.mrb[0].mxu0
      %1931 = vmatprep.mubr.bf16.mxu0 0
      %1932 = vmatmul.mubr.bf16.gmra.mrb[0].mxu0 %v1756
      %v1933 = vpop.f32.mrb[0].mxu0
      %v1934 = vadd.f32 0.0, %v1933
      %v1935 = vpop.f32.mrb[0].mxu0
      %v1936 = vpop.f32.mrb[0].mxu0
      %v1937 = vadd.f32 0.0, %v1936
      %v1938 = vpop.f32.mrb[0].mxu0
      %1939 = vmatprep.mubr.bf16.mxu0 0
      %1940 = vmatmul.mubr.bf16.gmra.mrb[0].mxu0 %v1757
      %v1941 = vpop.f32.mrb[0].mxu0
      %v1942 = vadd.f32 0.0, %v1941
      %v1943 = vpop.f32.mrb[0].mxu0
      %v1944 = vpop.f32.mrb[0].mxu0
      %v1945 = vadd.f32 0.0, %v1944
      %v1946 = vpop.f32.mrb[0].mxu0
      %1947 = vmatprep.mubr.bf16.mxu0 0
      %1948 = vmatmul.mubr.bf16.gmra.mrb[0].mxu0 %v1758
      %v1949 = vpop.f32.mrb[0].mxu0
      %v1950 = vadd.f32 0.0, %v1949
      %v1951 = vpop.f32.mrb[0].mxu0
      %v1952 = vpop.f32.mrb[0].mxu0
      %v1953 = vadd.f32 0.0, %v1952
      %v1954 = vpop.f32.mrb[0].mxu0
      %1955 = vmatprep.mubr.bf16.mxu0 0
      %1956 = vmatmul.mubr.bf16.gmra.mrb[0].mxu0 %v1759
      %v1957 = vpop.f32.mrb[0].mxu0
      %v1958 = vadd.f32 0.0, %v1957
      %v1959 = vpop.f32.mrb[0].mxu0
      %v1960 = vpop.f32.mrb[0].mxu0
      %v1961 = vadd.f32 0.0, %v1960
      %v1962 = vpop.f32.mrb[0].mxu0
      %1963 = vmatprep.mubr.bf16.mxu0 0
      %1964 = vmatmul.mubr.bf16.gmra.mrb[0].mxu0 %v1760
      %v1965 = vpop.f32.mrb[0].mxu0
      %v1966 = vadd.f32 0.0, %v1965
      %v1967 = vpop.f32.mrb[0].mxu0
      %v1968 = vpop.f32.mrb[0].mxu0
      %v1969 = vadd.f32 0.0, %v1968
      %v1970 = vpop.f32.mrb[0].mxu0
      %1971 = vmatprep.mubr.bf16.mxu0 0
      %1972 = vmatmul.mubr.bf16.gmra.mrb[0].mxu0 %v1761
      %v1973 = vpop.f32.mrb[0].mxu0
      %v1974 = vadd.f32 0.0, %v1973
      %v1975 = vpop.f32.mrb[0].mxu0
      %v1976 = vpop.f32.mrb[0].mxu0
      %v1977 = vadd.f32 0.0, %v1976
      %v1978 = vpop.f32.mrb[0].mxu0
      %1979 = vmatprep.mubr.bf16.mxu0 0
      %1980 = vmatmul.mubr.bf16.gmra.mrb[0].mxu0 %v1762
      %v1981 = vpop.f32.mrb[0].mxu0
      %v1982 = vadd.f32 0.0, %v1981
      %v1983 = vpop.f32.mrb[0].mxu0
      %v1984 = vpop.f32.mrb[0].mxu0
      %v1985 = vadd.f32 0.0, %v1984
      %v1986 = vpop.f32.mrb[0].mxu0
      %1987 = vdwg.mxu0
      %v2020 = vunpack.c.l.b16 %v1247
      %v2021 = vunpack.c.l.b16 %v1248
      %v2022 = vunpack.c.l.b16 %v1249
      %v2023 = vunpack.c.l.b16 %v1250
      %v2024 = vunpack.c.l.b16 %v1251
      %v2025 = vunpack.c.l.b16 %v1252
      %v2026 = vunpack.c.l.b16 %v1253
      %v2027 = vunpack.c.l.b16 %v1254
      %v2028 = vunpack.c.l.b16 %v1255
      %v2029 = vunpack.c.l.b16 %v1256
      %v2030 = vunpack.c.l.b16 %v1257
      %v2031 = vunpack.c.l.b16 %v1258
      %v2032 = vunpack.c.l.b16 %v1259
      %v2033 = vunpack.c.l.b16 %v1260
      %v2034 = vunpack.c.l.b16 %v1261
      %v2035 = vunpack.c.l.b16 %v1262
      %v2036 = vunpack.c.l.b16 %v1263
      %v2037 = vunpack.c.l.b16 %v1264
      %v2038 = vunpack.c.l.b16 %v1265
      %v2039 = vunpack.c.l.b16 %v1266
      %v2040 = vunpack.c.l.b16 %v1267
      %v2041 = vunpack.c.l.b16 %v1268
      %v2042 = vunpack.c.l.b16 %v1269
      %v2043 = vunpack.c.l.b16 %v1270
      %v2044 = vunpack.c.l.b16 %v1271
      %v2045 = vunpack.c.l.b16 %v1272
      %v2046 = vunpack.c.l.b16 %v1273
      %v2047 = vunpack.c.l.b16 %v1274
      %v2048 = vunpack.c.l.b16 %v1275
      %v2049 = vunpack.c.l.b16 %v1276
      %v2050 = vunpack.c.l.b16 %v1277
      %v2051 = vunpack.c.l.b16 %v1278
      %v2052 = vpack.c.b16 %v2021, %v2020
      %v2053 = vpack.c.b16 %v2023, %v2022
      %v2054 = vpack.c.b16 %v2025, %v2024
      %v2055 = vpack.c.b16 %v2027, %v2026
      %v2056 = vpack.c.b16 %v2029, %v2028
      %v2057 = vpack.c.b16 %v2031, %v2030
      %v2058 = vpack.c.b16 %v2033, %v2032
      %v2059 = vpack.c.b16 %v2035, %v2034
      %v2060 = vpack.c.b16 %v2037, %v2036
      %v2061 = vpack.c.b16 %v2039, %v2038
      %v2062 = vpack.c.b16 %v2041, %v2040
      %v2063 = vpack.c.b16 %v2043, %v2042
      %v2064 = vpack.c.b16 %v2045, %v2044
      %v2065 = vpack.c.b16 %v2047, %v2046
      %v2066 = vpack.c.b16 %v2049, %v2048
      %v2067 = vpack.c.b16 %v2051, %v2050
      %v2100 = vunpack.c.l.b16 %v1279
      %v2101 = vunpack.c.l.b16 %v1280
      %v2102 = vunpack.c.l.b16 %v1281
      %v2103 = vunpack.c.l.b16 %v1282
      %v2104 = vunpack.c.l.b16 %v1283
      %v2105 = vunpack.c.l.b16 %v1284
      %v2106 = vunpack.c.l.b16 %v1285
      %v2107 = vunpack.c.l.b16 %v1286
      %v2108 = vunpack.c.l.b16 %v1287
      %v2109 = vunpack.c.l.b16 %v1288
      %v2110 = vunpack.c.l.b16 %v1289
      %v2111 = vunpack.c.l.b16 %v1290
      %v2112 = vunpack.c.l.b16 %v1291
      %v2113 = vunpack.c.l.b16 %v1292
      %v2114 = vunpack.c.l.b16 %v1293
      %v2115 = vunpack.c.l.b16 %v1294
      %v2116 = vpack.c.b16 %v2101, %v2100
      %v2117 = vpack.c.b16 %v2103, %v2102
      %v2118 = vpack.c.b16 %v2105, %v2104
      %v2119 = vpack.c.b16 %v2107, %v2106
      %v2120 = vpack.c.b16 %v2109, %v2108
      %v2121 = vpack.c.b16 %v2111, %v2110
      %v2122 = vpack.c.b16 %v2113, %v2112
      %v2123 = vpack.c.b16 %v2115, %v2114
      %2132 = vmatprep.subr.bf16.mxu0 0
      %2133 = vmatpush1.bf16.msra.mxu0 %v2116
      %2134 = vmatprep.subr.bf16.mxu0 0
      %2135 = vmatpush1.bf16.msra.mxu0 %v2117
      %2136 = vmatprep.subr.bf16.mxu0 0
      %2137 = vmatpush1.bf16.msra.mxu0 %v2118
      %2138 = vmatprep.subr.bf16.mxu0 0
      %2139 = vmatpush1.bf16.msra.mxu0 %v2119
      %2140 = vmatprep.subr.bf16.mxu0 0
      %2141 = vmatpush1.bf16.msra.mxu0 %v2120
      %2142 = vmatprep.subr.bf16.mxu0 0
      %2143 = vmatpush1.bf16.msra.mxu0 %v2121
      %2144 = vmatprep.subr.bf16.mxu0 0
      %2145 = vmatpush1.bf16.msra.mxu0 %v2122
      %2146 = vmatprep.subr.bf16.mxu0 0
      %2147 = vmatpush1.bf16.msra.mxu0 %v2123
      %2148 = vmatprep.subr.bf16.mxu0 0
      %2149 = vmatpush1.bf16.msra.mxu0 0
      %2150 = vmatprep.subr.bf16.mxu0 0
      %2151 = vmatpush1.bf16.msra.mxu0 0
      %2152 = vmatprep.subr.bf16.mxu0 0
      %2153 = vmatpush1.bf16.msra.mxu0 0
      %2154 = vmatprep.subr.bf16.mxu0 0
      %2155 = vmatpush1.bf16.msra.mxu0 0
      %2156 = vmatprep.subr.bf16.mxu0 0
      %2157 = vmatpush1.bf16.msra.mxu0 0
      %2158 = vmatprep.subr.bf16.mxu0 0
      %2159 = vmatpush1.bf16.msra.mxu0 0
      %2160 = vmatprep.subr.bf16.mxu0 0
      %2161 = vmatpush1.bf16.msra.mxu0 0
      %2162 = vmatprep.subr.bf16.mxu0 0
      %2163 = vmatpush1.bf16.msra.mxu0 0
      %2164 = vmatprep.mubr.bf16.mxu0 0
      %2165 = vmatmul.mubr.bf16.gmra.mrb[0].mxu0 %v2052
      %v2166 = vpop.f32.mrb[0].mxu0
      %v2167 = vadd.f32 %v1862, %v2166
      %v2168 = vpop.f32.mrb[0].mxu0
      %v2169 = vpop.f32.mrb[0].mxu0
      %v2170 = vadd.f32 %v1865, %v2169
      %v2171 = vpop.f32.mrb[0].mxu0
      %2172 = vmatprep.mubr.bf16.mxu0 0
      %2173 = vmatmul.mubr.bf16.gmra.mrb[0].mxu0 %v2053
      %v2174 = vpop.f32.mrb[0].mxu0
      %v2175 = vadd.f32 %v1870, %v2174
      %v2176 = vpop.f32.mrb[0].mxu0
      %v2177 = vpop.f32.mrb[0].mxu0
      %v2178 = vadd.f32 %v1873, %v2177
      %v2179 = vpop.f32.mrb[0].mxu0
      %2180 = vmatprep.mubr.bf16.mxu0 0
      %2181 = vmatmul.mubr.bf16.gmra.mrb[0].mxu0 %v2054
      %v2182 = vpop.f32.mrb[0].mxu0
      %v2183 = vadd.f32 %v1878, %v2182
      %v2184 = vpop.f32.mrb[0].mxu0
      %v2185 = vpop.f32.mrb[0].mxu0
      %v2186 = vadd.f32 %v1881, %v2185
      %v2187 = vpop.f32.mrb[0].mxu0
      %2188 = vmatprep.mubr.bf16.mxu0 0
      %2189 = vmatmul.mubr.bf16.gmra.mrb[0].mxu0 %v2055
      %v2190 = vpop.f32.mrb[0].mxu0
      %v2191 = vadd.f32 %v1886, %v2190
      %v2192 = vpop.f32.mrb[0].mxu0
      %v2193 = vpop.f32.mrb[0].mxu0
      %v2194 = vadd.f32 %v1889, %v2193
      %v2195 = vpop.f32.mrb[0].mxu0
      %2196 = vmatprep.mubr.bf16.mxu0 0
      %2197 = vmatmul.mubr.bf16.gmra.mrb[0].mxu0 %v2056
      %v2198 = vpop.f32.mrb[0].mxu0
      %v2199 = vadd.f32 %v1894, %v2198
      %v2200 = vpop.f32.mrb[0].mxu0
      %v2201 = vpop.f32.mrb[0].mxu0
      %v2202 = vadd.f32 %v1897, %v2201
      %v2203 = vpop.f32.mrb[0].mxu0
      %2204 = vmatprep.mubr.bf16.mxu0 0
      %2205 = vmatmul.mubr.bf16.gmra.mrb[0].mxu0 %v2057
      %v2206 = vpop.f32.mrb[0].mxu0
      %v2207 = vadd.f32 %v1902, %v2206
      %v2208 = vpop.f32.mrb[0].mxu0
      %v2209 = vpop.f32.mrb[0].mxu0
      %v2210 = vadd.f32 %v1905, %v2209
      %v2211 = vpop.f32.mrb[0].mxu0
      %2212 = vmatprep.mubr.bf16.mxu0 0
      %2213 = vmatmul.mubr.bf16.gmra.mrb[0].mxu0 %v2058
      %v2214 = vpop.f32.mrb[0].mxu0
      %v2215 = vadd.f32 %v1910, %v2214
      %v2216 = vpop.f32.mrb[0].mxu0
      %v2217 = vpop.f32.mrb[0].mxu0
      %v2218 = vadd.f32 %v1913, %v2217
      %v2219 = vpop.f32.mrb[0].mxu0
      %2220 = vmatprep.mubr.bf16.mxu0 0
      %2221 = vmatmul.mubr.bf16.gmra.mrb[0].mxu0 %v2059
      %v2222 = vpop.f32.mrb[0].mxu0
      %v2223 = vadd.f32 %v1918, %v2222
      %v2224 = vpop.f32.mrb[0].mxu0
      %v2225 = vpop.f32.mrb[0].mxu0
      %v2226 = vadd.f32 %v1921, %v2225
      %v2227 = vpop.f32.mrb[0].mxu0
      %2228 = vmatprep.mubr.bf16.mxu0 0
      %2229 = vmatmul.mubr.bf16.gmra.mrb[0].mxu0 %v2060
      %v2230 = vpop.f32.mrb[0].mxu0
      %v2231 = vadd.f32 %v1926, %v2230
      %v2232 = vpop.f32.mrb[0].mxu0
      %v2233 = vpop.f32.mrb[0].mxu0
      %v2234 = vadd.f32 %v1929, %v2233
      %v2235 = vpop.f32.mrb[0].mxu0
      %2236 = vmatprep.mubr.bf16.mxu0 0
      %2237 = vmatmul.mubr.bf16.gmra.mrb[0].mxu0 %v2061
      %v2238 = vpop.f32.mrb[0].mxu0
      %v2239 = vadd.f32 %v1934, %v2238
      %v2240 = vpop.f32.mrb[0].mxu0
      %v2241 = vpop.f32.mrb[0].mxu0
      %v2242 = vadd.f32 %v1937, %v2241
      %v2243 = vpop.f32.mrb[0].mxu0
      %2244 = vmatprep.mubr.bf16.mxu0 0
      %2245 = vmatmul.mubr.bf16.gmra.mrb[0].mxu0 %v2062
      %v2246 = vpop.f32.mrb[0].mxu0
      %v2247 = vadd.f32 %v1942, %v2246
      %v2248 = vpop.f32.mrb[0].mxu0
      %v2249 = vpop.f32.mrb[0].mxu0
      %v2250 = vadd.f32 %v1945, %v2249
      %v2251 = vpop.f32.mrb[0].mxu0
      %2252 = vmatprep.mubr.bf16.mxu0 0
      %2253 = vmatmul.mubr.bf16.gmra.mrb[0].mxu0 %v2063
      %v2254 = vpop.f32.mrb[0].mxu0
      %v2255 = vadd.f32 %v1950, %v2254
      %v2256 = vpop.f32.mrb[0].mxu0
      %v2257 = vpop.f32.mrb[0].mxu0
      %v2258 = vadd.f32 %v1953, %v2257
      %v2259 = vpop.f32.mrb[0].mxu0
      %2260 = vmatprep.mubr.bf16.mxu0 0
      %2261 = vmatmul.mubr.bf16.gmra.mrb[0].mxu0 %v2064
      %v2262 = vpop.f32.mrb[0].mxu0
      %v2263 = vadd.f32 %v1958, %v2262
      %v2264 = vpop.f32.mrb[0].mxu0
      %v2265 = vpop.f32.mrb[0].mxu0
      %v2266 = vadd.f32 %v1961, %v2265
      %v2267 = vpop.f32.mrb[0].mxu0
      %2268 = vmatprep.mubr.bf16.mxu0 0
      %2269 = vmatmul.mubr.bf16.gmra.mrb[0].mxu0 %v2065
      %v2270 = vpop.f32.mrb[0].mxu0
      %v2271 = vadd.f32 %v1966, %v2270
      %v2272 = vpop.f32.mrb[0].mxu0
      %v2273 = vpop.f32.mrb[0].mxu0
      %v2274 = vadd.f32 %v1969, %v2273
      %v2275 = vpop.f32.mrb[0].mxu0
      %2276 = vmatprep.mubr.bf16.mxu0 0
      %2277 = vmatmul.mubr.bf16.gmra.mrb[0].mxu0 %v2066
      %v2278 = vpop.f32.mrb[0].mxu0
      %v2279 = vadd.f32 %v1974, %v2278
      %v2280 = vpop.f32.mrb[0].mxu0
      %v2281 = vpop.f32.mrb[0].mxu0
      %v2282 = vadd.f32 %v1977, %v2281
      %v2283 = vpop.f32.mrb[0].mxu0
      %2284 = vmatprep.mubr.bf16.mxu0 0
      %2285 = vmatmul.mubr.bf16.gmra.mrb[0].mxu0 %v2067
      %v2286 = vpop.f32.mrb[0].mxu0
      %v2287 = vadd.f32 %v1982, %v2286
      %v2288 = vpop.f32.mrb[0].mxu0
      %v2289 = vpop.f32.mrb[0].mxu0
      %v2290 = vadd.f32 %v1985, %v2289
      %v2291 = vpop.f32.mrb[0].mxu0
      %2292 = vdwg.mxu0
      %v2293 = vld [vmem:[#allocation2] sm:$0xe]
      %v2294 = vld [vmem:[#allocation2 + $0xc] sm:$0xe]
      %v2295 = vld [vmem:[#allocation2 + $0x18] sm:$0xe]
      %v2296 = vld [vmem:[#allocation2 + $0x24] sm:$0xe]
      %v2297 = vld [vmem:[#allocation2 + $0x30] sm:$0xe]
      %v2298 = vld [vmem:[#allocation2 + $0x3c] sm:$0xe]
      %v2299 = vld [vmem:[#allocation2 + $0x48] sm:$0xe]
      %v2300 = vld [vmem:[#allocation2 + $0x54] sm:$0xe]
      %v2301 = vld [vmem:[#allocation2 + $0x60] sm:$0xe]
      %v2302 = vld [vmem:[#allocation2 + $0x6c] sm:$0xe]
      %v2303 = vld [vmem:[#allocation2 + $0x78] sm:$0xe]
      %v2304 = vld [vmem:[#allocation2 + $0x84] sm:$0xe]
      %v2305 = vld [vmem:[#allocation2 + $0x90] sm:$0xe]
      %v2306 = vld [vmem:[#allocation2 + $0x9c] sm:$0xe]
      %v2307 = vld [vmem:[#allocation2 + $0xa8] sm:$0xe]
      %v2308 = vld [vmem:[#allocation2 + $0xb4] sm:$0xe]
      %vm2341 = vcmask 1042432
      %vm2342 = vcmask 1046532
      %vm2343 = vmor %vm2341, %vm2342
      %v2344 = vrot.slane %v2293, 5
      %v2345 = vrot.slane %v2344, 4
      %v2346 = vrot.slane %v1248, 5
      %v2347 = vsel %vm2343, %v2345, %v2346
      %v2348 = vrot.slane %v2346, 4
      %v2349 = vrot.slane %v1295, 5
      %v2350 = vsel %vm2343, %v2348, %v2349
      %v2351 = vrot.slane %v2294, 5
      %v2352 = vrot.slane %v2351, 4
      %v2353 = vrot.slane %v1250, 5
      %v2354 = vsel %vm2343, %v2352, %v2353
      %v2355 = vrot.slane %v2353, 4
      %v2356 = vrot.slane %v1296, 5
      %v2357 = vsel %vm2343, %v2355, %v2356
      %v2358 = vrot.slane %v2295, 5
      %v2359 = vrot.slane %v2358, 4
      %v2360 = vrot.slane %v1252, 5
      %v2361 = vsel %vm2343, %v2359, %v2360
      %v2362 = vrot.slane %v2360, 4
      %v2363 = vrot.slane %v1297, 5
      %v2364 = vsel %vm2343, %v2362, %v2363
      %v2365 = vrot.slane %v2296, 5
      %v2366 = vrot.slane %v2365, 4
      %v2367 = vrot.slane %v1254, 5
      %v2368 = vsel %vm2343, %v2366, %v2367
      %v2369 = vrot.slane %v2367, 4
      %v2370 = vrot.slane %v1298, 5
      %v2371 = vsel %vm2343, %v2369, %v2370
      %v2372 = vrot.slane %v2297, 5
      %v2373 = vrot.slane %v2372, 4
      %v2374 = vrot.slane %v1256, 5
      %v2375 = vsel %vm2343, %v2373, %v2374
      %v2376 = vrot.slane %v2374, 4
      %v2377 = vrot.slane %v1299, 5
      %v2378 = vsel %vm2343, %v2376, %v2377
      %v2379 = vrot.slane %v2298, 5
      %v2380 = vrot.slane %v2379, 4
      %v2381 = vrot.slane %v1258, 5
      %v2382 = vsel %vm2343, %v2380, %v2381
      %v2383 = vrot.slane %v2381, 4
      %v2384 = vrot.slane %v1300, 5
      %v2385 = vsel %vm2343, %v2383, %v2384
      %v2386 = vrot.slane %v2299, 5
      %v2387 = vrot.slane %v2386, 4
      %v2388 = vrot.slane %v1260, 5
      %v2389 = vsel %vm2343, %v2387, %v2388
      %v2390 = vrot.slane %v2388, 4
      %v2391 = vrot.slane %v1301, 5
      %v2392 = vsel %vm2343, %v2390, %v2391
      %v2393 = vrot.slane %v2300, 5
      %v2394 = vrot.slane %v2393, 4
      %v2395 = vrot.slane %v1262, 5
      %v2396 = vsel %vm2343, %v2394, %v2395
      %v2397 = vrot.slane %v2395, 4
      %v2398 = vrot.slane %v1302, 5
      %v2399 = vsel %vm2343, %v2397, %v2398
      %v2400 = vrot.slane %v2301, 5
      %v2401 = vrot.slane %v2400, 4
      %v2402 = vrot.slane %v1264, 5
      %v2403 = vsel %vm2343, %v2401, %v2402
      %v2404 = vrot.slane %v2402, 4
      %v2405 = vrot.slane %v1303, 5
      %v2406 = vsel %vm2343, %v2404, %v2405
      %v2407 = vrot.slane %v2302, 5
      %v2408 = vrot.slane %v2407, 4
      %v2409 = vrot.slane %v1266, 5
      %v2410 = vsel %vm2343, %v2408, %v2409
      %v2411 = vrot.slane %v2409, 4
      %v2412 = vrot.slane %v1304, 5
      %v2413 = vsel %vm2343, %v2411, %v2412
      %v2414 = vrot.slane %v2303, 5
      %v2415 = vrot.slane %v2414, 4
      %v2416 = vrot.slane %v1268, 5
      %v2417 = vsel %vm2343, %v2415, %v2416
      %v2418 = vrot.slane %v2416, 4
      %v2419 = vrot.slane %v1305, 5
      %v2420 = vsel %vm2343, %v2418, %v2419
      %v2421 = vrot.slane %v2304, 5
      %v2422 = vrot.slane %v2421, 4
      %v2423 = vrot.slane %v1270, 5
      %v2424 = vsel %vm2343, %v2422, %v2423
      %v2425 = vrot.slane %v2423, 4
      %v2426 = vrot.slane %v1306, 5
      %v2427 = vsel %vm2343, %v2425, %v2426
      %v2428 = vrot.slane %v2305, 5
      %v2429 = vrot.slane %v2428, 4
      %v2430 = vrot.slane %v1272, 5
      %v2431 = vsel %vm2343, %v2429, %v2430
      %v2432 = vrot.slane %v2430, 4
      %v2433 = vrot.slane %v1307, 5
      %v2434 = vsel %vm2343, %v2432, %v2433
      %v2435 = vrot.slane %v2306, 5
      %v2436 = vrot.slane %v2435, 4
      %v2437 = vrot.slane %v1274, 5
      %v2438 = vsel %vm2343, %v2436, %v2437
      %v2439 = vrot.slane %v2437, 4
      %v2440 = vrot.slane %v1308, 5
      %v2441 = vsel %vm2343, %v2439, %v2440
      %v2442 = vrot.slane %v2307, 5
      %v2443 = vrot.slane %v2442, 4
      %v2444 = vrot.slane %v1276, 5
      %v2445 = vsel %vm2343, %v2443, %v2444
      %v2446 = vrot.slane %v2444, 4
      %v2447 = vrot.slane %v1309, 5
      %v2448 = vsel %vm2343, %v2446, %v2447
      %v2449 = vrot.slane %v2308, 5
      %v2450 = vrot.slane %v2449, 4
      %v2451 = vrot.slane %v1278, 5
      %v2452 = vsel %vm2343, %v2450, %v2451
      %v2453 = vrot.slane %v2451, 4
      %v2454 = vrot.slane %v1310, 5
      %v2455 = vsel %vm2343, %v2453, %v2454
      %s2456 = scalar_lea.vmem %s3, 128
      %v2457 = vld [vmem:[%s2456] sm:$0xf]
      %v2458 = vld [vmem:[%s2456 + $0x4] sm:$0xf]
      %v2459 = vld [vmem:[%s2456 + $0x8] sm:$0xf]
      %v2460 = vld [vmem:[%s2456 + $0xc] sm:$0xf]
      %v2461 = vld [vmem:[%s2456 + $0x10] sm:$0xf]
      %v2462 = vld [vmem:[%s2456 + $0x14] sm:$0xf]
      %v2463 = vld [vmem:[%s2456 + $0x18] sm:$0xf]
      %v2464 = vld [vmem:[%s2456 + $0x1c] sm:$0xf]
      %v2465 = vld [vmem:[%s2456 + $0x20] sm:$0xf]
      %v2466 = vld [vmem:[%s2456 + $0x24] sm:$0xf]
      %v2467 = vld [vmem:[%s2456 + $0x28] sm:$0xf]
      %v2468 = vld [vmem:[%s2456 + $0x2c] sm:$0xf]
      %v2469 = vld [vmem:[%s2456 + $0x30] sm:$0xf]
      %v2470 = vld [vmem:[%s2456 + $0x34] sm:$0xf]
      %v2471 = vld [vmem:[%s2456 + $0x38] sm:$0xf]
      %v2472 = vld [vmem:[%s2456 + $0x3c] sm:$0xf]
      %v2473 = vunpack.c.l.b16 %v2347
      %v2474 = vunpack.c.l.b16 %v2350
      %v2475 = vunpack.c.l.b16 %v2354
      %v2476 = vunpack.c.l.b16 %v2357
      %v2477 = vunpack.c.l.b16 %v2361
      %v2478 = vunpack.c.l.b16 %v2364
      %v2479 = vunpack.c.l.b16 %v2368
      %v2480 = vunpack.c.l.b16 %v2371
      %v2481 = vunpack.c.l.b16 %v2375
      %v2482 = vunpack.c.l.b16 %v2378
      %v2483 = vunpack.c.l.b16 %v2382
      %v2484 = vunpack.c.l.b16 %v2385
      %v2485 = vunpack.c.l.b16 %v2389
      %v2486 = vunpack.c.l.b16 %v2392
      %v2487 = vunpack.c.l.b16 %v2396
      %v2488 = vunpack.c.l.b16 %v2399
      %v2489 = vunpack.c.l.b16 %v2403
      %v2490 = vunpack.c.l.b16 %v2406
      %v2491 = vunpack.c.l.b16 %v2410
      %v2492 = vunpack.c.l.b16 %v2413
      %v2493 = vunpack.c.l.b16 %v2417
      %v2494 = vunpack.c.l.b16 %v2420
      %v2495 = vunpack.c.l.b16 %v2424
      %v2496 = vunpack.c.l.b16 %v2427
      %v2497 = vunpack.c.l.b16 %v2431
      %v2498 = vunpack.c.l.b16 %v2434
      %v2499 = vunpack.c.l.b16 %v2438
      %v2500 = vunpack.c.l.b16 %v2441
      %v2501 = vunpack.c.l.b16 %v2445
      %v2502 = vunpack.c.l.b16 %v2448
      %v2503 = vunpack.c.l.b16 %v2452
      %v2504 = vunpack.c.l.b16 %v2455
      %v2505 = vpack.c.b16 %v2474, %v2473
      %v2506 = vpack.c.b16 %v2476, %v2475
      %v2507 = vpack.c.b16 %v2478, %v2477
      %v2508 = vpack.c.b16 %v2480, %v2479
      %v2509 = vpack.c.b16 %v2482, %v2481
      %v2510 = vpack.c.b16 %v2484, %v2483
      %v2511 = vpack.c.b16 %v2486, %v2485
      %v2512 = vpack.c.b16 %v2488, %v2487
      %v2513 = vpack.c.b16 %v2490, %v2489
      %v2514 = vpack.c.b16 %v2492, %v2491
      %v2515 = vpack.c.b16 %v2494, %v2493
      %v2516 = vpack.c.b16 %v2496, %v2495
      %v2517 = vpack.c.b16 %v2498, %v2497
      %v2518 = vpack.c.b16 %v2500, %v2499
      %v2519 = vpack.c.b16 %v2502, %v2501
      %v2520 = vpack.c.b16 %v2504, %v2503
      %v2553 = vunpack.c.l.b16 %v2457
      %v2554 = vunpack.c.l.b16 %v2458
      %v2555 = vunpack.c.l.b16 %v2459
      %v2556 = vunpack.c.l.b16 %v2460
      %v2557 = vunpack.c.l.b16 %v2461
      %v2558 = vunpack.c.l.b16 %v2462
      %v2559 = vunpack.c.l.b16 %v2463
      %v2560 = vunpack.c.l.b16 %v2464
      %v2561 = vunpack.c.l.b16 %v2465
      %v2562 = vunpack.c.l.b16 %v2466
      %v2563 = vunpack.c.l.b16 %v2467
      %v2564 = vunpack.c.l.b16 %v2468
      %v2565 = vunpack.c.l.b16 %v2469
      %v2566 = vunpack.c.l.b16 %v2470
      %v2567 = vunpack.c.l.b16 %v2471
      %v2568 = vunpack.c.l.b16 %v2472
      %v2569 = vpack.c.b16 %v2554, %v2553
      %v2570 = vpack.c.b16 %v2556, %v2555
      %v2571 = vpack.c.b16 %v2558, %v2557
      %v2572 = vpack.c.b16 %v2560, %v2559
      %v2573 = vpack.c.b16 %v2562, %v2561
      %v2574 = vpack.c.b16 %v2564, %v2563
      %v2575 = vpack.c.b16 %v2566, %v2565
      %v2576 = vpack.c.b16 %v2568, %v2567
      %2585 = vmatprep.subr.bf16.mxu0 0
      %2586 = vmatpush1.bf16.msra.mxu0 %v2569
      %2587 = vmatprep.subr.bf16.mxu0 0
      %2588 = vmatpush1.bf16.msra.mxu0 %v2570
      %2589 = vmatprep.subr.bf16.mxu0 0
      %2590 = vmatpush1.bf16.msra.mxu0 %v2571
      %2591 = vmatprep.subr.bf16.mxu0 0
      %2592 = vmatpush1.bf16.msra.mxu0 %v2572
      %2593 = vmatprep.subr.bf16.mxu0 0
      %2594 = vmatpush1.bf16.msra.mxu0 %v2573
      %2595 = vmatprep.subr.bf16.mxu0 0
      %2596 = vmatpush1.bf16.msra.mxu0 %v2574
      %2597 = vmatprep.subr.bf16.mxu0 0
      %2598 = vmatpush1.bf16.msra.mxu0 %v2575
      %2599 = vmatprep.subr.bf16.mxu0 0
      %2600 = vmatpush1.bf16.msra.mxu0 %v2576
      %2601 = vmatprep.subr.bf16.mxu0 0
      %2602 = vmatpush1.bf16.msra.mxu0 0
      %2603 = vmatprep.subr.bf16.mxu0 0
      %2604 = vmatpush1.bf16.msra.mxu0 0
      %2605 = vmatprep.subr.bf16.mxu0 0
      %2606 = vmatpush1.bf16.msra.mxu0 0
      %2607 = vmatprep.subr.bf16.mxu0 0
      %2608 = vmatpush1.bf16.msra.mxu0 0
      %2609 = vmatprep.subr.bf16.mxu0 0
      %2610 = vmatpush1.bf16.msra.mxu0 0
      %2611 = vmatprep.subr.bf16.mxu0 0
      %2612 = vmatpush1.bf16.msra.mxu0 0
      %2613 = vmatprep.subr.bf16.mxu0 0
      %2614 = vmatpush1.bf16.msra.mxu0 0
      %2615 = vmatprep.subr.bf16.mxu0 0
      %2616 = vmatpush1.bf16.msra.mxu0 0
      %2617 = vmatprep.mubr.bf16.mxu0 0
      %2618 = vmatmul.mubr.bf16.gmra.mrb[0].mxu0 %v2505
      %v2619 = vpop.f32.mrb[0].mxu0
      %v2620 = vadd.f32 0.0, %v2619
      %v2621 = vpop.f32.mrb[0].mxu0
      %v2622 = vpop.f32.mrb[0].mxu0
      %v2623 = vadd.f32 0.0, %v2622
      %v2624 = vpop.f32.mrb[0].mxu0
      %2625 = vmatprep.mubr.bf16.mxu0 0
      %2626 = vmatmul.mubr.bf16.gmra.mrb[0].mxu0 %v2506
      %v2627 = vpop.f32.mrb[0].mxu0
      %v2628 = vadd.f32 0.0, %v2627
      %v2629 = vpop.f32.mrb[0].mxu0
      %v2630 = vpop.f32.mrb[0].mxu0
      %v2631 = vadd.f32 0.0, %v2630
      %v2632 = vpop.f32.mrb[0].mxu0
      %2633 = vmatprep.mubr.bf16.mxu0 0
      %2634 = vmatmul.mubr.bf16.gmra.mrb[0].mxu0 %v2507
      %v2635 = vpop.f32.mrb[0].mxu0
      %v2636 = vadd.f32 0.0, %v2635
      %v2637 = vpop.f32.mrb[0].mxu0
      %v2638 = vpop.f32.mrb[0].mxu0
      %v2639 = vadd.f32 0.0, %v2638
      %v2640 = vpop.f32.mrb[0].mxu0
      %2641 = vmatprep.mubr.bf16.mxu0 0
      %2642 = vmatmul.mubr.bf16.gmra.mrb[0].mxu0 %v2508
      %v2643 = vpop.f32.mrb[0].mxu0
      %v2644 = vadd.f32 0.0, %v2643
      %v2645 = vpop.f32.mrb[0].mxu0
      %v2646 = vpop.f32.mrb[0].mxu0
      %v2647 = vadd.f32 0.0, %v2646
      %v2648 = vpop.f32.mrb[0].mxu0
      %2649 = vmatprep.mubr.bf16.mxu0 0
      %2650 = vmatmul.mubr.bf16.gmra.mrb[0].mxu0 %v2509
      %v2651 = vpop.f32.mrb[0].mxu0
      %v2652 = vadd.f32 0.0, %v2651
      %v2653 = vpop.f32.mrb[0].mxu0
      %v2654 = vpop.f32.mrb[0].mxu0
      %v2655 = vadd.f32 0.0, %v2654
      %v2656 = vpop.f32.mrb[0].mxu0
      %2657 = vmatprep.mubr.bf16.mxu0 0
      %2658 = vmatmul.mubr.bf16.gmra.mrb[0].mxu0 %v2510
      %v2659 = vpop.f32.mrb[0].mxu0
      %v2660 = vadd.f32 0.0, %v2659
      %v2661 = vpop.f32.mrb[0].mxu0
      %v2662 = vpop.f32.mrb[0].mxu0
      %v2663 = vadd.f32 0.0, %v2662
      %v2664 = vpop.f32.mrb[0].mxu0
      %2665 = vmatprep.mubr.bf16.mxu0 0
      %2666 = vmatmul.mubr.bf16.gmra.mrb[0].mxu0 %v2511
      %v2667 = vpop.f32.mrb[0].mxu0
      %v2668 = vadd.f32 0.0, %v2667
      %v2669 = vpop.f32.mrb[0].mxu0
      %v2670 = vpop.f32.mrb[0].mxu0
      %v2671 = vadd.f32 0.0, %v2670
      %v2672 = vpop.f32.mrb[0].mxu0
      %2673 = vmatprep.mubr.bf16.mxu0 0
      %2674 = vmatmul.mubr.bf16.gmra.mrb[0].mxu0 %v2512
      %v2675 = vpop.f32.mrb[0].mxu0
      %v2676 = vadd.f32 0.0, %v2675
      %v2677 = vpop.f32.mrb[0].mxu0
      %v2678 = vpop.f32.mrb[0].mxu0
      %v2679 = vadd.f32 0.0, %v2678
      %v2680 = vpop.f32.mrb[0].mxu0
      %2681 = vmatprep.mubr.bf16.mxu0 0
      %2682 = vmatmul.mubr.bf16.gmra.mrb[0].mxu0 %v2513
      %v2683 = vpop.f32.mrb[0].mxu0
      %v2684 = vadd.f32 0.0, %v2683
      %v2685 = vpop.f32.mrb[0].mxu0
      %v2686 = vpop.f32.mrb[0].mxu0
      %v2687 = vadd.f32 0.0, %v2686
      %v2688 = vpop.f32.mrb[0].mxu0
      %2689 = vmatprep.mubr.bf16.mxu0 0
      %2690 = vmatmul.mubr.bf16.gmra.mrb[0].mxu0 %v2514
      %v2691 = vpop.f32.mrb[0].mxu0
      %v2692 = vadd.f32 0.0, %v2691
      %v2693 = vpop.f32.mrb[0].mxu0
      %v2694 = vpop.f32.mrb[0].mxu0
      %v2695 = vadd.f32 0.0, %v2694
      %v2696 = vpop.f32.mrb[0].mxu0
      %2697 = vmatprep.mubr.bf16.mxu0 0
      %2698 = vmatmul.mubr.bf16.gmra.mrb[0].mxu0 %v2515
      %v2699 = vpop.f32.mrb[0].mxu0
      %v2700 = vadd.f32 0.0, %v2699
      %v2701 = vpop.f32.mrb[0].mxu0
      %v2702 = vpop.f32.mrb[0].mxu0
      %v2703 = vadd.f32 0.0, %v2702
      %v2704 = vpop.f32.mrb[0].mxu0
      %2705 = vmatprep.mubr.bf16.mxu0 0
      %2706 = vmatmul.mubr.bf16.gmra.mrb[0].mxu0 %v2516
      %v2707 = vpop.f32.mrb[0].mxu0
      %v2708 = vadd.f32 0.0, %v2707
      %v2709 = vpop.f32.mrb[0].mxu0
      %v2710 = vpop.f32.mrb[0].mxu0
      %v2711 = vadd.f32 0.0, %v2710
      %v2712 = vpop.f32.mrb[0].mxu0
      %2713 = vmatprep.mubr.bf16.mxu0 0
      %2714 = vmatmul.mubr.bf16.gmra.mrb[0].mxu0 %v2517
      %v2715 = vpop.f32.mrb[0].mxu0
      %v2716 = vadd.f32 0.0, %v2715
      %v2717 = vpop.f32.mrb[0].mxu0
      %v2718 = vpop.f32.mrb[0].mxu0
      %v2719 = vadd.f32 0.0, %v2718
      %v2720 = vpop.f32.mrb[0].mxu0
      %2721 = vmatprep.mubr.bf16.mxu0 0
      %2722 = vmatmul.mubr.bf16.gmra.mrb[0].mxu0 %v2518
      %v2723 = vpop.f32.mrb[0].mxu0
      %v2724 = vadd.f32 0.0, %v2723
      %v2725 = vpop.f32.mrb[0].mxu0
      %v2726 = vpop.f32.mrb[0].mxu0
      %v2727 = vadd.f32 0.0, %v2726
      %v2728 = vpop.f32.mrb[0].mxu0
      %2729 = vmatprep.mubr.bf16.mxu0 0
      %2730 = vmatmul.mubr.bf16.gmra.mrb[0].mxu0 %v2519
      %v2731 = vpop.f32.mrb[0].mxu0
      %v2732 = vadd.f32 0.0, %v2731
      %v2733 = vpop.f32.mrb[0].mxu0
      %v2734 = vpop.f32.mrb[0].mxu0
      %v2735 = vadd.f32 0.0, %v2734
      %v2736 = vpop.f32.mrb[0].mxu0
      %2737 = vmatprep.mubr.bf16.mxu0 0
      %2738 = vmatmul.mubr.bf16.gmra.mrb[0].mxu0 %v2520
      %v2739 = vpop.f32.mrb[0].mxu0
      %v2740 = vadd.f32 0.0, %v2739
      %v2741 = vpop.f32.mrb[0].mxu0
      %v2742 = vpop.f32.mrb[0].mxu0
      %v2743 = vadd.f32 0.0, %v2742
      %v2744 = vpop.f32.mrb[0].mxu0
      %2745 = vdwg.mxu0
      %v2746 = vadd.f32 %v2167, %v2620
      %v2747 = vadd.f32 %v2170, %v2623
      %v2748 = vadd.f32 %v2175, %v2628
      %v2749 = vadd.f32 %v2178, %v2631
      %v2750 = vadd.f32 %v2183, %v2636
      %v2751 = vadd.f32 %v2186, %v2639
      %v2752 = vadd.f32 %v2191, %v2644
      %v2753 = vadd.f32 %v2194, %v2647
      %v2754 = vadd.f32 %v2199, %v2652
      %v2755 = vadd.f32 %v2202, %v2655
      %v2756 = vadd.f32 %v2207, %v2660
      %v2757 = vadd.f32 %v2210, %v2663
      %v2758 = vadd.f32 %v2215, %v2668
      %v2759 = vadd.f32 %v2218, %v2671
      %v2760 = vadd.f32 %v2223, %v2676
      %v2761 = vadd.f32 %v2226, %v2679
      %v2762 = vadd.f32 %v2231, %v2684
      %v2763 = vadd.f32 %v2234, %v2687
      %v2764 = vadd.f32 %v2239, %v2692
      %v2765 = vadd.f32 %v2242, %v2695
      %v2766 = vadd.f32 %v2247, %v2700
      %v2767 = vadd.f32 %v2250, %v2703
      %v2768 = vadd.f32 %v2255, %v2708
      %v2769 = vadd.f32 %v2258, %v2711
      %v2770 = vadd.f32 %v2263, %v2716
      %v2771 = vadd.f32 %v2266, %v2719
      %v2772 = vadd.f32 %v2271, %v2724
      %v2773 = vadd.f32 %v2274, %v2727
      %v2774 = vadd.f32 %v2279, %v2732
      %v2775 = vadd.f32 %v2282, %v2735
      %v2776 = vadd.f32 %v2287, %v2740
      %v2777 = vadd.f32 %v2290, %v2743
      %v2778 = vld [vmem:[%s1129] sm:$0xf]
      %v2779 = vld [vmem:[%s1129 + $0x4] sm:$0xf]
      %v2780 = vld [vmem:[%s1129 + $0xc] sm:$0xf]
      %v2781 = vld [vmem:[%s1129 + $0x10] sm:$0xf]
      %v2782 = vld [vmem:[%s1129 + $0x18] sm:$0xf]
      %v2783 = vld [vmem:[%s1129 + $0x1c] sm:$0xf]
      %v2784 = vld [vmem:[%s1129 + $0x24] sm:$0xf]
      %v2785 = vld [vmem:[%s1129 + $0x28] sm:$0xf]
      %v2786 = vld [vmem:[%s1129 + $0x30] sm:$0xf]
      %v2787 = vld [vmem:[%s1129 + $0x34] sm:$0xf]
      %v2788 = vld [vmem:[%s1129 + $0x3c] sm:$0xf]
      %v2789 = vld [vmem:[%s1129 + $0x40] sm:$0xf]
      %v2790 = vld [vmem:[%s1129 + $0x48] sm:$0xf]
      %v2791 = vld [vmem:[%s1129 + $0x4c] sm:$0xf]
      %v2792 = vld [vmem:[%s1129 + $0x54] sm:$0xf]
      %v2793 = vld [vmem:[%s1129 + $0x58] sm:$0xf]
      %v2794 = vld [vmem:[%s1129 + $0x60] sm:$0xf]
      %v2795 = vld [vmem:[%s1129 + $0x64] sm:$0xf]
      %v2796 = vld [vmem:[%s1129 + $0x6c] sm:$0xf]
      %v2797 = vld [vmem:[%s1129 + $0x70] sm:$0xf]
      %v2798 = vld [vmem:[%s1129 + $0x78] sm:$0xf]
      %v2799 = vld [vmem:[%s1129 + $0x7c] sm:$0xf]
      %v2800 = vld [vmem:[%s1129 + $0x84] sm:$0xf]
      %v2801 = vld [vmem:[%s1129 + $0x88] sm:$0xf]
      %v2802 = vld [vmem:[%s1129 + $0x90] sm:$0xf]
      %v2803 = vld [vmem:[%s1129 + $0x94] sm:$0xf]
      %v2804 = vld [vmem:[%s1129 + $0x9c] sm:$0xf]
      %v2805 = vld [vmem:[%s1129 + $0xa0] sm:$0xf]
      %v2806 = vld [vmem:[%s1129 + $0xa8] sm:$0xf]
      %v2807 = vld [vmem:[%s1129 + $0xac] sm:$0xf]
      %v2808 = vld [vmem:[%s1129 + $0xb4] sm:$0xf]
      %v2809 = vld [vmem:[%s1129 + $0xb8] sm:$0xf]
      %s2810 = scalar_lea.vmem %s3, 192
      %v2811 = vld [vmem:[%s2810] sm:$0xf]
      %v2812 = vld [vmem:[%s2810 + $0x4] sm:$0xf]
      %v2813 = vld [vmem:[%s2810 + $0x8] sm:$0xf]
      %v2814 = vld [vmem:[%s2810 + $0xc] sm:$0xf]
      %v2815 = vld [vmem:[%s2810 + $0x10] sm:$0xf]
      %v2816 = vld [vmem:[%s2810 + $0x14] sm:$0xf]
      %v2817 = vld [vmem:[%s2810 + $0x18] sm:$0xf]
      %v2818 = vld [vmem:[%s2810 + $0x1c] sm:$0xf]
      %v2819 = vld [vmem:[%s2810 + $0x20] sm:$0xf]
      %v2820 = vld [vmem:[%s2810 + $0x24] sm:$0xf]
      %v2821 = vld [vmem:[%s2810 + $0x28] sm:$0xf]
      %v2822 = vld [vmem:[%s2810 + $0x2c] sm:$0xf]
      %v2823 = vld [vmem:[%s2810 + $0x30] sm:$0xf]
      %v2824 = vld [vmem:[%s2810 + $0x34] sm:$0xf]
      %v2825 = vld [vmem:[%s2810 + $0x38] sm:$0xf]
      %v2826 = vld [vmem:[%s2810 + $0x3c] sm:$0xf]
      %v2859 = vunpack.c.l.b16 %v2778
      %v2860 = vunpack.c.l.b16 %v2779
      %v2861 = vunpack.c.l.b16 %v2780
      %v2862 = vunpack.c.l.b16 %v2781
      %v2863 = vunpack.c.l.b16 %v2782
      %v2864 = vunpack.c.l.b16 %v2783
      %v2865 = vunpack.c.l.b16 %v2784
      %v2866 = vunpack.c.l.b16 %v2785
      %v2867 = vunpack.c.l.b16 %v2786
      %v2868 = vunpack.c.l.b16 %v2787
      %v2869 = vunpack.c.l.b16 %v2788
      %v2870 = vunpack.c.l.b16 %v2789
      %v2871 = vunpack.c.l.b16 %v2790
      %v2872 = vunpack.c.l.b16 %v2791
      %v2873 = vunpack.c.l.b16 %v2792
      %v2874 = vunpack.c.l.b16 %v2793
      %v2875 = vunpack.c.l.b16 %v2794
      %v2876 = vunpack.c.l.b16 %v2795
      %v2877 = vunpack.c.l.b16 %v2796
      %v2878 = vunpack.c.l.b16 %v2797
      %v2879 = vunpack.c.l.b16 %v2798
      %v2880 = vunpack.c.l.b16 %v2799
      %v2881 = vunpack.c.l.b16 %v2800
      %v2882 = vunpack.c.l.b16 %v2801
      %v2883 = vunpack.c.l.b16 %v2802
      %v2884 = vunpack.c.l.b16 %v2803
      %v2885 = vunpack.c.l.b16 %v2804
      %v2886 = vunpack.c.l.b16 %v2805
      %v2887 = vunpack.c.l.b16 %v2806
      %v2888 = vunpack.c.l.b16 %v2807
      %v2889 = vunpack.c.l.b16 %v2808
      %v2890 = vunpack.c.l.b16 %v2809
      %v2891 = vpack.c.b16 %v2860, %v2859
      %v2892 = vpack.c.b16 %v2862, %v2861
      %v2893 = vpack.c.b16 %v2864, %v2863
      %v2894 = vpack.c.b16 %v2866, %v2865
      %v2895 = vpack.c.b16 %v2868, %v2867
      %v2896 = vpack.c.b16 %v2870, %v2869
      %v2897 = vpack.c.b16 %v2872, %v2871
      %v2898 = vpack.c.b16 %v2874, %v2873
      %v2899 = vpack.c.b16 %v2876, %v2875
      %v2900 = vpack.c.b16 %v2878, %v2877
      %v2901 = vpack.c.b16 %v2880, %v2879
      %v2902 = vpack.c.b16 %v2882, %v2881
      %v2903 = vpack.c.b16 %v2884, %v2883
      %v2904 = vpack.c.b16 %v2886, %v2885
      %v2905 = vpack.c.b16 %v2888, %v2887
      %v2906 = vpack.c.b16 %v2890, %v2889
      %v2939 = vunpack.c.l.b16 %v2811
      %v2940 = vunpack.c.l.b16 %v2812
      %v2941 = vunpack.c.l.b16 %v2813
      %v2942 = vunpack.c.l.b16 %v2814
      %v2943 = vunpack.c.l.b16 %v2815
      %v2944 = vunpack.c.l.b16 %v2816
      %v2945 = vunpack.c.l.b16 %v2817
      %v2946 = vunpack.c.l.b16 %v2818
      %v2947 = vunpack.c.l.b16 %v2819
      %v2948 = vunpack.c.l.b16 %v2820
      %v2949 = vunpack.c.l.b16 %v2821
      %v2950 = vunpack.c.l.b16 %v2822
      %v2951 = vunpack.c.l.b16 %v2823
      %v2952 = vunpack.c.l.b16 %v2824
      %v2953 = vunpack.c.l.b16 %v2825
      %v2954 = vunpack.c.l.b16 %v2826
      %v2955 = vpack.c.b16 %v2940, %v2939
      %v2956 = vpack.c.b16 %v2942, %v2941
      %v2957 = vpack.c.b16 %v2944, %v2943
      %v2958 = vpack.c.b16 %v2946, %v2945
      %v2959 = vpack.c.b16 %v2948, %v2947
      %v2960 = vpack.c.b16 %v2950, %v2949
      %v2961 = vpack.c.b16 %v2952, %v2951
      %v2962 = vpack.c.b16 %v2954, %v2953
      %2971 = vmatprep.subr.bf16.mxu0 0
      %2972 = vmatpush1.bf16.msra.mxu0 %v2955
      %2973 = vmatprep.subr.bf16.mxu0 0
      %2974 = vmatpush1.bf16.msra.mxu0 %v2956
      %2975 = vmatprep.subr.bf16.mxu0 0
      %2976 = vmatpush1.bf16.msra.mxu0 %v2957
      %2977 = vmatprep.subr.bf16.mxu0 0
      %2978 = vmatpush1.bf16.msra.mxu0 %v2958
      %2979 = vmatprep.subr.bf16.mxu0 0
      %2980 = vmatpush1.bf16.msra.mxu0 %v2959
      %2981 = vmatprep.subr.bf16.mxu0 0
      %2982 = vmatpush1.bf16.msra.mxu0 %v2960
      %2983 = vmatprep.subr.bf16.mxu0 0
      %2984 = vmatpush1.bf16.msra.mxu0 %v2961
      %2985 = vmatprep.subr.bf16.mxu0 0
      %2986 = vmatpush1.bf16.msra.mxu0 %v2962
      %2987 = vmatprep.subr.bf16.mxu0 0
      %2988 = vmatpush1.bf16.msra.mxu0 0
      %2989 = vmatprep.subr.bf16.mxu0 0
      %2990 = vmatpush1.bf16.msra.mxu0 0
      %2991 = vmatprep.subr.bf16.mxu0 0
      %2992 = vmatpush1.bf16.msra.mxu0 0
      %2993 = vmatprep.subr.bf16.mxu0 0
      %2994 = vmatpush1.bf16.msra.mxu0 0
      %2995 = vmatprep.subr.bf16.mxu0 0
      %2996 = vmatpush1.bf16.msra.mxu0 0
      %2997 = vmatprep.subr.bf16.mxu0 0
      %2998 = vmatpush1.bf16.msra.mxu0 0
      %2999 = vmatprep.subr.bf16.mxu0 0
      %3000 = vmatpush1.bf16.msra.mxu0 0
      %3001 = vmatprep.subr.bf16.mxu0 0
      %3002 = vmatpush1.bf16.msra.mxu0 0
      %3003 = vmatprep.mubr.bf16.mxu0 0
      %3004 = vmatmul.mubr.bf16.gmra.mrb[0].mxu0 %v2891
      %v3005 = vpop.f32.mrb[0].mxu0
      %v3006 = vadd.f32 0.0, %v3005
      %v3007 = vpop.f32.mrb[0].mxu0
      %v3008 = vpop.f32.mrb[0].mxu0
      %v3009 = vadd.f32 0.0, %v3008
      %v3010 = vpop.f32.mrb[0].mxu0
      %3011 = vmatprep.mubr.bf16.mxu0 0
      %3012 = vmatmul.mubr.bf16.gmra.mrb[0].mxu0 %v2892
      %v3013 = vpop.f32.mrb[0].mxu0
      %v3014 = vadd.f32 0.0, %v3013
      %v3015 = vpop.f32.mrb[0].mxu0
      %v3016 = vpop.f32.mrb[0].mxu0
      %v3017 = vadd.f32 0.0, %v3016
      %v3018 = vpop.f32.mrb[0].mxu0
      %3019 = vmatprep.mubr.bf16.mxu0 0
      %3020 = vmatmul.mubr.bf16.gmra.mrb[0].mxu0 %v2893
      %v3021 = vpop.f32.mrb[0].mxu0
      %v3022 = vadd.f32 0.0, %v3021
      %v3023 = vpop.f32.mrb[0].mxu0
      %v3024 = vpop.f32.mrb[0].mxu0
      %v3025 = vadd.f32 0.0, %v3024
      %v3026 = vpop.f32.mrb[0].mxu0
      %3027 = vmatprep.mubr.bf16.mxu0 0
      %3028 = vmatmul.mubr.bf16.gmra.mrb[0].mxu0 %v2894
      %v3029 = vpop.f32.mrb[0].mxu0
      %v3030 = vadd.f32 0.0, %v3029
      %v3031 = vpop.f32.mrb[0].mxu0
      %v3032 = vpop.f32.mrb[0].mxu0
      %v3033 = vadd.f32 0.0, %v3032
      %v3034 = vpop.f32.mrb[0].mxu0
      %3035 = vmatprep.mubr.bf16.mxu0 0
      %3036 = vmatmul.mubr.bf16.gmra.mrb[0].mxu0 %v2895
      %v3037 = vpop.f32.mrb[0].mxu0
      %v3038 = vadd.f32 0.0, %v3037
      %v3039 = vpop.f32.mrb[0].mxu0
      %v3040 = vpop.f32.mrb[0].mxu0
      %v3041 = vadd.f32 0.0, %v3040
      %v3042 = vpop.f32.mrb[0].mxu0
      %3043 = vmatprep.mubr.bf16.mxu0 0
      %3044 = vmatmul.mubr.bf16.gmra.mrb[0].mxu0 %v2896
      %v3045 = vpop.f32.mrb[0].mxu0
      %v3046 = vadd.f32 0.0, %v3045
      %v3047 = vpop.f32.mrb[0].mxu0
      %v3048 = vpop.f32.mrb[0].mxu0
      %v3049 = vadd.f32 0.0, %v3048
      %v3050 = vpop.f32.mrb[0].mxu0
      %3051 = vmatprep.mubr.bf16.mxu0 0
      %3052 = vmatmul.mubr.bf16.gmra.mrb[0].mxu0 %v2897
      %v3053 = vpop.f32.mrb[0].mxu0
      %v3054 = vadd.f32 0.0, %v3053
      %v3055 = vpop.f32.mrb[0].mxu0
      %v3056 = vpop.f32.mrb[0].mxu0
      %v3057 = vadd.f32 0.0, %v3056
      %v3058 = vpop.f32.mrb[0].mxu0
      %3059 = vmatprep.mubr.bf16.mxu0 0
      %3060 = vmatmul.mubr.bf16.gmra.mrb[0].mxu0 %v2898
      %v3061 = vpop.f32.mrb[0].mxu0
      %v3062 = vadd.f32 0.0, %v3061
      %v3063 = vpop.f32.mrb[0].mxu0
      %v3064 = vpop.f32.mrb[0].mxu0
      %v3065 = vadd.f32 0.0, %v3064
      %v3066 = vpop.f32.mrb[0].mxu0
      %3067 = vmatprep.mubr.bf16.mxu0 0
      %3068 = vmatmul.mubr.bf16.gmra.mrb[0].mxu0 %v2899
      %v3069 = vpop.f32.mrb[0].mxu0
      %v3070 = vadd.f32 0.0, %v3069
      %v3071 = vpop.f32.mrb[0].mxu0
      %v3072 = vpop.f32.mrb[0].mxu0
      %v3073 = vadd.f32 0.0, %v3072
      %v3074 = vpop.f32.mrb[0].mxu0
      %3075 = vmatprep.mubr.bf16.mxu0 0
      %3076 = vmatmul.mubr.bf16.gmra.mrb[0].mxu0 %v2900
      %v3077 = vpop.f32.mrb[0].mxu0
      %v3078 = vadd.f32 0.0, %v3077
      %v3079 = vpop.f32.mrb[0].mxu0
      %v3080 = vpop.f32.mrb[0].mxu0
      %v3081 = vadd.f32 0.0, %v3080
      %v3082 = vpop.f32.mrb[0].mxu0
      %3083 = vmatprep.mubr.bf16.mxu0 0
      %3084 = vmatmul.mubr.bf16.gmra.mrb[0].mxu0 %v2901
      %v3085 = vpop.f32.mrb[0].mxu0
      %v3086 = vadd.f32 0.0, %v3085
      %v3087 = vpop.f32.mrb[0].mxu0
      %v3088 = vpop.f32.mrb[0].mxu0
      %v3089 = vadd.f32 0.0, %v3088
      %v3090 = vpop.f32.mrb[0].mxu0
      %3091 = vmatprep.mubr.bf16.mxu0 0
      %3092 = vmatmul.mubr.bf16.gmra.mrb[0].mxu0 %v2902
      %v3093 = vpop.f32.mrb[0].mxu0
      %v3094 = vadd.f32 0.0, %v3093
      %v3095 = vpop.f32.mrb[0].mxu0
      %v3096 = vpop.f32.mrb[0].mxu0
      %v3097 = vadd.f32 0.0, %v3096
      %v3098 = vpop.f32.mrb[0].mxu0
      %3099 = vmatprep.mubr.bf16.mxu0 0
      %3100 = vmatmul.mubr.bf16.gmra.mrb[0].mxu0 %v2903
      %v3101 = vpop.f32.mrb[0].mxu0
      %v3102 = vadd.f32 0.0, %v3101
      %v3103 = vpop.f32.mrb[0].mxu0
      %v3104 = vpop.f32.mrb[0].mxu0
      %v3105 = vadd.f32 0.0, %v3104
      %v3106 = vpop.f32.mrb[0].mxu0
      %3107 = vmatprep.mubr.bf16.mxu0 0
      %3108 = vmatmul.mubr.bf16.gmra.mrb[0].mxu0 %v2904
      %v3109 = vpop.f32.mrb[0].mxu0
      %v3110 = vadd.f32 0.0, %v3109
      %v3111 = vpop.f32.mrb[0].mxu0
      %v3112 = vpop.f32.mrb[0].mxu0
      %v3113 = vadd.f32 0.0, %v3112
      %v3114 = vpop.f32.mrb[0].mxu0
      %3115 = vmatprep.mubr.bf16.mxu0 0
      %3116 = vmatmul.mubr.bf16.gmra.mrb[0].mxu0 %v2905
      %v3117 = vpop.f32.mrb[0].mxu0
      %v3118 = vadd.f32 0.0, %v3117
      %v3119 = vpop.f32.mrb[0].mxu0
      %v3120 = vpop.f32.mrb[0].mxu0
      %v3121 = vadd.f32 0.0, %v3120
      %v3122 = vpop.f32.mrb[0].mxu0
      %3123 = vmatprep.mubr.bf16.mxu0 0
      %3124 = vmatmul.mubr.bf16.gmra.mrb[0].mxu0 %v2906
      %v3125 = vpop.f32.mrb[0].mxu0
      %v3126 = vadd.f32 0.0, %v3125
      %v3127 = vpop.f32.mrb[0].mxu0
      %v3128 = vpop.f32.mrb[0].mxu0
      %v3129 = vadd.f32 0.0, %v3128
      %v3130 = vpop.f32.mrb[0].mxu0
      %3131 = vdwg.mxu0
      %v3132 = vadd.f32 %v2746, %v3006
      %v3133 = vadd.f32 %v2747, %v3009
      %v3134 = vadd.f32 %v2748, %v3014
      %v3135 = vadd.f32 %v2749, %v3017
      %v3136 = vadd.f32 %v2750, %v3022
      %v3137 = vadd.f32 %v2751, %v3025
      %v3138 = vadd.f32 %v2752, %v3030
      %v3139 = vadd.f32 %v2753, %v3033
      %v3140 = vadd.f32 %v2754, %v3038
      %v3141 = vadd.f32 %v2755, %v3041
      %v3142 = vadd.f32 %v2756, %v3046
      %v3143 = vadd.f32 %v2757, %v3049
      %v3144 = vadd.f32 %v2758, %v3054
      %v3145 = vadd.f32 %v2759, %v3057
      %v3146 = vadd.f32 %v2760, %v3062
      %v3147 = vadd.f32 %v2761, %v3065
      %v3148 = vadd.f32 %v2762, %v3070
      %v3149 = vadd.f32 %v2763, %v3073
      %v3150 = vadd.f32 %v2764, %v3078
      %v3151 = vadd.f32 %v2765, %v3081
      %v3152 = vadd.f32 %v2766, %v3086
      %v3153 = vadd.f32 %v2767, %v3089
      %v3154 = vadd.f32 %v2768, %v3094
      %v3155 = vadd.f32 %v2769, %v3097
      %v3156 = vadd.f32 %v2770, %v3102
      %v3157 = vadd.f32 %v2771, %v3105
      %v3158 = vadd.f32 %v2772, %v3110
      %v3159 = vadd.f32 %v2773, %v3113
      %v3160 = vadd.f32 %v2774, %v3118
      %v3161 = vadd.f32 %v2775, %v3121
      %v3162 = vadd.f32 %v2776, %v3126
      %v3163 = vadd.f32 %v2777, %v3129
      %v3164 = vld [vmem:[%s1129] sm:$0xf]
      %v3165 = vld [vmem:[%s1129 + $0x4] sm:$0xf]
      %v3166 = vld [vmem:[%s1129 + $0x8] sm:$0x1]
      %v3167 = vld [vmem:[%s1129 + $0xc] sm:$0xf]
      %v3168 = vld [vmem:[%s1129 + $0x10] sm:$0xf]
      %v3169 = vld [vmem:[%s1129 + $0x14] sm:$0x1]
      %v3170 = vld [vmem:[%s1129 + $0x18] sm:$0xf]
      %v3171 = vld [vmem:[%s1129 + $0x1c] sm:$0xf]
      %v3172 = vld [vmem:[%s1129 + $0x20] sm:$0x1]
      %v3173 = vld [vmem:[%s1129 + $0x24] sm:$0xf]
      %v3174 = vld [vmem:[%s1129 + $0x28] sm:$0xf]
      %v3175 = vld [vmem:[%s1129 + $0x2c] sm:$0x1]
      %v3176 = vld [vmem:[%s1129 + $0x30] sm:$0xf]
      %v3177 = vld [vmem:[%s1129 + $0x34] sm:$0xf]
      %v3178 = vld [vmem:[%s1129 + $0x38] sm:$0x1]
      %v3179 = vld [vmem:[%s1129 + $0x3c] sm:$0xf]
      %v3180 = vld [vmem:[%s1129 + $0x40] sm:$0xf]
      %v3181 = vld [vmem:[%s1129 + $0x44] sm:$0x1]
      %v3182 = vld [vmem:[%s1129 + $0x48] sm:$0xf]
      %v3183 = vld [vmem:[%s1129 + $0x4c] sm:$0xf]
      %v3184 = vld [vmem:[%s1129 + $0x50] sm:$0x1]
      %v3185 = vld [vmem:[%s1129 + $0x54] sm:$0xf]
      %v3186 = vld [vmem:[%s1129 + $0x58] sm:$0xf]
      %v3187 = vld [vmem:[%s1129 + $0x5c] sm:$0x1]
      %v3188 = vld [vmem:[%s1129 + $0x60] sm:$0xf]
      %v3189 = vld [vmem:[%s1129 + $0x64] sm:$0xf]
      %v3190 = vld [vmem:[%s1129 + $0x68] sm:$0x1]
      %v3191 = vld [vmem:[%s1129 + $0x6c] sm:$0xf]
      %v3192 = vld [vmem:[%s1129 + $0x70] sm:$0xf]
      %v3193 = vld [vmem:[%s1129 + $0x74] sm:$0x1]
      %v3194 = vld [vmem:[%s1129 + $0x78] sm:$0xf]
      %v3195 = vld [vmem:[%s1129 + $0x7c] sm:$0xf]
      %v3196 = vld [vmem:[%s1129 + $0x80] sm:$0x1]
      %v3197 = vld [vmem:[%s1129 + $0x84] sm:$0xf]
      %v3198 = vld [vmem:[%s1129 + $0x88] sm:$0xf]
      %v3199 = vld [vmem:[%s1129 + $0x8c] sm:$0x1]
      %v3200 = vld [vmem:[%s1129 + $0x90] sm:$0xf]
      %v3201 = vld [vmem:[%s1129 + $0x94] sm:$0xf]
      %v3202 = vld [vmem:[%s1129 + $0x98] sm:$0x1]
      %v3203 = vld [vmem:[%s1129 + $0x9c] sm:$0xf]
      %v3204 = vld [vmem:[%s1129 + $0xa0] sm:$0xf]
      %v3205 = vld [vmem:[%s1129 + $0xa4] sm:$0x1]
      %v3206 = vld [vmem:[%s1129 + $0xa8] sm:$0xf]
      %v3207 = vld [vmem:[%s1129 + $0xac] sm:$0xf]
      %v3208 = vld [vmem:[%s1129 + $0xb0] sm:$0x1]
      %v3209 = vld [vmem:[%s1129 + $0xb4] sm:$0xf]
      %v3210 = vld [vmem:[%s1129 + $0xb8] sm:$0xf]
      %v3211 = vld [vmem:[%s1129 + $0xbc] sm:$0x1]
      %v3213 = vshrl.u32 %v3164, 16
      %v3215 = vrot.slane %v3213, 4
      %v3216 = vshll.u32 %v3164, 16
      %v3218 = vrot.slane %v3216, 5
      %v3219 = vor.u32 %v3215, %v3218
      %v3220 = vrot.slane %v3219, 4
      %v3222 = vshll.u32 %v3165, 16
      %v3224 = vrot.slane %v3222, 5
      %v3225 = vsel %vm1313, %v3220, %v3224
      %v3226 = vshrl.u32 %v3165, 16
      %v3228 = vrot.slane %v3226, 4
      %v3229 = vor.u32 %v3228, %v3224
      %v3230 = vrot.slane %v3229, 4
      %v3232 = vshll.u32 %v3166, 16
      %v3234 = vrot.slane %v3232, 5
      %v3235 = vsel %vm1313, %v3230, %v3234
      %v3237 = vshrl.u32 %v3167, 16
      %v3239 = vrot.slane %v3237, 4
      %v3240 = vshll.u32 %v3167, 16
      %v3242 = vrot.slane %v3240, 5
      %v3243 = vor.u32 %v3239, %v3242
      %v3244 = vrot.slane %v3243, 4
      %v3246 = vshll.u32 %v3168, 16
      %v3248 = vrot.slane %v3246, 5
      %v3249 = vsel %vm1313, %v3244, %v3248
      %v3250 = vshrl.u32 %v3168, 16
      %v3252 = vrot.slane %v3250, 4
      %v3253 = vor.u32 %v3252, %v3248
      %v3254 = vrot.slane %v3253, 4
      %v3256 = vshll.u32 %v3169, 16
      %v3258 = vrot.slane %v3256, 5
      %v3259 = vsel %vm1313, %v3254, %v3258
      %v3261 = vshrl.u32 %v3170, 16
      %v3263 = vrot.slane %v3261, 4
      %v3264 = vshll.u32 %v3170, 16
      %v3266 = vrot.slane %v3264, 5
      %v3267 = vor.u32 %v3263, %v3266
      %v3268 = vrot.slane %v3267, 4
      %v3270 = vshll.u32 %v3171, 16
      %v3272 = vrot.slane %v3270, 5
      %v3273 = vsel %vm1313, %v3268, %v3272
      %v3274 = vshrl.u32 %v3171, 16
      %v3276 = vrot.slane %v3274, 4
      %v3277 = vor.u32 %v3276, %v3272
      %v3278 = vrot.slane %v3277, 4
      %v3280 = vshll.u32 %v3172, 16
      %v3282 = vrot.slane %v3280, 5
      %v3283 = vsel %vm1313, %v3278, %v3282
      %v3285 = vshrl.u32 %v3173, 16
      %v3287 = vrot.slane %v3285, 4
      %v3288 = vshll.u32 %v3173, 16
      %v3290 = vrot.slane %v3288, 5
      %v3291 = vor.u32 %v3287, %v3290
      %v3292 = vrot.slane %v3291, 4
      %v3294 = vshll.u32 %v3174, 16
      %v3296 = vrot.slane %v3294, 5
      %v3297 = vsel %vm1313, %v3292, %v3296
      %v3298 = vshrl.u32 %v3174, 16
      %v3300 = vrot.slane %v3298, 4
      %v3301 = vor.u32 %v3300, %v3296
      %v3302 = vrot.slane %v3301, 4
      %v3304 = vshll.u32 %v3175, 16
      %v3306 = vrot.slane %v3304, 5
      %v3307 = vsel %vm1313, %v3302, %v3306
      %v3309 = vshrl.u32 %v3176, 16
      %v3311 = vrot.slane %v3309, 4
      %v3312 = vshll.u32 %v3176, 16
      %v3314 = vrot.slane %v3312, 5
      %v3315 = vor.u32 %v3311, %v3314
      %v3316 = vrot.slane %v3315, 4
      %v3318 = vshll.u32 %v3177, 16
      %v3320 = vrot.slane %v3318, 5
      %v3321 = vsel %vm1313, %v3316, %v3320
      %v3322 = vshrl.u32 %v3177, 16
      %v3324 = vrot.slane %v3322, 4
      %v3325 = vor.u32 %v3324, %v3320
      %v3326 = vrot.slane %v3325, 4
      %v3328 = vshll.u32 %v3178, 16
      %v3330 = vrot.slane %v3328, 5
      %v3331 = vsel %vm1313, %v3326, %v3330
      %v3333 = vshrl.u32 %v3179, 16
      %v3335 = vrot.slane %v3333, 4
      %v3336 = vshll.u32 %v3179, 16
      %v3338 = vrot.slane %v3336, 5
      %v3339 = vor.u32 %v3335, %v3338
      %v3340 = vrot.slane %v3339, 4
      %v3342 = vshll.u32 %v3180, 16
      %v3344 = vrot.slane %v3342, 5
      %v3345 = vsel %vm1313, %v3340, %v3344
      %v3346 = vshrl.u32 %v3180, 16
      %v3348 = vrot.slane %v3346, 4
      %v3349 = vor.u32 %v3348, %v3344
      %v3350 = vrot.slane %v3349, 4
      %v3352 = vshll.u32 %v3181, 16
      %v3354 = vrot.slane %v3352, 5
      %v3355 = vsel %vm1313, %v3350, %v3354
      %v3357 = vshrl.u32 %v3182, 16
      %v3359 = vrot.slane %v3357, 4
      %v3360 = vshll.u32 %v3182, 16
      %v3362 = vrot.slane %v3360, 5
      %v3363 = vor.u32 %v3359, %v3362
      %v3364 = vrot.slane %v3363, 4
      %v3366 = vshll.u32 %v3183, 16
      %v3368 = vrot.slane %v3366, 5
      %v3369 = vsel %vm1313, %v3364, %v3368
      %v3370 = vshrl.u32 %v3183, 16
      %v3372 = vrot.slane %v3370, 4
      %v3373 = vor.u32 %v3372, %v3368
      %v3374 = vrot.slane %v3373, 4
      %v3376 = vshll.u32 %v3184, 16
      %v3378 = vrot.slane %v3376, 5
      %v3379 = vsel %vm1313, %v3374, %v3378
      %v3381 = vshrl.u32 %v3185, 16
      %v3383 = vrot.slane %v3381, 4
      %v3384 = vshll.u32 %v3185, 16
      %v3386 = vrot.slane %v3384, 5
      %v3387 = vor.u32 %v3383, %v3386
      %v3388 = vrot.slane %v3387, 4
      %v3390 = vshll.u32 %v3186, 16
      %v3392 = vrot.slane %v3390, 5
      %v3393 = vsel %vm1313, %v3388, %v3392
      %v3394 = vshrl.u32 %v3186, 16
      %v3396 = vrot.slane %v3394, 4
      %v3397 = vor.u32 %v3396, %v3392
      %v3398 = vrot.slane %v3397, 4
      %v3400 = vshll.u32 %v3187, 16
      %v3402 = vrot.slane %v3400, 5
      %v3403 = vsel %vm1313, %v3398, %v3402
      %v3405 = vshrl.u32 %v3188, 16
      %v3407 = vrot.slane %v3405, 4
      %v3408 = vshll.u32 %v3188, 16
      %v3410 = vrot.slane %v3408, 5
      %v3411 = vor.u32 %v3407, %v3410
      %v3412 = vrot.slane %v3411, 4
      %v3414 = vshll.u32 %v3189, 16
      %v3416 = vrot.slane %v3414, 5
      %v3417 = vsel %vm1313, %v3412, %v3416
      %v3418 = vshrl.u32 %v3189, 16
      %v3420 = vrot.slane %v3418, 4
      %v3421 = vor.u32 %v3420, %v3416
      %v3422 = vrot.slane %v3421, 4
      %v3424 = vshll.u32 %v3190, 16
      %v3426 = vrot.slane %v3424, 5
      %v3427 = vsel %vm1313, %v3422, %v3426
      %v3429 = vshrl.u32 %v3191, 16
      %v3431 = vrot.slane %v3429, 4
      %v3432 = vshll.u32 %v3191, 16
      %v3434 = vrot.slane %v3432, 5
      %v3435 = vor.u32 %v3431, %v3434
      %v3436 = vrot.slane %v3435, 4
      %v3438 = vshll.u32 %v3192, 16
      %v3440 = vrot.slane %v3438, 5
      %v3441 = vsel %vm1313, %v3436, %v3440
      %v3442 = vshrl.u32 %v3192, 16
      %v3444 = vrot.slane %v3442, 4
      %v3445 = vor.u32 %v3444, %v3440
      %v3446 = vrot.slane %v3445, 4
      %v3448 = vshll.u32 %v3193, 16
      %v3450 = vrot.slane %v3448, 5
      %v3451 = vsel %vm1313, %v3446, %v3450
      %v3453 = vshrl.u32 %v3194, 16
      %v3455 = vrot.slane %v3453, 4
      %v3456 = vshll.u32 %v3194, 16
      %v3458 = vrot.slane %v3456, 5
      %v3459 = vor.u32 %v3455, %v3458
      %v3460 = vrot.slane %v3459, 4
      %v3462 = vshll.u32 %v3195, 16
      %v3464 = vrot.slane %v3462, 5
      %v3465 = vsel %vm1313, %v3460, %v3464
      %v3466 = vshrl.u32 %v3195, 16
      %v3468 = vrot.slane %v3466, 4
      %v3469 = vor.u32 %v3468, %v3464
      %v3470 = vrot.slane %v3469, 4
      %v3472 = vshll.u32 %v3196, 16
      %v3474 = vrot.slane %v3472, 5
      %v3475 = vsel %vm1313, %v3470, %v3474
      %v3477 = vshrl.u32 %v3197, 16
      %v3479 = vrot.slane %v3477, 4
      %v3480 = vshll.u32 %v3197, 16
      %v3482 = vrot.slane %v3480, 5
      %v3483 = vor.u32 %v3479, %v3482
      %v3484 = vrot.slane %v3483, 4
      %v3486 = vshll.u32 %v3198, 16
      %v3488 = vrot.slane %v3486, 5
      %v3489 = vsel %vm1313, %v3484, %v3488
      %v3490 = vshrl.u32 %v3198, 16
      %v3492 = vrot.slane %v3490, 4
      %v3493 = vor.u32 %v3492, %v3488
      %v3494 = vrot.slane %v3493, 4
      %v3496 = vshll.u32 %v3199, 16
      %v3498 = vrot.slane %v3496, 5
      %v3499 = vsel %vm1313, %v3494, %v3498
      %v3501 = vshrl.u32 %v3200, 16
      %v3503 = vrot.slane %v3501, 4
      %v3504 = vshll.u32 %v3200, 16
      %v3506 = vrot.slane %v3504, 5
      %v3507 = vor.u32 %v3503, %v3506
      %v3508 = vrot.slane %v3507, 4
      %v3510 = vshll.u32 %v3201, 16
      %v3512 = vrot.slane %v3510, 5
      %v3513 = vsel %vm1313, %v3508, %v3512
      %v3514 = vshrl.u32 %v3201, 16
      %v3516 = vrot.slane %v3514, 4
      %v3517 = vor.u32 %v3516, %v3512
      %v3518 = vrot.slane %v3517, 4
      %v3520 = vshll.u32 %v3202, 16
      %v3522 = vrot.slane %v3520, 5
      %v3523 = vsel %vm1313, %v3518, %v3522
      %v3525 = vshrl.u32 %v3203, 16
      %v3527 = vrot.slane %v3525, 4
      %v3528 = vshll.u32 %v3203, 16
      %v3530 = vrot.slane %v3528, 5
      %v3531 = vor.u32 %v3527, %v3530
      %v3532 = vrot.slane %v3531, 4
      %v3534 = vshll.u32 %v3204, 16
      %v3536 = vrot.slane %v3534, 5
      %v3537 = vsel %vm1313, %v3532, %v3536
      %v3538 = vshrl.u32 %v3204, 16
      %v3540 = vrot.slane %v3538, 4
      %v3541 = vor.u32 %v3540, %v3536
      %v3542 = vrot.slane %v3541, 4
      %v3544 = vshll.u32 %v3205, 16
      %v3546 = vrot.slane %v3544, 5
      %v3547 = vsel %vm1313, %v3542, %v3546
      %v3549 = vshrl.u32 %v3206, 16
      %v3551 = vrot.slane %v3549, 4
      %v3552 = vshll.u32 %v3206, 16
      %v3554 = vrot.slane %v3552, 5
      %v3555 = vor.u32 %v3551, %v3554
      %v3556 = vrot.slane %v3555, 4
      %v3558 = vshll.u32 %v3207, 16
      %v3560 = vrot.slane %v3558, 5
      %v3561 = vsel %vm1313, %v3556, %v3560
      %v3562 = vshrl.u32 %v3207, 16
      %v3564 = vrot.slane %v3562, 4
      %v3565 = vor.u32 %v3564, %v3560
      %v3566 = vrot.slane %v3565, 4
      %v3568 = vshll.u32 %v3208, 16
      %v3570 = vrot.slane %v3568, 5
      %v3571 = vsel %vm1313, %v3566, %v3570
      %v3573 = vshrl.u32 %v3209, 16
      %v3575 = vrot.slane %v3573, 4
      %v3576 = vshll.u32 %v3209, 16
      %v3578 = vrot.slane %v3576, 5
      %v3579 = vor.u32 %v3575, %v3578
      %v3580 = vrot.slane %v3579, 4
      %v3582 = vshll.u32 %v3210, 16
      %v3584 = vrot.slane %v3582, 5
      %v3585 = vsel %vm1313, %v3580, %v3584
      %v3586 = vshrl.u32 %v3210, 16
      %v3588 = vrot.slane %v3586, 4
      %v3589 = vor.u32 %v3588, %v3584
      %v3590 = vrot.slane %v3589, 4
      %v3592 = vshll.u32 %v3211, 16
      %v3594 = vrot.slane %v3592, 5
      %v3595 = vsel %vm1313, %v3590, %v3594
      %s3596 = scalar_lea.vmem %s3, 256
      %v3597 = vld [vmem:[%s3596] sm:$0xf]
      %v3598 = vld [vmem:[%s3596 + $0x4] sm:$0xf]
      %v3599 = vld [vmem:[%s3596 + $0x8] sm:$0xf]
      %v3600 = vld [vmem:[%s3596 + $0xc] sm:$0xf]
      %v3601 = vld [vmem:[%s3596 + $0x10] sm:$0xf]
      %v3602 = vld [vmem:[%s3596 + $0x14] sm:$0xf]
      %v3603 = vld [vmem:[%s3596 + $0x18] sm:$0xf]
      %v3604 = vld [vmem:[%s3596 + $0x1c] sm:$0xf]
      %v3605 = vld [vmem:[%s3596 + $0x20] sm:$0xf]
      %v3606 = vld [vmem:[%s3596 + $0x24] sm:$0xf]
      %v3607 = vld [vmem:[%s3596 + $0x28] sm:$0xf]
      %v3608 = vld [vmem:[%s3596 + $0x2c] sm:$0xf]
      %v3609 = vld [vmem:[%s3596 + $0x30] sm:$0xf]
      %v3610 = vld [vmem:[%s3596 + $0x34] sm:$0xf]
      %v3611 = vld [vmem:[%s3596 + $0x38] sm:$0xf]
      %v3612 = vld [vmem:[%s3596 + $0x3c] sm:$0xf]
      %v3613 = vunpack.c.l.b16 %v3225
      %v3614 = vunpack.c.l.b16 %v3235
      %v3615 = vunpack.c.l.b16 %v3249
      %v3616 = vunpack.c.l.b16 %v3259
      %v3617 = vunpack.c.l.b16 %v3273
      %v3618 = vunpack.c.l.b16 %v3283
      %v3619 = vunpack.c.l.b16 %v3297
      %v3620 = vunpack.c.l.b16 %v3307
      %v3621 = vunpack.c.l.b16 %v3321
      %v3622 = vunpack.c.l.b16 %v3331
      %v3623 = vunpack.c.l.b16 %v3345
      %v3624 = vunpack.c.l.b16 %v3355
      %v3625 = vunpack.c.l.b16 %v3369
      %v3626 = vunpack.c.l.b16 %v3379
      %v3627 = vunpack.c.l.b16 %v3393
      %v3628 = vunpack.c.l.b16 %v3403
      %v3629 = vunpack.c.l.b16 %v3417
      %v3630 = vunpack.c.l.b16 %v3427
      %v3631 = vunpack.c.l.b16 %v3441
      %v3632 = vunpack.c.l.b16 %v3451
      %v3633 = vunpack.c.l.b16 %v3465
      %v3634 = vunpack.c.l.b16 %v3475
      %v3635 = vunpack.c.l.b16 %v3489
      %v3636 = vunpack.c.l.b16 %v3499
      %v3637 = vunpack.c.l.b16 %v3513
      %v3638 = vunpack.c.l.b16 %v3523
      %v3639 = vunpack.c.l.b16 %v3537
      %v3640 = vunpack.c.l.b16 %v3547
      %v3641 = vunpack.c.l.b16 %v3561
      %v3642 = vunpack.c.l.b16 %v3571
      %v3643 = vunpack.c.l.b16 %v3585
      %v3644 = vunpack.c.l.b16 %v3595
      %v3645 = vpack.c.b16 %v3614, %v3613
      %v3646 = vpack.c.b16 %v3616, %v3615
      %v3647 = vpack.c.b16 %v3618, %v3617
      %v3648 = vpack.c.b16 %v3620, %v3619
      %v3649 = vpack.c.b16 %v3622, %v3621
      %v3650 = vpack.c.b16 %v3624, %v3623
      %v3651 = vpack.c.b16 %v3626, %v3625
      %v3652 = vpack.c.b16 %v3628, %v3627
      %v3653 = vpack.c.b16 %v3630, %v3629
      %v3654 = vpack.c.b16 %v3632, %v3631
      %v3655 = vpack.c.b16 %v3634, %v3633
      %v3656 = vpack.c.b16 %v3636, %v3635
      %v3657 = vpack.c.b16 %v3638, %v3637
      %v3658 = vpack.c.b16 %v3640, %v3639
      %v3659 = vpack.c.b16 %v3642, %v3641
      %v3660 = vpack.c.b16 %v3644, %v3643
      %v3693 = vunpack.c.l.b16 %v3597
      %v3694 = vunpack.c.l.b16 %v3598
      %v3695 = vunpack.c.l.b16 %v3599
      %v3696 = vunpack.c.l.b16 %v3600
      %v3697 = vunpack.c.l.b16 %v3601
      %v3698 = vunpack.c.l.b16 %v3602
      %v3699 = vunpack.c.l.b16 %v3603
      %v3700 = vunpack.c.l.b16 %v3604
      %v3701 = vunpack.c.l.b16 %v3605
      %v3702 = vunpack.c.l.b16 %v3606
      %v3703 = vunpack.c.l.b16 %v3607
      %v3704 = vunpack.c.l.b16 %v3608
      %v3705 = vunpack.c.l.b16 %v3609
      %v3706 = vunpack.c.l.b16 %v3610
      %v3707 = vunpack.c.l.b16 %v3611
      %v3708 = vunpack.c.l.b16 %v3612
      %v3709 = vpack.c.b16 %v3694, %v3693
      %v3710 = vpack.c.b16 %v3696, %v3695
      %v3711 = vpack.c.b16 %v3698, %v3697
      %v3712 = vpack.c.b16 %v3700, %v3699
      %v3713 = vpack.c.b16 %v3702, %v3701
      %v3714 = vpack.c.b16 %v3704, %v3703
      %v3715 = vpack.c.b16 %v3706, %v3705
      %v3716 = vpack.c.b16 %v3708, %v3707
      %3725 = vmatprep.subr.bf16.mxu0 0
      %3726 = vmatpush1.bf16.msra.mxu0 %v3709
      %3727 = vmatprep.subr.bf16.mxu0 0
      %3728 = vmatpush1.bf16.msra.mxu0 %v3710
      %3729 = vmatprep.subr.bf16.mxu0 0
      %3730 = vmatpush1.bf16.msra.mxu0 %v3711
      %3731 = vmatprep.subr.bf16.mxu0 0
      %3732 = vmatpush1.bf16.msra.mxu0 %v3712
      %3733 = vmatprep.subr.bf16.mxu0 0
      %3734 = vmatpush1.bf16.msra.mxu0 %v3713
      %3735 = vmatprep.subr.bf16.mxu0 0
      %3736 = vmatpush1.bf16.msra.mxu0 %v3714
      %3737 = vmatprep.subr.bf16.mxu0 0
      %3738 = vmatpush1.bf16.msra.mxu0 %v3715
      %3739 = vmatprep.subr.bf16.mxu0 0
      %3740 = vmatpush1.bf16.msra.mxu0 %v3716
      %3741 = vmatprep.subr.bf16.mxu0 0
      %3742 = vmatpush1.bf16.msra.mxu0 0
      %3743 = vmatprep.subr.bf16.mxu0 0
      %3744 = vmatpush1.bf16.msra.mxu0 0
      %3745 = vmatprep.subr.bf16.mxu0 0
      %3746 = vmatpush1.bf16.msra.mxu0 0
      %3747 = vmatprep.subr.bf16.mxu0 0
      %3748 = vmatpush1.bf16.msra.mxu0 0
      %3749 = vmatprep.subr.bf16.mxu0 0
      %3750 = vmatpush1.bf16.msra.mxu0 0
      %3751 = vmatprep.subr.bf16.mxu0 0
      %3752 = vmatpush1.bf16.msra.mxu0 0
      %3753 = vmatprep.subr.bf16.mxu0 0
      %3754 = vmatpush1.bf16.msra.mxu0 0
      %3755 = vmatprep.subr.bf16.mxu0 0
      %3756 = vmatpush1.bf16.msra.mxu0 0
      %3757 = vmatprep.mubr.bf16.mxu0 0
      %3758 = vmatmul.mubr.bf16.gmra.mrb[0].mxu0 %v3645
      %v3759 = vpop.f32.mrb[0].mxu0
      %v3760 = vadd.f32 0.0, %v3759
      %v3761 = vpop.f32.mrb[0].mxu0
      %v3762 = vpop.f32.mrb[0].mxu0
      %v3763 = vadd.f32 0.0, %v3762
      %v3764 = vpop.f32.mrb[0].mxu0
      %3765 = vmatprep.mubr.bf16.mxu0 0
      %3766 = vmatmul.mubr.bf16.gmra.mrb[0].mxu0 %v3646
      %v3767 = vpop.f32.mrb[0].mxu0
      %v3768 = vadd.f32 0.0, %v3767
      %v3769 = vpop.f32.mrb[0].mxu0
      %v3770 = vpop.f32.mrb[0].mxu0
      %v3771 = vadd.f32 0.0, %v3770
      %v3772 = vpop.f32.mrb[0].mxu0
      %3773 = vmatprep.mubr.bf16.mxu0 0
      %3774 = vmatmul.mubr.bf16.gmra.mrb[0].mxu0 %v3647
      %v3775 = vpop.f32.mrb[0].mxu0
      %v3776 = vadd.f32 0.0, %v3775
      %v3777 = vpop.f32.mrb[0].mxu0
      %v3778 = vpop.f32.mrb[0].mxu0
      %v3779 = vadd.f32 0.0, %v3778
      %v3780 = vpop.f32.mrb[0].mxu0
      %3781 = vmatprep.mubr.bf16.mxu0 0
      %3782 = vmatmul.mubr.bf16.gmra.mrb[0].mxu0 %v3648
      %v3783 = vpop.f32.mrb[0].mxu0
      %v3784 = vadd.f32 0.0, %v3783
      %v3785 = vpop.f32.mrb[0].mxu0
      %v3786 = vpop.f32.mrb[0].mxu0
      %v3787 = vadd.f32 0.0, %v3786
      %v3788 = vpop.f32.mrb[0].mxu0
      %3789 = vmatprep.mubr.bf16.mxu0 0
      %3790 = vmatmul.mubr.bf16.gmra.mrb[0].mxu0 %v3649
      %v3791 = vpop.f32.mrb[0].mxu0
      %v3792 = vadd.f32 0.0, %v3791
      %v3793 = vpop.f32.mrb[0].mxu0
      %v3794 = vpop.f32.mrb[0].mxu0
      %v3795 = vadd.f32 0.0, %v3794
      %v3796 = vpop.f32.mrb[0].mxu0
      %3797 = vmatprep.mubr.bf16.mxu0 0
      %3798 = vmatmul.mubr.bf16.gmra.mrb[0].mxu0 %v3650
      %v3799 = vpop.f32.mrb[0].mxu0
      %v3800 = vadd.f32 0.0, %v3799
      %v3801 = vpop.f32.mrb[0].mxu0
      %v3802 = vpop.f32.mrb[0].mxu0
      %v3803 = vadd.f32 0.0, %v3802
      %v3804 = vpop.f32.mrb[0].mxu0
      %3805 = vmatprep.mubr.bf16.mxu0 0
      %3806 = vmatmul.mubr.bf16.gmra.mrb[0].mxu0 %v3651
      %v3807 = vpop.f32.mrb[0].mxu0
      %v3808 = vadd.f32 0.0, %v3807
      %v3809 = vpop.f32.mrb[0].mxu0
      %v3810 = vpop.f32.mrb[0].mxu0
      %v3811 = vadd.f32 0.0, %v3810
      %v3812 = vpop.f32.mrb[0].mxu0
      %3813 = vmatprep.mubr.bf16.mxu0 0
      %3814 = vmatmul.mubr.bf16.gmra.mrb[0].mxu0 %v3652
      %v3815 = vpop.f32.mrb[0].mxu0
      %v3816 = vadd.f32 0.0, %v3815
      %v3817 = vpop.f32.mrb[0].mxu0
      %v3818 = vpop.f32.mrb[0].mxu0
      %v3819 = vadd.f32 0.0, %v3818
      %v3820 = vpop.f32.mrb[0].mxu0
      %3821 = vmatprep.mubr.bf16.mxu0 0
      %3822 = vmatmul.mubr.bf16.gmra.mrb[0].mxu0 %v3653
      %v3823 = vpop.f32.mrb[0].mxu0
      %v3824 = vadd.f32 0.0, %v3823
      %v3825 = vpop.f32.mrb[0].mxu0
      %v3826 = vpop.f32.mrb[0].mxu0
      %v3827 = vadd.f32 0.0, %v3826
      %v3828 = vpop.f32.mrb[0].mxu0
      %3829 = vmatprep.mubr.bf16.mxu0 0
      %3830 = vmatmul.mubr.bf16.gmra.mrb[0].mxu0 %v3654
      %v3831 = vpop.f32.mrb[0].mxu0
      %v3832 = vadd.f32 0.0, %v3831
      %v3833 = vpop.f32.mrb[0].mxu0
      %v3834 = vpop.f32.mrb[0].mxu0
      %v3835 = vadd.f32 0.0, %v3834
      %v3836 = vpop.f32.mrb[0].mxu0
      %3837 = vmatprep.mubr.bf16.mxu0 0
      %3838 = vmatmul.mubr.bf16.gmra.mrb[0].mxu0 %v3655
      %v3839 = vpop.f32.mrb[0].mxu0
      %v3840 = vadd.f32 0.0, %v3839
      %v3841 = vpop.f32.mrb[0].mxu0
      %v3842 = vpop.f32.mrb[0].mxu0
      %v3843 = vadd.f32 0.0, %v3842
      %v3844 = vpop.f32.mrb[0].mxu0
      %3845 = vmatprep.mubr.bf16.mxu0 0
      %3846 = vmatmul.mubr.bf16.gmra.mrb[0].mxu0 %v3656
      %v3847 = vpop.f32.mrb[0].mxu0
      %v3848 = vadd.f32 0.0, %v3847
      %v3849 = vpop.f32.mrb[0].mxu0
      %v3850 = vpop.f32.mrb[0].mxu0
      %v3851 = vadd.f32 0.0, %v3850
      %v3852 = vpop.f32.mrb[0].mxu0
      %3853 = vmatprep.mubr.bf16.mxu0 0
      %3854 = vmatmul.mubr.bf16.gmra.mrb[0].mxu0 %v3657
      %v3855 = vpop.f32.mrb[0].mxu0
      %v3856 = vadd.f32 0.0, %v3855
      %v3857 = vpop.f32.mrb[0].mxu0
      %v3858 = vpop.f32.mrb[0].mxu0
      %v3859 = vadd.f32 0.0, %v3858
      %v3860 = vpop.f32.mrb[0].mxu0
      %3861 = vmatprep.mubr.bf16.mxu0 0
      %3862 = vmatmul.mubr.bf16.gmra.mrb[0].mxu0 %v3658
      %v3863 = vpop.f32.mrb[0].mxu0
      %v3864 = vadd.f32 0.0, %v3863
      %v3865 = vpop.f32.mrb[0].mxu0
      %v3866 = vpop.f32.mrb[0].mxu0
      %v3867 = vadd.f32 0.0, %v3866
      %v3868 = vpop.f32.mrb[0].mxu0
      %3869 = vmatprep.mubr.bf16.mxu0 0
      %3870 = vmatmul.mubr.bf16.gmra.mrb[0].mxu0 %v3659
      %v3871 = vpop.f32.mrb[0].mxu0
      %v3872 = vadd.f32 0.0, %v3871
      %v3873 = vpop.f32.mrb[0].mxu0
      %v3874 = vpop.f32.mrb[0].mxu0
      %v3875 = vadd.f32 0.0, %v3874
      %v3876 = vpop.f32.mrb[0].mxu0
      %3877 = vmatprep.mubr.bf16.mxu0 0
      %3878 = vmatmul.mubr.bf16.gmra.mrb[0].mxu0 %v3660
      %v3879 = vpop.f32.mrb[0].mxu0
      %v3880 = vadd.f32 0.0, %v3879
      %v3881 = vpop.f32.mrb[0].mxu0
      %v3882 = vpop.f32.mrb[0].mxu0
      %v3883 = vadd.f32 0.0, %v3882
      %v3884 = vpop.f32.mrb[0].mxu0
      %3885 = vdwg.mxu0
      %v3886 = vadd.f32 %v3132, %v3760
      %v3887 = vadd.f32 %v3133, %v3763
      %v3888 = vadd.f32 %v3134, %v3768
      %v3889 = vadd.f32 %v3135, %v3771
      %v3890 = vadd.f32 %v3136, %v3776
      %v3891 = vadd.f32 %v3137, %v3779
      %v3892 = vadd.f32 %v3138, %v3784
      %v3893 = vadd.f32 %v3139, %v3787
      %v3894 = vadd.f32 %v3140, %v3792
      %v3895 = vadd.f32 %v3141, %v3795
      %v3896 = vadd.f32 %v3142, %v3800
      %v3897 = vadd.f32 %v3143, %v3803
      %v3898 = vadd.f32 %v3144, %v3808
      %v3899 = vadd.f32 %v3145, %v3811
      %v3900 = vadd.f32 %v3146, %v3816
      %v3901 = vadd.f32 %v3147, %v3819
      %v3902 = vadd.f32 %v3148, %v3824
      %v3903 = vadd.f32 %v3149, %v3827
      %v3904 = vadd.f32 %v3150, %v3832
      %v3905 = vadd.f32 %v3151, %v3835
      %v3906 = vadd.f32 %v3152, %v3840
      %v3907 = vadd.f32 %v3153, %v3843
      %v3908 = vadd.f32 %v3154, %v3848
      %v3909 = vadd.f32 %v3155, %v3851
      %v3910 = vadd.f32 %v3156, %v3856
      %v3911 = vadd.f32 %v3157, %v3859
      %v3912 = vadd.f32 %v3158, %v3864
      %v3913 = vadd.f32 %v3159, %v3867
      %v3914 = vadd.f32 %v3160, %v3872
      %v3915 = vadd.f32 %v3161, %v3875
      %v3916 = vadd.f32 %v3162, %v3880
      %v3917 = vadd.f32 %v3163, %v3883
      %v3918 = vld [vmem:[%s1129] sm:$0xe]
      %v3919 = vld [vmem:[%s1129 + $0xc] sm:$0xe]
      %v3920 = vld [vmem:[%s1129 + $0x18] sm:$0xe]
      %v3921 = vld [vmem:[%s1129 + $0x24] sm:$0xe]
      %v3922 = vld [vmem:[%s1129 + $0x30] sm:$0xe]
      %v3923 = vld [vmem:[%s1129 + $0x3c] sm:$0xe]
      %v3924 = vld [vmem:[%s1129 + $0x48] sm:$0xe]
      %v3925 = vld [vmem:[%s1129 + $0x54] sm:$0xe]
      %v3926 = vld [vmem:[%s1129 + $0x60] sm:$0xe]
      %v3927 = vld [vmem:[%s1129 + $0x6c] sm:$0xe]
      %v3928 = vld [vmem:[%s1129 + $0x78] sm:$0xe]
      %v3929 = vld [vmem:[%s1129 + $0x84] sm:$0xe]
      %v3930 = vld [vmem:[%s1129 + $0x90] sm:$0xe]
      %v3931 = vld [vmem:[%s1129 + $0x9c] sm:$0xe]
      %v3932 = vld [vmem:[%s1129 + $0xa8] sm:$0xe]
      %v3933 = vld [vmem:[%s1129 + $0xb4] sm:$0xe]
      %v3982 = vrot.slane %v3918, 5
      %v3983 = vrot.slane %v3982, 4
      %v3984 = vrot.slane %v3165, 5
      %v3985 = vsel %vm2343, %v3983, %v3984
      %v3986 = vrot.slane %v3984, 4
      %v3987 = vrot.slane %v3166, 5
      %v3988 = vsel %vm2343, %v3986, %v3987
      %v3989 = vrot.slane %v3919, 5
      %v3990 = vrot.slane %v3989, 4
      %v3991 = vrot.slane %v3168, 5
      %v3992 = vsel %vm2343, %v3990, %v3991
      %v3993 = vrot.slane %v3991, 4
      %v3994 = vrot.slane %v3169, 5
      %v3995 = vsel %vm2343, %v3993, %v3994
      %v3996 = vrot.slane %v3920, 5
      %v3997 = vrot.slane %v3996, 4
      %v3998 = vrot.slane %v3171, 5
      %v3999 = vsel %vm2343, %v3997, %v3998
      %v4000 = vrot.slane %v3998, 4
      %v4001 = vrot.slane %v3172, 5
      %v4002 = vsel %vm2343, %v4000, %v4001
      %v4003 = vrot.slane %v3921, 5
      %v4004 = vrot.slane %v4003, 4
      %v4005 = vrot.slane %v3174, 5
      %v4006 = vsel %vm2343, %v4004, %v4005
      %v4007 = vrot.slane %v4005, 4
      %v4008 = vrot.slane %v3175, 5
      %v4009 = vsel %vm2343, %v4007, %v4008
      %v4010 = vrot.slane %v3922, 5
      %v4011 = vrot.slane %v4010, 4
      %v4012 = vrot.slane %v3177, 5
      %v4013 = vsel %vm2343, %v4011, %v4012
      %v4014 = vrot.slane %v4012, 4
      %v4015 = vrot.slane %v3178, 5
      %v4016 = vsel %vm2343, %v4014, %v4015
      %v4017 = vrot.slane %v3923, 5
      %v4018 = vrot.slane %v4017, 4
      %v4019 = vrot.slane %v3180, 5
      %v4020 = vsel %vm2343, %v4018, %v4019
      %v4021 = vrot.slane %v4019, 4
      %v4022 = vrot.slane %v3181, 5
      %v4023 = vsel %vm2343, %v4021, %v4022
      %v4024 = vrot.slane %v3924, 5
      %v4025 = vrot.slane %v4024, 4
      %v4026 = vrot.slane %v3183, 5
      %v4027 = vsel %vm2343, %v4025, %v4026
      %v4028 = vrot.slane %v4026, 4
      %v4029 = vrot.slane %v3184, 5
      %v4030 = vsel %vm2343, %v4028, %v4029
      %v4031 = vrot.slane %v3925, 5
      %v4032 = vrot.slane %v4031, 4
      %v4033 = vrot.slane %v3186, 5
      %v4034 = vsel %vm2343, %v4032, %v4033
      %v4035 = vrot.slane %v4033, 4
      %v4036 = vrot.slane %v3187, 5
      %v4037 = vsel %vm2343, %v4035, %v4036
      %v4038 = vrot.slane %v3926, 5
      %v4039 = vrot.slane %v4038, 4
      %v4040 = vrot.slane %v3189, 5
      %v4041 = vsel %vm2343, %v4039, %v4040
      %v4042 = vrot.slane %v4040, 4
      %v4043 = vrot.slane %v3190, 5
      %v4044 = vsel %vm2343, %v4042, %v4043
      %v4045 = vrot.slane %v3927, 5
      %v4046 = vrot.slane %v4045, 4
      %v4047 = vrot.slane %v3192, 5
      %v4048 = vsel %vm2343, %v4046, %v4047
      %v4049 = vrot.slane %v4047, 4
      %v4050 = vrot.slane %v3193, 5
      %v4051 = vsel %vm2343, %v4049, %v4050
      %v4052 = vrot.slane %v3928, 5
      %v4053 = vrot.slane %v4052, 4
      %v4054 = vrot.slane %v3195, 5
      %v4055 = vsel %vm2343, %v4053, %v4054
      %v4056 = vrot.slane %v4054, 4
      %v4057 = vrot.slane %v3196, 5
      %v4058 = vsel %vm2343, %v4056, %v4057
      %v4059 = vrot.slane %v3929, 5
      %v4060 = vrot.slane %v4059, 4
      %v4061 = vrot.slane %v3198, 5
      %v4062 = vsel %vm2343, %v4060, %v4061
      %v4063 = vrot.slane %v4061, 4
      %v4064 = vrot.slane %v3199, 5
      %v4065 = vsel %vm2343, %v4063, %v4064
      %v4066 = vrot.slane %v3930, 5
      %v4067 = vrot.slane %v4066, 4
      %v4068 = vrot.slane %v3201, 5
      %v4069 = vsel %vm2343, %v4067, %v4068
      %v4070 = vrot.slane %v4068, 4
      %v4071 = vrot.slane %v3202, 5
      %v4072 = vsel %vm2343, %v4070, %v4071
      %v4073 = vrot.slane %v3931, 5
      %v4074 = vrot.slane %v4073, 4
      %v4075 = vrot.slane %v3204, 5
      %v4076 = vsel %vm2343, %v4074, %v4075
      %v4077 = vrot.slane %v4075, 4
      %v4078 = vrot.slane %v3205, 5
      %v4079 = vsel %vm2343, %v4077, %v4078
      %v4080 = vrot.slane %v3932, 5
      %v4081 = vrot.slane %v4080, 4
      %v4082 = vrot.slane %v3207, 5
      %v4083 = vsel %vm2343, %v4081, %v4082
      %v4084 = vrot.slane %v4082, 4
      %v4085 = vrot.slane %v3208, 5
      %v4086 = vsel %vm2343, %v4084, %v4085
      %v4087 = vrot.slane %v3933, 5
      %v4088 = vrot.slane %v4087, 4
      %v4089 = vrot.slane %v3210, 5
      %v4090 = vsel %vm2343, %v4088, %v4089
      %v4091 = vrot.slane %v4089, 4
      %v4092 = vrot.slane %v3211, 5
      %v4093 = vsel %vm2343, %v4091, %v4092
      %s4094 = scalar_lea.vmem %s3, 320
      %v4095 = vld [vmem:[%s4094] sm:$0xf]
      %v4096 = vld [vmem:[%s4094 + $0x4] sm:$0xf]
      %v4097 = vld [vmem:[%s4094 + $0x8] sm:$0xf]
      %v4098 = vld [vmem:[%s4094 + $0xc] sm:$0xf]
      %v4099 = vld [vmem:[%s4094 + $0x10] sm:$0xf]
      %v4100 = vld [vmem:[%s4094 + $0x14] sm:$0xf]
      %v4101 = vld [vmem:[%s4094 + $0x18] sm:$0xf]
      %v4102 = vld [vmem:[%s4094 + $0x1c] sm:$0xf]
      %v4103 = vld [vmem:[%s4094 + $0x20] sm:$0xf]
      %v4104 = vld [vmem:[%s4094 + $0x24] sm:$0xf]
      %v4105 = vld [vmem:[%s4094 + $0x28] sm:$0xf]
      %v4106 = vld [vmem:[%s4094 + $0x2c] sm:$0xf]
      %v4107 = vld [vmem:[%s4094 + $0x30] sm:$0xf]
      %v4108 = vld [vmem:[%s4094 + $0x34] sm:$0xf]
      %v4109 = vld [vmem:[%s4094 + $0x38] sm:$0xf]
      %v4110 = vld [vmem:[%s4094 + $0x3c] sm:$0xf]
      %v4111 = vunpack.c.l.b16 %v3985
      %v4112 = vunpack.c.l.b16 %v3988
      %v4113 = vunpack.c.l.b16 %v3992
      %v4114 = vunpack.c.l.b16 %v3995
      %v4115 = vunpack.c.l.b16 %v3999
      %v4116 = vunpack.c.l.b16 %v4002
      %v4117 = vunpack.c.l.b16 %v4006
      %v4118 = vunpack.c.l.b16 %v4009
      %v4119 = vunpack.c.l.b16 %v4013
      %v4120 = vunpack.c.l.b16 %v4016
      %v4121 = vunpack.c.l.b16 %v4020
      %v4122 = vunpack.c.l.b16 %v4023
      %v4123 = vunpack.c.l.b16 %v4027
      %v4124 = vunpack.c.l.b16 %v4030
      %v4125 = vunpack.c.l.b16 %v4034
      %v4126 = vunpack.c.l.b16 %v4037
      %v4127 = vunpack.c.l.b16 %v4041
      %v4128 = vunpack.c.l.b16 %v4044
      %v4129 = vunpack.c.l.b16 %v4048
      %v4130 = vunpack.c.l.b16 %v4051
      %v4131 = vunpack.c.l.b16 %v4055
      %v4132 = vunpack.c.l.b16 %v4058
      %v4133 = vunpack.c.l.b16 %v4062
      %v4134 = vunpack.c.l.b16 %v4065
      %v4135 = vunpack.c.l.b16 %v4069
      %v4136 = vunpack.c.l.b16 %v4072
      %v4137 = vunpack.c.l.b16 %v4076
      %v4138 = vunpack.c.l.b16 %v4079
      %v4139 = vunpack.c.l.b16 %v4083
      %v4140 = vunpack.c.l.b16 %v4086
      %v4141 = vunpack.c.l.b16 %v4090
      %v4142 = vunpack.c.l.b16 %v4093
      %v4143 = vpack.c.b16 %v4112, %v4111
      %v4144 = vpack.c.b16 %v4114, %v4113
      %v4145 = vpack.c.b16 %v4116, %v4115
      %v4146 = vpack.c.b16 %v4118, %v4117
      %v4147 = vpack.c.b16 %v4120, %v4119
      %v4148 = vpack.c.b16 %v4122, %v4121
      %v4149 = vpack.c.b16 %v4124, %v4123
      %v4150 = vpack.c.b16 %v4126, %v4125
      %v4151 = vpack.c.b16 %v4128, %v4127
      %v4152 = vpack.c.b16 %v4130, %v4129
      %v4153 = vpack.c.b16 %v4132, %v4131
      %v4154 = vpack.c.b16 %v4134, %v4133
      %v4155 = vpack.c.b16 %v4136, %v4135
      %v4156 = vpack.c.b16 %v4138, %v4137
      %v4157 = vpack.c.b16 %v4140, %v4139
      %v4158 = vpack.c.b16 %v4142, %v4141
      %v4191 = vunpack.c.l.b16 %v4095
      %v4192 = vunpack.c.l.b16 %v4096
      %v4193 = vunpack.c.l.b16 %v4097
      %v4194 = vunpack.c.l.b16 %v4098
      %v4195 = vunpack.c.l.b16 %v4099
      %v4196 = vunpack.c.l.b16 %v4100
      %v4197 = vunpack.c.l.b16 %v4101
      %v4198 = vunpack.c.l.b16 %v4102
      %v4199 = vunpack.c.l.b16 %v4103
      %v4200 = vunpack.c.l.b16 %v4104
      %v4201 = vunpack.c.l.b16 %v4105
      %v4202 = vunpack.c.l.b16 %v4106
      %v4203 = vunpack.c.l.b16 %v4107
      %v4204 = vunpack.c.l.b16 %v4108
      %v4205 = vunpack.c.l.b16 %v4109
      %v4206 = vunpack.c.l.b16 %v4110
      %v4207 = vpack.c.b16 %v4192, %v4191
      %v4208 = vpack.c.b16 %v4194, %v4193
      %v4209 = vpack.c.b16 %v4196, %v4195
      %v4210 = vpack.c.b16 %v4198, %v4197
      %v4211 = vpack.c.b16 %v4200, %v4199
      %v4212 = vpack.c.b16 %v4202, %v4201
      %v4213 = vpack.c.b16 %v4204, %v4203
      %v4214 = vpack.c.b16 %v4206, %v4205
      %4223 = vmatprep.subr.bf16.mxu0 0
      %4224 = vmatpush1.bf16.msra.mxu0 %v4207
      %4225 = vmatprep.subr.bf16.mxu0 0
      %4226 = vmatpush1.bf16.msra.mxu0 %v4208
      %4227 = vmatprep.subr.bf16.mxu0 0
      %4228 = vmatpush1.bf16.msra.mxu0 %v4209
      %4229 = vmatprep.subr.bf16.mxu0 0
      %4230 = vmatpush1.bf16.msra.mxu0 %v4210
      %4231 = vmatprep.subr.bf16.mxu0 0
      %4232 = vmatpush1.bf16.msra.mxu0 %v4211
      %4233 = vmatprep.subr.bf16.mxu0 0
      %4234 = vmatpush1.bf16.msra.mxu0 %v4212
      %4235 = vmatprep.subr.bf16.mxu0 0
      %4236 = vmatpush1.bf16.msra.mxu0 %v4213
      %4237 = vmatprep.subr.bf16.mxu0 0
      %4238 = vmatpush1.bf16.msra.mxu0 %v4214
      %4239 = vmatprep.subr.bf16.mxu0 0
      %4240 = vmatpush1.bf16.msra.mxu0 0
      %4241 = vmatprep.subr.bf16.mxu0 0
      %4242 = vmatpush1.bf16.msra.mxu0 0
      %4243 = vmatprep.subr.bf16.mxu0 0
      %4244 = vmatpush1.bf16.msra.mxu0 0
      %4245 = vmatprep.subr.bf16.mxu0 0
      %4246 = vmatpush1.bf16.msra.mxu0 0
      %4247 = vmatprep.subr.bf16.mxu0 0
      %4248 = vmatpush1.bf16.msra.mxu0 0
      %4249 = vmatprep.subr.bf16.mxu0 0
      %4250 = vmatpush1.bf16.msra.mxu0 0
      %4251 = vmatprep.subr.bf16.mxu0 0
      %4252 = vmatpush1.bf16.msra.mxu0 0
      %4253 = vmatprep.subr.bf16.mxu0 0
      %4254 = vmatpush1.bf16.msra.mxu0 0
      %4255 = vmatprep.mubr.bf16.mxu0 0
      %4256 = vmatmul.mubr.bf16.gmra.mrb[0].mxu0 %v4143
      %v4257 = vpop.f32.mrb[0].mxu0
      %v4258 = vadd.f32 0.0, %v4257
      %v4259 = vpop.f32.mrb[0].mxu0
      %v4260 = vpop.f32.mrb[0].mxu0
      %v4261 = vadd.f32 0.0, %v4260
      %v4262 = vpop.f32.mrb[0].mxu0
      %4263 = vmatprep.mubr.bf16.mxu0 0
      %4264 = vmatmul.mubr.bf16.gmra.mrb[0].mxu0 %v4144
      %v4265 = vpop.f32.mrb[0].mxu0
      %v4266 = vadd.f32 0.0, %v4265
      %v4267 = vpop.f32.mrb[0].mxu0
      %v4268 = vpop.f32.mrb[0].mxu0
      %v4269 = vadd.f32 0.0, %v4268
      %v4270 = vpop.f32.mrb[0].mxu0
      %4271 = vmatprep.mubr.bf16.mxu0 0
      %4272 = vmatmul.mubr.bf16.gmra.mrb[0].mxu0 %v4145
      %v4273 = vpop.f32.mrb[0].mxu0
      %v4274 = vadd.f32 0.0, %v4273
      %v4275 = vpop.f32.mrb[0].mxu0
      %v4276 = vpop.f32.mrb[0].mxu0
      %v4277 = vadd.f32 0.0, %v4276
      %v4278 = vpop.f32.mrb[0].mxu0
      %4279 = vmatprep.mubr.bf16.mxu0 0
      %4280 = vmatmul.mubr.bf16.gmra.mrb[0].mxu0 %v4146
      %v4281 = vpop.f32.mrb[0].mxu0
      %v4282 = vadd.f32 0.0, %v4281
      %v4283 = vpop.f32.mrb[0].mxu0
      %v4284 = vpop.f32.mrb[0].mxu0
      %v4285 = vadd.f32 0.0, %v4284
      %v4286 = vpop.f32.mrb[0].mxu0
      %4287 = vmatprep.mubr.bf16.mxu0 0
      %4288 = vmatmul.mubr.bf16.gmra.mrb[0].mxu0 %v4147
      %v4289 = vpop.f32.mrb[0].mxu0
      %v4290 = vadd.f32 0.0, %v4289
      %v4291 = vpop.f32.mrb[0].mxu0
      %v4292 = vpop.f32.mrb[0].mxu0
      %v4293 = vadd.f32 0.0, %v4292
      %v4294 = vpop.f32.mrb[0].mxu0
      %4295 = vmatprep.mubr.bf16.mxu0 0
      %4296 = vmatmul.mubr.bf16.gmra.mrb[0].mxu0 %v4148
      %v4297 = vpop.f32.mrb[0].mxu0
      %v4298 = vadd.f32 0.0, %v4297
      %v4299 = vpop.f32.mrb[0].mxu0
      %v4300 = vpop.f32.mrb[0].mxu0
      %v4301 = vadd.f32 0.0, %v4300
      %v4302 = vpop.f32.mrb[0].mxu0
      %4303 = vmatprep.mubr.bf16.mxu0 0
      %4304 = vmatmul.mubr.bf16.gmra.mrb[0].mxu0 %v4149
      %v4305 = vpop.f32.mrb[0].mxu0
      %v4306 = vadd.f32 0.0, %v4305
      %v4307 = vpop.f32.mrb[0].mxu0
      %v4308 = vpop.f32.mrb[0].mxu0
      %v4309 = vadd.f32 0.0, %v4308
      %v4310 = vpop.f32.mrb[0].mxu0
      %4311 = vmatprep.mubr.bf16.mxu0 0
      %4312 = vmatmul.mubr.bf16.gmra.mrb[0].mxu0 %v4150
      %v4313 = vpop.f32.mrb[0].mxu0
      %v4314 = vadd.f32 0.0, %v4313
      %v4315 = vpop.f32.mrb[0].mxu0
      %v4316 = vpop.f32.mrb[0].mxu0
      %v4317 = vadd.f32 0.0, %v4316
      %v4318 = vpop.f32.mrb[0].mxu0
      %4319 = vmatprep.mubr.bf16.mxu0 0
      %4320 = vmatmul.mubr.bf16.gmra.mrb[0].mxu0 %v4151
      %v4321 = vpop.f32.mrb[0].mxu0
      %v4322 = vadd.f32 0.0, %v4321
      %v4323 = vpop.f32.mrb[0].mxu0
      %v4324 = vpop.f32.mrb[0].mxu0
      %v4325 = vadd.f32 0.0, %v4324
      %v4326 = vpop.f32.mrb[0].mxu0
      %4327 = vmatprep.mubr.bf16.mxu0 0
      %4328 = vmatmul.mubr.bf16.gmra.mrb[0].mxu0 %v4152
      %v4329 = vpop.f32.mrb[0].mxu0
      %v4330 = vadd.f32 0.0, %v4329
      %v4331 = vpop.f32.mrb[0].mxu0
      %v4332 = vpop.f32.mrb[0].mxu0
      %v4333 = vadd.f32 0.0, %v4332
      %v4334 = vpop.f32.mrb[0].mxu0
      %4335 = vmatprep.mubr.bf16.mxu0 0
      %4336 = vmatmul.mubr.bf16.gmra.mrb[0].mxu0 %v4153
      %v4337 = vpop.f32.mrb[0].mxu0
      %v4338 = vadd.f32 0.0, %v4337
      %v4339 = vpop.f32.mrb[0].mxu0
      %v4340 = vpop.f32.mrb[0].mxu0
      %v4341 = vadd.f32 0.0, %v4340
      %v4342 = vpop.f32.mrb[0].mxu0
      %4343 = vmatprep.mubr.bf16.mxu0 0
      %4344 = vmatmul.mubr.bf16.gmra.mrb[0].mxu0 %v4154
      %v4345 = vpop.f32.mrb[0].mxu0
      %v4346 = vadd.f32 0.0, %v4345
      %v4347 = vpop.f32.mrb[0].mxu0
      %v4348 = vpop.f32.mrb[0].mxu0
      %v4349 = vadd.f32 0.0, %v4348
      %v4350 = vpop.f32.mrb[0].mxu0
      %4351 = vmatprep.mubr.bf16.mxu0 0
      %4352 = vmatmul.mubr.bf16.gmra.mrb[0].mxu0 %v4155
      %v4353 = vpop.f32.mrb[0].mxu0
      %v4354 = vadd.f32 0.0, %v4353
      %v4355 = vpop.f32.mrb[0].mxu0
      %v4356 = vpop.f32.mrb[0].mxu0
      %v4357 = vadd.f32 0.0, %v4356
      %v4358 = vpop.f32.mrb[0].mxu0
      %4359 = vmatprep.mubr.bf16.mxu0 0
      %4360 = vmatmul.mubr.bf16.gmra.mrb[0].mxu0 %v4156
      %v4361 = vpop.f32.mrb[0].mxu0
      %v4362 = vadd.f32 0.0, %v4361
      %v4363 = vpop.f32.mrb[0].mxu0
      %v4364 = vpop.f32.mrb[0].mxu0
      %v4365 = vadd.f32 0.0, %v4364
      %v4366 = vpop.f32.mrb[0].mxu0
      %4367 = vmatprep.mubr.bf16.mxu0 0
      %4368 = vmatmul.mubr.bf16.gmra.mrb[0].mxu0 %v4157
      %v4369 = vpop.f32.mrb[0].mxu0
      %v4370 = vadd.f32 0.0, %v4369
      %v4371 = vpop.f32.mrb[0].mxu0
      %v4372 = vpop.f32.mrb[0].mxu0
      %v4373 = vadd.f32 0.0, %v4372
      %v4374 = vpop.f32.mrb[0].mxu0
      %4375 = vmatprep.mubr.bf16.mxu0 0
      %4376 = vmatmul.mubr.bf16.gmra.mrb[0].mxu0 %v4158
      %v4377 = vpop.f32.mrb[0].mxu0
      %v4378 = vadd.f32 0.0, %v4377
      %v4379 = vpop.f32.mrb[0].mxu0
      %v4380 = vpop.f32.mrb[0].mxu0
      %v4381 = vadd.f32 0.0, %v4380
      %v4382 = vpop.f32.mrb[0].mxu0
      %4383 = vdwg.mxu0
      %v4384 = vadd.f32 %v3886, %v4258
      %v4385 = vadd.f32 %v3887, %v4261
      %v4386 = vadd.f32 %v3888, %v4266
      %v4387 = vadd.f32 %v3889, %v4269
      %v4388 = vadd.f32 %v3890, %v4274
      %v4389 = vadd.f32 %v3891, %v4277
      %v4390 = vadd.f32 %v3892, %v4282
      %v4391 = vadd.f32 %v3893, %v4285
      %v4392 = vadd.f32 %v3894, %v4290
      %v4393 = vadd.f32 %v3895, %v4293
      %v4394 = vadd.f32 %v3896, %v4298
      %v4395 = vadd.f32 %v3897, %v4301
      %v4396 = vadd.f32 %v3898, %v4306
      %v4397 = vadd.f32 %v3899, %v4309
      %v4398 = vadd.f32 %v3900, %v4314
      %v4399 = vadd.f32 %v3901, %v4317
      %v4400 = vadd.f32 %v3902, %v4322
      %v4401 = vadd.f32 %v3903, %v4325
      %v4402 = vadd.f32 %v3904, %v4330
      %v4403 = vadd.f32 %v3905, %v4333
      %v4404 = vadd.f32 %v3906, %v4338
      %v4405 = vadd.f32 %v3907, %v4341
      %v4406 = vadd.f32 %v3908, %v4346
      %v4407 = vadd.f32 %v3909, %v4349
      %v4408 = vadd.f32 %v3910, %v4354
      %v4409 = vadd.f32 %v3911, %v4357
      %v4410 = vadd.f32 %v3912, %v4362
      %v4411 = vadd.f32 %v3913, %v4365
      %v4412 = vadd.f32 %v3914, %v4370
      %v4413 = vadd.f32 %v3915, %v4373
      %v4414 = vadd.f32 %v3916, %v4378
      %v4415 = vadd.f32 %v3917, %v4381
      %s4416 = scalar_lea.vmem [#allocation2], 24
      %v4417 = vld [vmem:[%s4416] sm:$0xf]
      %v4418 = vld [vmem:[%s4416 + $0x4] sm:$0xf]
      %v4419 = vld [vmem:[%s4416 + $0xc] sm:$0xf]
      %v4420 = vld [vmem:[%s4416 + $0x10] sm:$0xf]
      %v4421 = vld [vmem:[%s4416 + $0x18] sm:$0xf]
      %v4422 = vld [vmem:[%s4416 + $0x1c] sm:$0xf]
      %v4423 = vld [vmem:[%s4416 + $0x24] sm:$0xf]
      %v4424 = vld [vmem:[%s4416 + $0x28] sm:$0xf]
      %v4425 = vld [vmem:[%s4416 + $0x30] sm:$0xf]
      %v4426 = vld [vmem:[%s4416 + $0x34] sm:$0xf]
      %v4427 = vld [vmem:[%s4416 + $0x3c] sm:$0xf]
      %v4428 = vld [vmem:[%s4416 + $0x40] sm:$0xf]
      %v4429 = vld [vmem:[%s4416 + $0x48] sm:$0xf]
      %v4430 = vld [vmem:[%s4416 + $0x4c] sm:$0xf]
      %v4431 = vld [vmem:[%s4416 + $0x54] sm:$0xf]
      %v4432 = vld [vmem:[%s4416 + $0x58] sm:$0xf]
      %v4433 = vld [vmem:[%s4416 + $0x60] sm:$0xf]
      %v4434 = vld [vmem:[%s4416 + $0x64] sm:$0xf]
      %v4435 = vld [vmem:[%s4416 + $0x6c] sm:$0xf]
      %v4436 = vld [vmem:[%s4416 + $0x70] sm:$0xf]
      %v4437 = vld [vmem:[%s4416 + $0x78] sm:$0xf]
      %v4438 = vld [vmem:[%s4416 + $0x7c] sm:$0xf]
      %v4439 = vld [vmem:[%s4416 + $0x84] sm:$0xf]
      %v4440 = vld [vmem:[%s4416 + $0x88] sm:$0xf]
      %v4441 = vld [vmem:[%s4416 + $0x90] sm:$0xf]
      %v4442 = vld [vmem:[%s4416 + $0x94] sm:$0xf]
      %v4443 = vld [vmem:[%s4416 + $0x9c] sm:$0xf]
      %v4444 = vld [vmem:[%s4416 + $0xa0] sm:$0xf]
      %v4445 = vld [vmem:[%s4416 + $0xa8] sm:$0xf]
      %v4446 = vld [vmem:[%s4416 + $0xac] sm:$0xf]
      %v4447 = vld [vmem:[%s4416 + $0xb4] sm:$0xf]
      %v4448 = vld [vmem:[%s4416 + $0xb8] sm:$0xf]
      %s4449 = scalar_lea.vmem %s3, 384
      %v4450 = vld [vmem:[%s4449] sm:$0xf]
      %v4451 = vld [vmem:[%s4449 + $0x4] sm:$0xf]
      %v4452 = vld [vmem:[%s4449 + $0x8] sm:$0xf]
      %v4453 = vld [vmem:[%s4449 + $0xc] sm:$0xf]
      %v4454 = vld [vmem:[%s4449 + $0x10] sm:$0xf]
      %v4455 = vld [vmem:[%s4449 + $0x14] sm:$0xf]
      %v4456 = vld [vmem:[%s4449 + $0x18] sm:$0xf]
      %v4457 = vld [vmem:[%s4449 + $0x1c] sm:$0xf]
      %v4458 = vld [vmem:[%s4449 + $0x20] sm:$0xf]
      %v4459 = vld [vmem:[%s4449 + $0x24] sm:$0xf]
      %v4460 = vld [vmem:[%s4449 + $0x28] sm:$0xf]
      %v4461 = vld [vmem:[%s4449 + $0x2c] sm:$0xf]
      %v4462 = vld [vmem:[%s4449 + $0x30] sm:$0xf]
      %v4463 = vld [vmem:[%s4449 + $0x34] sm:$0xf]
      %v4464 = vld [vmem:[%s4449 + $0x38] sm:$0xf]
      %v4465 = vld [vmem:[%s4449 + $0x3c] sm:$0xf]
      %v4498 = vunpack.c.l.b16 %v4417
      %v4499 = vunpack.c.l.b16 %v4418
      %v4500 = vunpack.c.l.b16 %v4419
      %v4501 = vunpack.c.l.b16 %v4420
      %v4502 = vunpack.c.l.b16 %v4421
      %v4503 = vunpack.c.l.b16 %v4422
      %v4504 = vunpack.c.l.b16 %v4423
      %v4505 = vunpack.c.l.b16 %v4424
      %v4506 = vunpack.c.l.b16 %v4425
      %v4507 = vunpack.c.l.b16 %v4426
      %v4508 = vunpack.c.l.b16 %v4427
      %v4509 = vunpack.c.l.b16 %v4428
      %v4510 = vunpack.c.l.b16 %v4429
      %v4511 = vunpack.c.l.b16 %v4430
      %v4512 = vunpack.c.l.b16 %v4431
      %v4513 = vunpack.c.l.b16 %v4432
      %v4514 = vunpack.c.l.b16 %v4433
      %v4515 = vunpack.c.l.b16 %v4434
      %v4516 = vunpack.c.l.b16 %v4435
      %v4517 = vunpack.c.l.b16 %v4436
      %v4518 = vunpack.c.l.b16 %v4437
      %v4519 = vunpack.c.l.b16 %v4438
      %v4520 = vunpack.c.l.b16 %v4439
      %v4521 = vunpack.c.l.b16 %v4440
      %v4522 = vunpack.c.l.b16 %v4441
      %v4523 = vunpack.c.l.b16 %v4442
      %v4524 = vunpack.c.l.b16 %v4443
      %v4525 = vunpack.c.l.b16 %v4444
      %v4526 = vunpack.c.l.b16 %v4445
      %v4527 = vunpack.c.l.b16 %v4446
      %v4528 = vunpack.c.l.b16 %v4447
      %v4529 = vunpack.c.l.b16 %v4448
      %v4530 = vpack.c.b16 %v4499, %v4498
      %v4531 = vpack.c.b16 %v4501, %v4500
      %v4532 = vpack.c.b16 %v4503, %v4502
      %v4533 = vpack.c.b16 %v4505, %v4504
      %v4534 = vpack.c.b16 %v4507, %v4506
      %v4535 = vpack.c.b16 %v4509, %v4508
      %v4536 = vpack.c.b16 %v4511, %v4510
      %v4537 = vpack.c.b16 %v4513, %v4512
      %v4538 = vpack.c.b16 %v4515, %v4514
      %v4539 = vpack.c.b16 %v4517, %v4516
      %v4540 = vpack.c.b16 %v4519, %v4518
      %v4541 = vpack.c.b16 %v4521, %v4520
      %v4542 = vpack.c.b16 %v4523, %v4522
      %v4543 = vpack.c.b16 %v4525, %v4524
      %v4544 = vpack.c.b16 %v4527, %v4526
      %v4545 = vpack.c.b16 %v4529, %v4528
      %v4578 = vunpack.c.l.b16 %v4450
      %v4579 = vunpack.c.l.b16 %v4451
      %v4580 = vunpack.c.l.b16 %v4452
      %v4581 = vunpack.c.l.b16 %v4453
      %v4582 = vunpack.c.l.b16 %v4454
      %v4583 = vunpack.c.l.b16 %v4455
      %v4584 = vunpack.c.l.b16 %v4456
      %v4585 = vunpack.c.l.b16 %v4457
      %v4586 = vunpack.c.l.b16 %v4458
      %v4587 = vunpack.c.l.b16 %v4459
      %v4588 = vunpack.c.l.b16 %v4460
      %v4589 = vunpack.c.l.b16 %v4461
      %v4590 = vunpack.c.l.b16 %v4462
      %v4591 = vunpack.c.l.b16 %v4463
      %v4592 = vunpack.c.l.b16 %v4464
      %v4593 = vunpack.c.l.b16 %v4465
      %v4594 = vpack.c.b16 %v4579, %v4578
      %v4595 = vpack.c.b16 %v4581, %v4580
      %v4596 = vpack.c.b16 %v4583, %v4582
      %v4597 = vpack.c.b16 %v4585, %v4584
      %v4598 = vpack.c.b16 %v4587, %v4586
      %v4599 = vpack.c.b16 %v4589, %v4588
      %v4600 = vpack.c.b16 %v4591, %v4590
      %v4601 = vpack.c.b16 %v4593, %v4592
      %4610 = vmatprep.subr.bf16.mxu0 0
      %4611 = vmatpush1.bf16.msra.mxu0 %v4594
      %4612 = vmatprep.subr.bf16.mxu0 0
      %4613 = vmatpush1.bf16.msra.mxu0 %v4595
      %4614 = vmatprep.subr.bf16.mxu0 0
      %4615 = vmatpush1.bf16.msra.mxu0 %v4596
      %4616 = vmatprep.subr.bf16.mxu0 0
      %4617 = vmatpush1.bf16.msra.mxu0 %v4597
      %4618 = vmatprep.subr.bf16.mxu0 0
      %4619 = vmatpush1.bf16.msra.mxu0 %v4598
      %4620 = vmatprep.subr.bf16.mxu0 0
      %4621 = vmatpush1.bf16.msra.mxu0 %v4599
      %4622 = vmatprep.subr.bf16.mxu0 0
      %4623 = vmatpush1.bf16.msra.mxu0 %v4600
      %4624 = vmatprep.subr.bf16.mxu0 0
      %4625 = vmatpush1.bf16.msra.mxu0 %v4601
      %4626 = vmatprep.subr.bf16.mxu0 0
      %4627 = vmatpush1.bf16.msra.mxu0 0
      %4628 = vmatprep.subr.bf16.mxu0 0
      %4629 = vmatpush1.bf16.msra.mxu0 0
      %4630 = vmatprep.subr.bf16.mxu0 0
      %4631 = vmatpush1.bf16.msra.mxu0 0
      %4632 = vmatprep.subr.bf16.mxu0 0
      %4633 = vmatpush1.bf16.msra.mxu0 0
      %4634 = vmatprep.subr.bf16.mxu0 0
      %4635 = vmatpush1.bf16.msra.mxu0 0
      %4636 = vmatprep.subr.bf16.mxu0 0
      %4637 = vmatpush1.bf16.msra.mxu0 0
      %4638 = vmatprep.subr.bf16.mxu0 0
      %4639 = vmatpush1.bf16.msra.mxu0 0
      %4640 = vmatprep.subr.bf16.mxu0 0
      %4641 = vmatpush1.bf16.msra.mxu0 0
      %4642 = vmatprep.mubr.bf16.mxu0 0
      %4643 = vmatmul.mubr.bf16.gmra.mrb[0].mxu0 %v4530
      %v4644 = vpop.f32.mrb[0].mxu0
      %v4645 = vadd.f32 0.0, %v4644
      %v4646 = vpop.f32.mrb[0].mxu0
      %v4647 = vpop.f32.mrb[0].mxu0
      %v4648 = vadd.f32 0.0, %v4647
      %v4649 = vpop.f32.mrb[0].mxu0
      %4650 = vmatprep.mubr.bf16.mxu0 0
      %4651 = vmatmul.mubr.bf16.gmra.mrb[0].mxu0 %v4531
      %v4652 = vpop.f32.mrb[0].mxu0
      %v4653 = vadd.f32 0.0, %v4652
      %v4654 = vpop.f32.mrb[0].mxu0
      %v4655 = vpop.f32.mrb[0].mxu0
      %v4656 = vadd.f32 0.0, %v4655
      %v4657 = vpop.f32.mrb[0].mxu0
      %4658 = vmatprep.mubr.bf16.mxu0 0
      %4659 = vmatmul.mubr.bf16.gmra.mrb[0].mxu0 %v4532
      %v4660 = vpop.f32.mrb[0].mxu0
      %v4661 = vadd.f32 0.0, %v4660
      %v4662 = vpop.f32.mrb[0].mxu0
      %v4663 = vpop.f32.mrb[0].mxu0
      %v4664 = vadd.f32 0.0, %v4663
      %v4665 = vpop.f32.mrb[0].mxu0
      %4666 = vmatprep.mubr.bf16.mxu0 0
      %4667 = vmatmul.mubr.bf16.gmra.mrb[0].mxu0 %v4533
      %v4668 = vpop.f32.mrb[0].mxu0
      %v4669 = vadd.f32 0.0, %v4668
      %v4670 = vpop.f32.mrb[0].mxu0
      %v4671 = vpop.f32.mrb[0].mxu0
      %v4672 = vadd.f32 0.0, %v4671
      %v4673 = vpop.f32.mrb[0].mxu0
      %4674 = vmatprep.mubr.bf16.mxu0 0
      %4675 = vmatmul.mubr.bf16.gmra.mrb[0].mxu0 %v4534
      %v4676 = vpop.f32.mrb[0].mxu0
      %v4677 = vadd.f32 0.0, %v4676
      %v4678 = vpop.f32.mrb[0].mxu0
      %v4679 = vpop.f32.mrb[0].mxu0
      %v4680 = vadd.f32 0.0, %v4679
      %v4681 = vpop.f32.mrb[0].mxu0
      %4682 = vmatprep.mubr.bf16.mxu0 0
      %4683 = vmatmul.mubr.bf16.gmra.mrb[0].mxu0 %v4535
      %v4684 = vpop.f32.mrb[0].mxu0
      %v4685 = vadd.f32 0.0, %v4684
      %v4686 = vpop.f32.mrb[0].mxu0
      %v4687 = vpop.f32.mrb[0].mxu0
      %v4688 = vadd.f32 0.0, %v4687
      %v4689 = vpop.f32.mrb[0].mxu0
      %4690 = vmatprep.mubr.bf16.mxu0 0
      %4691 = vmatmul.mubr.bf16.gmra.mrb[0].mxu0 %v4536
      %v4692 = vpop.f32.mrb[0].mxu0
      %v4693 = vadd.f32 0.0, %v4692
      %v4694 = vpop.f32.mrb[0].mxu0
      %v4695 = vpop.f32.mrb[0].mxu0
      %v4696 = vadd.f32 0.0, %v4695
      %v4697 = vpop.f32.mrb[0].mxu0
      %4698 = vmatprep.mubr.bf16.mxu0 0
      %4699 = vmatmul.mubr.bf16.gmra.mrb[0].mxu0 %v4537
      %v4700 = vpop.f32.mrb[0].mxu0
      %v4701 = vadd.f32 0.0, %v4700
      %v4702 = vpop.f32.mrb[0].mxu0
      %v4703 = vpop.f32.mrb[0].mxu0
      %v4704 = vadd.f32 0.0, %v4703
      %v4705 = vpop.f32.mrb[0].mxu0
      %4706 = vmatprep.mubr.bf16.mxu0 0
      %4707 = vmatmul.mubr.bf16.gmra.mrb[0].mxu0 %v4538
      %v4708 = vpop.f32.mrb[0].mxu0
      %v4709 = vadd.f32 0.0, %v4708
      %v4710 = vpop.f32.mrb[0].mxu0
      %v4711 = vpop.f32.mrb[0].mxu0
      %v4712 = vadd.f32 0.0, %v4711
      %v4713 = vpop.f32.mrb[0].mxu0
      %4714 = vmatprep.mubr.bf16.mxu0 0
      %4715 = vmatmul.mubr.bf16.gmra.mrb[0].mxu0 %v4539
      %v4716 = vpop.f32.mrb[0].mxu0
      %v4717 = vadd.f32 0.0, %v4716
      %v4718 = vpop.f32.mrb[0].mxu0
      %v4719 = vpop.f32.mrb[0].mxu0
      %v4720 = vadd.f32 0.0, %v4719
      %v4721 = vpop.f32.mrb[0].mxu0
      %4722 = vmatprep.mubr.bf16.mxu0 0
      %4723 = vmatmul.mubr.bf16.gmra.mrb[0].mxu0 %v4540
      %v4724 = vpop.f32.mrb[0].mxu0
      %v4725 = vadd.f32 0.0, %v4724
      %v4726 = vpop.f32.mrb[0].mxu0
      %v4727 = vpop.f32.mrb[0].mxu0
      %v4728 = vadd.f32 0.0, %v4727
      %v4729 = vpop.f32.mrb[0].mxu0
      %4730 = vmatprep.mubr.bf16.mxu0 0
      %4731 = vmatmul.mubr.bf16.gmra.mrb[0].mxu0 %v4541
      %v4732 = vpop.f32.mrb[0].mxu0
      %v4733 = vadd.f32 0.0, %v4732
      %v4734 = vpop.f32.mrb[0].mxu0
      %v4735 = vpop.f32.mrb[0].mxu0
      %v4736 = vadd.f32 0.0, %v4735
      %v4737 = vpop.f32.mrb[0].mxu0
      %4738 = vmatprep.mubr.bf16.mxu0 0
      %4739 = vmatmul.mubr.bf16.gmra.mrb[0].mxu0 %v4542
      %v4740 = vpop.f32.mrb[0].mxu0
      %v4741 = vadd.f32 0.0, %v4740
      %v4742 = vpop.f32.mrb[0].mxu0
      %v4743 = vpop.f32.mrb[0].mxu0
      %v4744 = vadd.f32 0.0, %v4743
      %v4745 = vpop.f32.mrb[0].mxu0
      %4746 = vmatprep.mubr.bf16.mxu0 0
      %4747 = vmatmul.mubr.bf16.gmra.mrb[0].mxu0 %v4543
      %v4748 = vpop.f32.mrb[0].mxu0
      %v4749 = vadd.f32 0.0, %v4748
      %v4750 = vpop.f32.mrb[0].mxu0
      %v4751 = vpop.f32.mrb[0].mxu0
      %v4752 = vadd.f32 0.0, %v4751
      %v4753 = vpop.f32.mrb[0].mxu0
      %4754 = vmatprep.mubr.bf16.mxu0 0
      %4755 = vmatmul.mubr.bf16.gmra.mrb[0].mxu0 %v4544
      %v4756 = vpop.f32.mrb[0].mxu0
      %v4757 = vadd.f32 0.0, %v4756
      %v4758 = vpop.f32.mrb[0].mxu0
      %v4759 = vpop.f32.mrb[0].mxu0
      %v4760 = vadd.f32 0.0, %v4759
      %v4761 = vpop.f32.mrb[0].mxu0
      %4762 = vmatprep.mubr.bf16.mxu0 0
      %4763 = vmatmul.mubr.bf16.gmra.mrb[0].mxu0 %v4545
      %v4764 = vpop.f32.mrb[0].mxu0
      %v4765 = vadd.f32 0.0, %v4764
      %v4766 = vpop.f32.mrb[0].mxu0
      %v4767 = vpop.f32.mrb[0].mxu0
      %v4768 = vadd.f32 0.0, %v4767
      %v4769 = vpop.f32.mrb[0].mxu0
      %4770 = vdwg.mxu0
      %v4771 = vadd.f32 %v4384, %v4645
      %v4772 = vadd.f32 %v4385, %v4648
      %v4773 = vadd.f32 %v4386, %v4653
      %v4774 = vadd.f32 %v4387, %v4656
      %v4775 = vadd.f32 %v4388, %v4661
      %v4776 = vadd.f32 %v4389, %v4664
      %v4777 = vadd.f32 %v4390, %v4669
      %v4778 = vadd.f32 %v4391, %v4672
      %v4779 = vadd.f32 %v4392, %v4677
      %v4780 = vadd.f32 %v4393, %v4680
      %v4781 = vadd.f32 %v4394, %v4685
      %v4782 = vadd.f32 %v4395, %v4688
      %v4783 = vadd.f32 %v4396, %v4693
      %v4784 = vadd.f32 %v4397, %v4696
      %v4785 = vadd.f32 %v4398, %v4701
      %v4786 = vadd.f32 %v4399, %v4704
      %v4787 = vadd.f32 %v4400, %v4709
      %v4788 = vadd.f32 %v4401, %v4712
      %v4789 = vadd.f32 %v4402, %v4717
      %v4790 = vadd.f32 %v4403, %v4720
      %v4791 = vadd.f32 %v4404, %v4725
      %v4792 = vadd.f32 %v4405, %v4728
      %v4793 = vadd.f32 %v4406, %v4733
      %v4794 = vadd.f32 %v4407, %v4736
      %v4795 = vadd.f32 %v4408, %v4741
      %v4796 = vadd.f32 %v4409, %v4744
      %v4797 = vadd.f32 %v4410, %v4749
      %v4798 = vadd.f32 %v4411, %v4752
      %v4799 = vadd.f32 %v4412, %v4757
      %v4800 = vadd.f32 %v4413, %v4760
      %v4801 = vadd.f32 %v4414, %v4765
      %v4802 = vadd.f32 %v4415, %v4768
      %v4803 = vld [vmem:[%s4416] sm:$0xf]
      %v4804 = vld [vmem:[%s4416 + $0x4] sm:$0xf]
      %v4805 = vld [vmem:[%s4416 + $0x8] sm:$0x1]
      %v4806 = vld [vmem:[%s4416 + $0xc] sm:$0xf]
      %v4807 = vld [vmem:[%s4416 + $0x10] sm:$0xf]
      %v4808 = vld [vmem:[%s4416 + $0x14] sm:$0x1]
      %v4809 = vld [vmem:[%s4416 + $0x18] sm:$0xf]
      %v4810 = vld [vmem:[%s4416 + $0x1c] sm:$0xf]
      %v4811 = vld [vmem:[%s4416 + $0x20] sm:$0x1]
      %v4812 = vld [vmem:[%s4416 + $0x24] sm:$0xf]
      %v4813 = vld [vmem:[%s4416 + $0x28] sm:$0xf]
      %v4814 = vld [vmem:[%s4416 + $0x2c] sm:$0x1]
      %v4815 = vld [vmem:[%s4416 + $0x30] sm:$0xf]
      %v4816 = vld [vmem:[%s4416 + $0x34] sm:$0xf]
      %v4817 = vld [vmem:[%s4416 + $0x38] sm:$0x1]
      %v4818 = vld [vmem:[%s4416 + $0x3c] sm:$0xf]
      %v4819 = vld [vmem:[%s4416 + $0x40] sm:$0xf]
      %v4820 = vld [vmem:[%s4416 + $0x44] sm:$0x1]
      %v4821 = vld [vmem:[%s4416 + $0x48] sm:$0xf]
      %v4822 = vld [vmem:[%s4416 + $0x4c] sm:$0xf]
      %v4823 = vld [vmem:[%s4416 + $0x50] sm:$0x1]
      %v4824 = vld [vmem:[%s4416 + $0x54] sm:$0xf]
      %v4825 = vld [vmem:[%s4416 + $0x58] sm:$0xf]
      %v4826 = vld [vmem:[%s4416 + $0x5c] sm:$0x1]
      %v4827 = vld [vmem:[%s4416 + $0x60] sm:$0xf]
      %v4828 = vld [vmem:[%s4416 + $0x64] sm:$0xf]
      %v4829 = vld [vmem:[%s4416 + $0x68] sm:$0x1]
      %v4830 = vld [vmem:[%s4416 + $0x6c] sm:$0xf]
      %v4831 = vld [vmem:[%s4416 + $0x70] sm:$0xf]
      %v4832 = vld [vmem:[%s4416 + $0x74] sm:$0x1]
      %v4833 = vld [vmem:[%s4416 + $0x78] sm:$0xf]
      %v4834 = vld [vmem:[%s4416 + $0x7c] sm:$0xf]
      %v4835 = vld [vmem:[%s4416 + $0x80] sm:$0x1]
      %v4836 = vld [vmem:[%s4416 + $0x84] sm:$0xf]
      %v4837 = vld [vmem:[%s4416 + $0x88] sm:$0xf]
      %v4838 = vld [vmem:[%s4416 + $0x8c] sm:$0x1]
      %v4839 = vld [vmem:[%s4416 + $0x90] sm:$0xf]
      %v4840 = vld [vmem:[%s4416 + $0x94] sm:$0xf]
      %v4841 = vld [vmem:[%s4416 + $0x98] sm:$0x1]
      %v4842 = vld [vmem:[%s4416 + $0x9c] sm:$0xf]
      %v4843 = vld [vmem:[%s4416 + $0xa0] sm:$0xf]
      %v4844 = vld [vmem:[%s4416 + $0xa4] sm:$0x1]
      %v4845 = vld [vmem:[%s4416 + $0xa8] sm:$0xf]
      %v4846 = vld [vmem:[%s4416 + $0xac] sm:$0xf]
      %v4847 = vld [vmem:[%s4416 + $0xb0] sm:$0x1]
      %v4848 = vld [vmem:[%s4416 + $0xb4] sm:$0xf]
      %v4849 = vld [vmem:[%s4416 + $0xb8] sm:$0xf]
      %v4850 = vld [vmem:[%s4416 + $0xbc] sm:$0x1]
      %v4852 = vshrl.u32 %v4803, 16
      %v4854 = vrot.slane %v4852, 4
      %v4855 = vshll.u32 %v4803, 16
      %v4857 = vrot.slane %v4855, 5
      %v4858 = vor.u32 %v4854, %v4857
      %v4859 = vrot.slane %v4858, 4
      %v4861 = vshll.u32 %v4804, 16
      %v4863 = vrot.slane %v4861, 5
      %v4864 = vsel %vm1313, %v4859, %v4863
      %v4865 = vshrl.u32 %v4804, 16
      %v4867 = vrot.slane %v4865, 4
      %v4868 = vor.u32 %v4867, %v4863
      %v4869 = vrot.slane %v4868, 4
      %v4871 = vshll.u32 %v4805, 16
      %v4873 = vrot.slane %v4871, 5
      %v4874 = vsel %vm1313, %v4869, %v4873
      %v4876 = vshrl.u32 %v4806, 16
      %v4878 = vrot.slane %v4876, 4
      %v4879 = vshll.u32 %v4806, 16
      %v4881 = vrot.slane %v4879, 5
      %v4882 = vor.u32 %v4878, %v4881
      %v4883 = vrot.slane %v4882, 4
      %v4885 = vshll.u32 %v4807, 16
      %v4887 = vrot.slane %v4885, 5
      %v4888 = vsel %vm1313, %v4883, %v4887
      %v4889 = vshrl.u32 %v4807, 16
      %v4891 = vrot.slane %v4889, 4
      %v4892 = vor.u32 %v4891, %v4887
      %v4893 = vrot.slane %v4892, 4
      %v4895 = vshll.u32 %v4808, 16
      %v4897 = vrot.slane %v4895, 5
      %v4898 = vsel %vm1313, %v4893, %v4897
      %v4900 = vshrl.u32 %v4809, 16
      %v4902 = vrot.slane %v4900, 4
      %v4903 = vshll.u32 %v4809, 16
      %v4905 = vrot.slane %v4903, 5
      %v4906 = vor.u32 %v4902, %v4905
      %v4907 = vrot.slane %v4906, 4
      %v4909 = vshll.u32 %v4810, 16
      %v4911 = vrot.slane %v4909, 5
      %v4912 = vsel %vm1313, %v4907, %v4911
      %v4913 = vshrl.u32 %v4810, 16
      %v4915 = vrot.slane %v4913, 4
      %v4916 = vor.u32 %v4915, %v4911
      %v4917 = vrot.slane %v4916, 4
      %v4919 = vshll.u32 %v4811, 16
      %v4921 = vrot.slane %v4919, 5
      %v4922 = vsel %vm1313, %v4917, %v4921
      %v4924 = vshrl.u32 %v4812, 16
      %v4926 = vrot.slane %v4924, 4
      %v4927 = vshll.u32 %v4812, 16
      %v4929 = vrot.slane %v4927, 5
      %v4930 = vor.u32 %v4926, %v4929
      %v4931 = vrot.slane %v4930, 4
      %v4933 = vshll.u32 %v4813, 16
      %v4935 = vrot.slane %v4933, 5
      %v4936 = vsel %vm1313, %v4931, %v4935
      %v4937 = vshrl.u32 %v4813, 16
      %v4939 = vrot.slane %v4937, 4
      %v4940 = vor.u32 %v4939, %v4935
      %v4941 = vrot.slane %v4940, 4
      %v4943 = vshll.u32 %v4814, 16
      %v4945 = vrot.slane %v4943, 5
      %v4946 = vsel %vm1313, %v4941, %v4945
      %v4948 = vshrl.u32 %v4815, 16
      %v4950 = vrot.slane %v4948, 4
      %v4951 = vshll.u32 %v4815, 16
      %v4953 = vrot.slane %v4951, 5
      %v4954 = vor.u32 %v4950, %v4953
      %v4955 = vrot.slane %v4954, 4
      %v4957 = vshll.u32 %v4816, 16
      %v4959 = vrot.slane %v4957, 5
      %v4960 = vsel %vm1313, %v4955, %v4959
      %v4961 = vshrl.u32 %v4816, 16
      %v4963 = vrot.slane %v4961, 4
      %v4964 = vor.u32 %v4963, %v4959
      %v4965 = vrot.slane %v4964, 4
      %v4967 = vshll.u32 %v4817, 16
      %v4969 = vrot.slane %v4967, 5
      %v4970 = vsel %vm1313, %v4965, %v4969
      %v4972 = vshrl.u32 %v4818, 16
      %v4974 = vrot.slane %v4972, 4
      %v4975 = vshll.u32 %v4818, 16
      %v4977 = vrot.slane %v4975, 5
      %v4978 = vor.u32 %v4974, %v4977
      %v4979 = vrot.slane %v4978, 4
      %v4981 = vshll.u32 %v4819, 16
      %v4983 = vrot.slane %v4981, 5
      %v4984 = vsel %vm1313, %v4979, %v4983
      %v4985 = vshrl.u32 %v4819, 16
      %v4987 = vrot.slane %v4985, 4
      %v4988 = vor.u32 %v4987, %v4983
      %v4989 = vrot.slane %v4988, 4
      %v4991 = vshll.u32 %v4820, 16
      %v4993 = vrot.slane %v4991, 5
      %v4994 = vsel %vm1313, %v4989, %v4993
      %v4996 = vshrl.u32 %v4821, 16
      %v4998 = vrot.slane %v4996, 4
      %v4999 = vshll.u32 %v4821, 16
      %v5001 = vrot.slane %v4999, 5
      %v5002 = vor.u32 %v4998, %v5001
      %v5003 = vrot.slane %v5002, 4
      %v5005 = vshll.u32 %v4822, 16
      %v5007 = vrot.slane %v5005, 5
      %v5008 = vsel %vm1313, %v5003, %v5007
      %v5009 = vshrl.u32 %v4822, 16
      %v5011 = vrot.slane %v5009, 4
      %v5012 = vor.u32 %v5011, %v5007
      %v5013 = vrot.slane %v5012, 4
      %v5015 = vshll.u32 %v4823, 16
      %v5017 = vrot.slane %v5015, 5
      %v5018 = vsel %vm1313, %v5013, %v5017
      %v5020 = vshrl.u32 %v4824, 16
      %v5022 = vrot.slane %v5020, 4
      %v5023 = vshll.u32 %v4824, 16
      %v5025 = vrot.slane %v5023, 5
      %v5026 = vor.u32 %v5022, %v5025
      %v5027 = vrot.slane %v5026, 4
      %v5029 = vshll.u32 %v4825, 16
      %v5031 = vrot.slane %v5029, 5
      %v5032 = vsel %vm1313, %v5027, %v5031
      %v5033 = vshrl.u32 %v4825, 16
      %v5035 = vrot.slane %v5033, 4
      %v5036 = vor.u32 %v5035, %v5031
      %v5037 = vrot.slane %v5036, 4
      %v5039 = vshll.u32 %v4826, 16
      %v5041 = vrot.slane %v5039, 5
      %v5042 = vsel %vm1313, %v5037, %v5041
      %v5044 = vshrl.u32 %v4827, 16
      %v5046 = vrot.slane %v5044, 4
      %v5047 = vshll.u32 %v4827, 16
      %v5049 = vrot.slane %v5047, 5
      %v5050 = vor.u32 %v5046, %v5049
      %v5051 = vrot.slane %v5050, 4
      %v5053 = vshll.u32 %v4828, 16
      %v5055 = vrot.slane %v5053, 5
      %v5056 = vsel %vm1313, %v5051, %v5055
      %v5057 = vshrl.u32 %v4828, 16
      %v5059 = vrot.slane %v5057, 4
      %v5060 = vor.u32 %v5059, %v5055
      %v5061 = vrot.slane %v5060, 4
      %v5063 = vshll.u32 %v4829, 16
      %v5065 = vrot.slane %v5063, 5
      %v5066 = vsel %vm1313, %v5061, %v5065
      %v5068 = vshrl.u32 %v4830, 16
      %v5070 = vrot.slane %v5068, 4
      %v5071 = vshll.u32 %v4830, 16
      %v5073 = vrot.slane %v5071, 5
      %v5074 = vor.u32 %v5070, %v5073
      %v5075 = vrot.slane %v5074, 4
      %v5077 = vshll.u32 %v4831, 16
      %v5079 = vrot.slane %v5077, 5
      %v5080 = vsel %vm1313, %v5075, %v5079
      %v5081 = vshrl.u32 %v4831, 16
      %v5083 = vrot.slane %v5081, 4
      %v5084 = vor.u32 %v5083, %v5079
      %v5085 = vrot.slane %v5084, 4
      %v5087 = vshll.u32 %v4832, 16
      %v5089 = vrot.slane %v5087, 5
      %v5090 = vsel %vm1313, %v5085, %v5089
      %v5092 = vshrl.u32 %v4833, 16
      %v5094 = vrot.slane %v5092, 4
      %v5095 = vshll.u32 %v4833, 16
      %v5097 = vrot.slane %v5095, 5
      %v5098 = vor.u32 %v5094, %v5097
      %v5099 = vrot.slane %v5098, 4
      %v5101 = vshll.u32 %v4834, 16
      %v5103 = vrot.slane %v5101, 5
      %v5104 = vsel %vm1313, %v5099, %v5103
      %v5105 = vshrl.u32 %v4834, 16
      %v5107 = vrot.slane %v5105, 4
      %v5108 = vor.u32 %v5107, %v5103
      %v5109 = vrot.slane %v5108, 4
      %v5111 = vshll.u32 %v4835, 16
      %v5113 = vrot.slane %v5111, 5
      %v5114 = vsel %vm1313, %v5109, %v5113
      %v5116 = vshrl.u32 %v4836, 16
      %v5118 = vrot.slane %v5116, 4
      %v5119 = vshll.u32 %v4836, 16
      %v5121 = vrot.slane %v5119, 5
      %v5122 = vor.u32 %v5118, %v5121
      %v5123 = vrot.slane %v5122, 4
      %v5125 = vshll.u32 %v4837, 16
      %v5127 = vrot.slane %v5125, 5
      %v5128 = vsel %vm1313, %v5123, %v5127
      %v5129 = vshrl.u32 %v4837, 16
      %v5131 = vrot.slane %v5129, 4
      %v5132 = vor.u32 %v5131, %v5127
      %v5133 = vrot.slane %v5132, 4
      %v5135 = vshll.u32 %v4838, 16
      %v5137 = vrot.slane %v5135, 5
      %v5138 = vsel %vm1313, %v5133, %v5137
      %v5140 = vshrl.u32 %v4839, 16
      %v5142 = vrot.slane %v5140, 4
      %v5143 = vshll.u32 %v4839, 16
      %v5145 = vrot.slane %v5143, 5
      %v5146 = vor.u32 %v5142, %v5145
      %v5147 = vrot.slane %v5146, 4
      %v5149 = vshll.u32 %v4840, 16
      %v5151 = vrot.slane %v5149, 5
      %v5152 = vsel %vm1313, %v5147, %v5151
      %v5153 = vshrl.u32 %v4840, 16
      %v5155 = vrot.slane %v5153, 4
      %v5156 = vor.u32 %v5155, %v5151
      %v5157 = vrot.slane %v5156, 4
      %v5159 = vshll.u32 %v4841, 16
      %v5161 = vrot.slane %v5159, 5
      %v5162 = vsel %vm1313, %v5157, %v5161
      %v5164 = vshrl.u32 %v4842, 16
      %v5166 = vrot.slane %v5164, 4
      %v5167 = vshll.u32 %v4842, 16
      %v5169 = vrot.slane %v5167, 5
      %v5170 = vor.u32 %v5166, %v5169
      %v5171 = vrot.slane %v5170, 4
      %v5173 = vshll.u32 %v4843, 16
      %v5175 = vrot.slane %v5173, 5
      %v5176 = vsel %vm1313, %v5171, %v5175
      %v5177 = vshrl.u32 %v4843, 16
      %v5179 = vrot.slane %v5177, 4
      %v5180 = vor.u32 %v5179, %v5175
      %v5181 = vrot.slane %v5180, 4
      %v5183 = vshll.u32 %v4844, 16
      %v5185 = vrot.slane %v5183, 5
      %v5186 = vsel %vm1313, %v5181, %v5185
      %v5188 = vshrl.u32 %v4845, 16
      %v5190 = vrot.slane %v5188, 4
      %v5191 = vshll.u32 %v4845, 16
      %v5193 = vrot.slane %v5191, 5
      %v5194 = vor.u32 %v5190, %v5193
      %v5195 = vrot.slane %v5194, 4
      %v5197 = vshll.u32 %v4846, 16
      %v5199 = vrot.slane %v5197, 5
      %v5200 = vsel %vm1313, %v5195, %v5199
      %v5201 = vshrl.u32 %v4846, 16
      %v5203 = vrot.slane %v5201, 4
      %v5204 = vor.u32 %v5203, %v5199
      %v5205 = vrot.slane %v5204, 4
      %v5207 = vshll.u32 %v4847, 16
      %v5209 = vrot.slane %v5207, 5
      %v5210 = vsel %vm1313, %v5205, %v5209
      %v5212 = vshrl.u32 %v4848, 16
      %v5214 = vrot.slane %v5212, 4
      %v5215 = vshll.u32 %v4848, 16
      %v5217 = vrot.slane %v5215, 5
      %v5218 = vor.u32 %v5214, %v5217
      %v5219 = vrot.slane %v5218, 4
      %v5221 = vshll.u32 %v4849, 16
      %v5223 = vrot.slane %v5221, 5
      %v5224 = vsel %vm1313, %v5219, %v5223
      %v5225 = vshrl.u32 %v4849, 16
      %v5227 = vrot.slane %v5225, 4
      %v5228 = vor.u32 %v5227, %v5223
      %v5229 = vrot.slane %v5228, 4
      %v5231 = vshll.u32 %v4850, 16
      %v5233 = vrot.slane %v5231, 5
      %v5234 = vsel %vm1313, %v5229, %v5233
      %s5235 = scalar_lea.vmem %s3, 448
      %v5236 = vld [vmem:[%s5235] sm:$0xf]
      %v5237 = vld [vmem:[%s5235 + $0x4] sm:$0xf]
      %v5238 = vld [vmem:[%s5235 + $0x8] sm:$0xf]
      %v5239 = vld [vmem:[%s5235 + $0xc] sm:$0xf]
      %v5240 = vld [vmem:[%s5235 + $0x10] sm:$0xf]
      %v5241 = vld [vmem:[%s5235 + $0x14] sm:$0xf]
      %v5242 = vld [vmem:[%s5235 + $0x18] sm:$0xf]
      %v5243 = vld [vmem:[%s5235 + $0x1c] sm:$0xf]
      %v5244 = vld [vmem:[%s5235 + $0x20] sm:$0xf]
      %v5245 = vld [vmem:[%s5235 + $0x24] sm:$0xf]
      %v5246 = vld [vmem:[%s5235 + $0x28] sm:$0xf]
      %v5247 = vld [vmem:[%s5235 + $0x2c] sm:$0xf]
      %v5248 = vld [vmem:[%s5235 + $0x30] sm:$0xf]
      %v5249 = vld [vmem:[%s5235 + $0x34] sm:$0xf]
      %v5250 = vld [vmem:[%s5235 + $0x38] sm:$0xf]
      %v5251 = vld [vmem:[%s5235 + $0x3c] sm:$0xf]
      %v5252 = vunpack.c.l.b16 %v4864
      %v5253 = vunpack.c.l.b16 %v4874
      %v5254 = vunpack.c.l.b16 %v4888
      %v5255 = vunpack.c.l.b16 %v4898
      %v5256 = vunpack.c.l.b16 %v4912
      %v5257 = vunpack.c.l.b16 %v4922
      %v5258 = vunpack.c.l.b16 %v4936
      %v5259 = vunpack.c.l.b16 %v4946
      %v5260 = vunpack.c.l.b16 %v4960
      %v5261 = vunpack.c.l.b16 %v4970
      %v5262 = vunpack.c.l.b16 %v4984
      %v5263 = vunpack.c.l.b16 %v4994
      %v5264 = vunpack.c.l.b16 %v5008
      %v5265 = vunpack.c.l.b16 %v5018
      %v5266 = vunpack.c.l.b16 %v5032
      %v5267 = vunpack.c.l.b16 %v5042
      %v5268 = vunpack.c.l.b16 %v5056
      %v5269 = vunpack.c.l.b16 %v5066
      %v5270 = vunpack.c.l.b16 %v5080
      %v5271 = vunpack.c.l.b16 %v5090
      %v5272 = vunpack.c.l.b16 %v5104
      %v5273 = vunpack.c.l.b16 %v5114
      %v5274 = vunpack.c.l.b16 %v5128
      %v5275 = vunpack.c.l.b16 %v5138
      %v5276 = vunpack.c.l.b16 %v5152
      %v5277 = vunpack.c.l.b16 %v5162
      %v5278 = vunpack.c.l.b16 %v5176
      %v5279 = vunpack.c.l.b16 %v5186
      %v5280 = vunpack.c.l.b16 %v5200
      %v5281 = vunpack.c.l.b16 %v5210
      %v5282 = vunpack.c.l.b16 %v5224
      %v5283 = vunpack.c.l.b16 %v5234
      %v5284 = vpack.c.b16 %v5253, %v5252
      %v5285 = vpack.c.b16 %v5255, %v5254
      %v5286 = vpack.c.b16 %v5257, %v5256
      %v5287 = vpack.c.b16 %v5259, %v5258
      %v5288 = vpack.c.b16 %v5261, %v5260
      %v5289 = vpack.c.b16 %v5263, %v5262
      %v5290 = vpack.c.b16 %v5265, %v5264
      %v5291 = vpack.c.b16 %v5267, %v5266
      %v5292 = vpack.c.b16 %v5269, %v5268
      %v5293 = vpack.c.b16 %v5271, %v5270
      %v5294 = vpack.c.b16 %v5273, %v5272
      %v5295 = vpack.c.b16 %v5275, %v5274
      %v5296 = vpack.c.b16 %v5277, %v5276
      %v5297 = vpack.c.b16 %v5279, %v5278
      %v5298 = vpack.c.b16 %v5281, %v5280
      %v5299 = vpack.c.b16 %v5283, %v5282
      %v5332 = vunpack.c.l.b16 %v5236
      %v5333 = vunpack.c.l.b16 %v5237
      %v5334 = vunpack.c.l.b16 %v5238
      %v5335 = vunpack.c.l.b16 %v5239
      %v5336 = vunpack.c.l.b16 %v5240
      %v5337 = vunpack.c.l.b16 %v5241
      %v5338 = vunpack.c.l.b16 %v5242
      %v5339 = vunpack.c.l.b16 %v5243
      %v5340 = vunpack.c.l.b16 %v5244
      %v5341 = vunpack.c.l.b16 %v5245
      %v5342 = vunpack.c.l.b16 %v5246
      %v5343 = vunpack.c.l.b16 %v5247
      %v5344 = vunpack.c.l.b16 %v5248
      %v5345 = vunpack.c.l.b16 %v5249
      %v5346 = vunpack.c.l.b16 %v5250
      %v5347 = vunpack.c.l.b16 %v5251
      %v5348 = vpack.c.b16 %v5333, %v5332
      %v5349 = vpack.c.b16 %v5335, %v5334
      %v5350 = vpack.c.b16 %v5337, %v5336
      %v5351 = vpack.c.b16 %v5339, %v5338
      %v5352 = vpack.c.b16 %v5341, %v5340
      %v5353 = vpack.c.b16 %v5343, %v5342
      %v5354 = vpack.c.b16 %v5345, %v5344
      %v5355 = vpack.c.b16 %v5347, %v5346
      %5364 = vmatprep.subr.bf16.mxu0 0
      %5365 = vmatpush1.bf16.msra.mxu0 %v5348
      %5366 = vmatprep.subr.bf16.mxu0 0
      %5367 = vmatpush1.bf16.msra.mxu0 %v5349
      %5368 = vmatprep.subr.bf16.mxu0 0
      %5369 = vmatpush1.bf16.msra.mxu0 %v5350
      %5370 = vmatprep.subr.bf16.mxu0 0
      %5371 = vmatpush1.bf16.msra.mxu0 %v5351
      %5372 = vmatprep.subr.bf16.mxu0 0
      %5373 = vmatpush1.bf16.msra.mxu0 %v5352
      %5374 = vmatprep.subr.bf16.mxu0 0
      %5375 = vmatpush1.bf16.msra.mxu0 %v5353
      %5376 = vmatprep.subr.bf16.mxu0 0
      %5377 = vmatpush1.bf16.msra.mxu0 %v5354
      %5378 = vmatprep.subr.bf16.mxu0 0
      %5379 = vmatpush1.bf16.msra.mxu0 %v5355
      %5380 = vmatprep.subr.bf16.mxu0 0
      %5381 = vmatpush1.bf16.msra.mxu0 0
      %5382 = vmatprep.subr.bf16.mxu0 0
      %5383 = vmatpush1.bf16.msra.mxu0 0
      %5384 = vmatprep.subr.bf16.mxu0 0
      %5385 = vmatpush1.bf16.msra.mxu0 0
      %5386 = vmatprep.subr.bf16.mxu0 0
      %5387 = vmatpush1.bf16.msra.mxu0 0
      %5388 = vmatprep.subr.bf16.mxu0 0
      %5389 = vmatpush1.bf16.msra.mxu0 0
      %5390 = vmatprep.subr.bf16.mxu0 0
      %5391 = vmatpush1.bf16.msra.mxu0 0
      %5392 = vmatprep.subr.bf16.mxu0 0
      %5393 = vmatpush1.bf16.msra.mxu0 0
      %5394 = vmatprep.subr.bf16.mxu0 0
      %5395 = vmatpush1.bf16.msra.mxu0 0
      %5396 = vmatprep.mubr.bf16.mxu0 0
      %5397 = vmatmul.mubr.bf16.gmra.mrb[0].mxu0 %v5284
      %v5398 = vpop.f32.mrb[0].mxu0
      %v5399 = vadd.f32 0.0, %v5398
      %v5400 = vpop.f32.mrb[0].mxu0
      %v5401 = vpop.f32.mrb[0].mxu0
      %v5402 = vadd.f32 0.0, %v5401
      %v5403 = vpop.f32.mrb[0].mxu0
      %5404 = vmatprep.mubr.bf16.mxu0 0
      %5405 = vmatmul.mubr.bf16.gmra.mrb[0].mxu0 %v5285
      %v5406 = vpop.f32.mrb[0].mxu0
      %v5407 = vadd.f32 0.0, %v5406
      %v5408 = vpop.f32.mrb[0].mxu0
      %v5409 = vpop.f32.mrb[0].mxu0
      %v5410 = vadd.f32 0.0, %v5409
      %v5411 = vpop.f32.mrb[0].mxu0
      %5412 = vmatprep.mubr.bf16.mxu0 0
      %5413 = vmatmul.mubr.bf16.gmra.mrb[0].mxu0 %v5286
      %v5414 = vpop.f32.mrb[0].mxu0
      %v5415 = vadd.f32 0.0, %v5414
      %v5416 = vpop.f32.mrb[0].mxu0
      %v5417 = vpop.f32.mrb[0].mxu0
      %v5418 = vadd.f32 0.0, %v5417
      %v5419 = vpop.f32.mrb[0].mxu0
      %5420 = vmatprep.mubr.bf16.mxu0 0
      %5421 = vmatmul.mubr.bf16.gmra.mrb[0].mxu0 %v5287
      %v5422 = vpop.f32.mrb[0].mxu0
      %v5423 = vadd.f32 0.0, %v5422
      %v5424 = vpop.f32.mrb[0].mxu0
      %v5425 = vpop.f32.mrb[0].mxu0
      %v5426 = vadd.f32 0.0, %v5425
      %v5427 = vpop.f32.mrb[0].mxu0
      %5428 = vmatprep.mubr.bf16.mxu0 0
      %5429 = vmatmul.mubr.bf16.gmra.mrb[0].mxu0 %v5288
      %v5430 = vpop.f32.mrb[0].mxu0
      %v5431 = vadd.f32 0.0, %v5430
      %v5432 = vpop.f32.mrb[0].mxu0
      %v5433 = vpop.f32.mrb[0].mxu0
      %v5434 = vadd.f32 0.0, %v5433
      %v5435 = vpop.f32.mrb[0].mxu0
      %5436 = vmatprep.mubr.bf16.mxu0 0
      %5437 = vmatmul.mubr.bf16.gmra.mrb[0].mxu0 %v5289
      %v5438 = vpop.f32.mrb[0].mxu0
      %v5439 = vadd.f32 0.0, %v5438
      %v5440 = vpop.f32.mrb[0].mxu0
      %v5441 = vpop.f32.mrb[0].mxu0
      %v5442 = vadd.f32 0.0, %v5441
      %v5443 = vpop.f32.mrb[0].mxu0
      %5444 = vmatprep.mubr.bf16.mxu0 0
      %5445 = vmatmul.mubr.bf16.gmra.mrb[0].mxu0 %v5290
      %v5446 = vpop.f32.mrb[0].mxu0
      %v5447 = vadd.f32 0.0, %v5446
      %v5448 = vpop.f32.mrb[0].mxu0
      %v5449 = vpop.f32.mrb[0].mxu0
      %v5450 = vadd.f32 0.0, %v5449
      %v5451 = vpop.f32.mrb[0].mxu0
      %5452 = vmatprep.mubr.bf16.mxu0 0
      %5453 = vmatmul.mubr.bf16.gmra.mrb[0].mxu0 %v5291
      %v5454 = vpop.f32.mrb[0].mxu0
      %v5455 = vadd.f32 0.0, %v5454
      %v5456 = vpop.f32.mrb[0].mxu0
      %v5457 = vpop.f32.mrb[0].mxu0
      %v5458 = vadd.f32 0.0, %v5457
      %v5459 = vpop.f32.mrb[0].mxu0
      %5460 = vmatprep.mubr.bf16.mxu0 0
      %5461 = vmatmul.mubr.bf16.gmra.mrb[0].mxu0 %v5292
      %v5462 = vpop.f32.mrb[0].mxu0
      %v5463 = vadd.f32 0.0, %v5462
      %v5464 = vpop.f32.mrb[0].mxu0
      %v5465 = vpop.f32.mrb[0].mxu0
      %v5466 = vadd.f32 0.0, %v5465
      %v5467 = vpop.f32.mrb[0].mxu0
      %5468 = vmatprep.mubr.bf16.mxu0 0
      %5469 = vmatmul.mubr.bf16.gmra.mrb[0].mxu0 %v5293
      %v5470 = vpop.f32.mrb[0].mxu0
      %v5471 = vadd.f32 0.0, %v5470
      %v5472 = vpop.f32.mrb[0].mxu0
      %v5473 = vpop.f32.mrb[0].mxu0
      %v5474 = vadd.f32 0.0, %v5473
      %v5475 = vpop.f32.mrb[0].mxu0
      %5476 = vmatprep.mubr.bf16.mxu0 0
      %5477 = vmatmul.mubr.bf16.gmra.mrb[0].mxu0 %v5294
      %v5478 = vpop.f32.mrb[0].mxu0
      %v5479 = vadd.f32 0.0, %v5478
      %v5480 = vpop.f32.mrb[0].mxu0
      %v5481 = vpop.f32.mrb[0].mxu0
      %v5482 = vadd.f32 0.0, %v5481
      %v5483 = vpop.f32.mrb[0].mxu0
      %5484 = vmatprep.mubr.bf16.mxu0 0
      %5485 = vmatmul.mubr.bf16.gmra.mrb[0].mxu0 %v5295
      %v5486 = vpop.f32.mrb[0].mxu0
      %v5487 = vadd.f32 0.0, %v5486
      %v5488 = vpop.f32.mrb[0].mxu0
      %v5489 = vpop.f32.mrb[0].mxu0
      %v5490 = vadd.f32 0.0, %v5489
      %v5491 = vpop.f32.mrb[0].mxu0
      %5492 = vmatprep.mubr.bf16.mxu0 0
      %5493 = vmatmul.mubr.bf16.gmra.mrb[0].mxu0 %v5296
      %v5494 = vpop.f32.mrb[0].mxu0
      %v5495 = vadd.f32 0.0, %v5494
      %v5496 = vpop.f32.mrb[0].mxu0
      %v5497 = vpop.f32.mrb[0].mxu0
      %v5498 = vadd.f32 0.0, %v5497
      %v5499 = vpop.f32.mrb[0].mxu0
      %5500 = vmatprep.mubr.bf16.mxu0 0
      %5501 = vmatmul.mubr.bf16.gmra.mrb[0].mxu0 %v5297
      %v5502 = vpop.f32.mrb[0].mxu0
      %v5503 = vadd.f32 0.0, %v5502
      %v5504 = vpop.f32.mrb[0].mxu0
      %v5505 = vpop.f32.mrb[0].mxu0
      %v5506 = vadd.f32 0.0, %v5505
      %v5507 = vpop.f32.mrb[0].mxu0
      %5508 = vmatprep.mubr.bf16.mxu0 0
      %5509 = vmatmul.mubr.bf16.gmra.mrb[0].mxu0 %v5298
      %v5510 = vpop.f32.mrb[0].mxu0
      %v5511 = vadd.f32 0.0, %v5510
      %v5512 = vpop.f32.mrb[0].mxu0
      %v5513 = vpop.f32.mrb[0].mxu0
      %v5514 = vadd.f32 0.0, %v5513
      %v5515 = vpop.f32.mrb[0].mxu0
      %5516 = vmatprep.mubr.bf16.mxu0 0
      %5517 = vmatmul.mubr.bf16.gmra.mrb[0].mxu0 %v5299
      %v5518 = vpop.f32.mrb[0].mxu0
      %v5519 = vadd.f32 0.0, %v5518
      %v5520 = vpop.f32.mrb[0].mxu0
      %v5521 = vpop.f32.mrb[0].mxu0
      %v5522 = vadd.f32 0.0, %v5521
      %v5523 = vpop.f32.mrb[0].mxu0
      %5524 = vdwg.mxu0
      %v5525 = vadd.f32 %v4771, %v5399
      %v5526 = vadd.f32 %v4772, %v5402
      %v5527 = vadd.f32 %v4773, %v5407
      %v5528 = vadd.f32 %v4774, %v5410
      %v5529 = vadd.f32 %v4775, %v5415
      %v5530 = vadd.f32 %v4776, %v5418
      %v5531 = vadd.f32 %v4777, %v5423
      %v5532 = vadd.f32 %v4778, %v5426
      %v5533 = vadd.f32 %v4779, %v5431
      %v5534 = vadd.f32 %v4780, %v5434
      %v5535 = vadd.f32 %v4781, %v5439
      %v5536 = vadd.f32 %v4782, %v5442
      %v5537 = vadd.f32 %v4783, %v5447
      %v5538 = vadd.f32 %v4784, %v5450
      %v5539 = vadd.f32 %v4785, %v5455
      %v5540 = vadd.f32 %v4786, %v5458
      %v5541 = vadd.f32 %v4787, %v5463
      %v5542 = vadd.f32 %v4788, %v5466
      %v5543 = vadd.f32 %v4789, %v5471
      %v5544 = vadd.f32 %v4790, %v5474
      %v5545 = vadd.f32 %v4791, %v5479
      %v5546 = vadd.f32 %v4792, %v5482
      %v5547 = vadd.f32 %v4793, %v5487
      %v5548 = vadd.f32 %v4794, %v5490
      %v5549 = vadd.f32 %v4795, %v5495
      %v5550 = vadd.f32 %v4796, %v5498
      %v5551 = vadd.f32 %v4797, %v5503
      %v5552 = vadd.f32 %v4798, %v5506
      %v5553 = vadd.f32 %v4799, %v5511
      %v5554 = vadd.f32 %v4800, %v5514
      %v5555 = vadd.f32 %v4801, %v5519
      %v5556 = vadd.f32 %v4802, %v5522
      %v5557 = vld [vmem:[%s4416] sm:$0xe]
      %v5558 = vld [vmem:[%s4416 + $0xc] sm:$0xe]
      %v5559 = vld [vmem:[%s4416 + $0x18] sm:$0xe]
      %v5560 = vld [vmem:[%s4416 + $0x24] sm:$0xe]
      %v5561 = vld [vmem:[%s4416 + $0x30] sm:$0xe]
      %v5562 = vld [vmem:[%s4416 + $0x3c] sm:$0xe]
      %v5563 = vld [vmem:[%s4416 + $0x48] sm:$0xe]
      %v5564 = vld [vmem:[%s4416 + $0x54] sm:$0xe]
      %v5565 = vld [vmem:[%s4416 + $0x60] sm:$0xe]
      %v5566 = vld [vmem:[%s4416 + $0x6c] sm:$0xe]
      %v5567 = vld [vmem:[%s4416 + $0x78] sm:$0xe]
      %v5568 = vld [vmem:[%s4416 + $0x84] sm:$0xe]
      %v5569 = vld [vmem:[%s4416 + $0x90] sm:$0xe]
      %v5570 = vld [vmem:[%s4416 + $0x9c] sm:$0xe]
      %v5571 = vld [vmem:[%s4416 + $0xa8] sm:$0xe]
      %v5572 = vld [vmem:[%s4416 + $0xb4] sm:$0xe]
      %v5621 = vrot.slane %v5557, 5
      %v5622 = vrot.slane %v5621, 4
      %v5623 = vrot.slane %v4804, 5
      %v5624 = vsel %vm2343, %v5622, %v5623
      %v5625 = vrot.slane %v5623, 4
      %v5626 = vrot.slane %v4805, 5
      %v5627 = vsel %vm2343, %v5625, %v5626
      %v5628 = vrot.slane %v5558, 5
      %v5629 = vrot.slane %v5628, 4
      %v5630 = vrot.slane %v4807, 5
      %v5631 = vsel %vm2343, %v5629, %v5630
      %v5632 = vrot.slane %v5630, 4
      %v5633 = vrot.slane %v4808, 5
      %v5634 = vsel %vm2343, %v5632, %v5633
      %v5635 = vrot.slane %v5559, 5
      %v5636 = vrot.slane %v5635, 4
      %v5637 = vrot.slane %v4810, 5
      %v5638 = vsel %vm2343, %v5636, %v5637
      %v5639 = vrot.slane %v5637, 4
      %v5640 = vrot.slane %v4811, 5
      %v5641 = vsel %vm2343, %v5639, %v5640
      %v5642 = vrot.slane %v5560, 5
      %v5643 = vrot.slane %v5642, 4
      %v5644 = vrot.slane %v4813, 5
      %v5645 = vsel %vm2343, %v5643, %v5644
      %v5646 = vrot.slane %v5644, 4
      %v5647 = vrot.slane %v4814, 5
      %v5648 = vsel %vm2343, %v5646, %v5647
      %v5649 = vrot.slane %v5561, 5
      %v5650 = vrot.slane %v5649, 4
      %v5651 = vrot.slane %v4816, 5
      %v5652 = vsel %vm2343, %v5650, %v5651
      %v5653 = vrot.slane %v5651, 4
      %v5654 = vrot.slane %v4817, 5
      %v5655 = vsel %vm2343, %v5653, %v5654
      %v5656 = vrot.slane %v5562, 5
      %v5657 = vrot.slane %v5656, 4
      %v5658 = vrot.slane %v4819, 5
      %v5659 = vsel %vm2343, %v5657, %v5658
      %v5660 = vrot.slane %v5658, 4
      %v5661 = vrot.slane %v4820, 5
      %v5662 = vsel %vm2343, %v5660, %v5661
      %v5663 = vrot.slane %v5563, 5
      %v5664 = vrot.slane %v5663, 4
      %v5665 = vrot.slane %v4822, 5
      %v5666 = vsel %vm2343, %v5664, %v5665
      %v5667 = vrot.slane %v5665, 4
      %v5668 = vrot.slane %v4823, 5
      %v5669 = vsel %vm2343, %v5667, %v5668
      %v5670 = vrot.slane %v5564, 5
      %v5671 = vrot.slane %v5670, 4
      %v5672 = vrot.slane %v4825, 5
      %v5673 = vsel %vm2343, %v5671, %v5672
      %v5674 = vrot.slane %v5672, 4
      %v5675 = vrot.slane %v4826, 5
      %v5676 = vsel %vm2343, %v5674, %v5675
      %v5677 = vrot.slane %v5565, 5
      %v5678 = vrot.slane %v5677, 4
      %v5679 = vrot.slane %v4828, 5
      %v5680 = vsel %vm2343, %v5678, %v5679
      %v5681 = vrot.slane %v5679, 4
      %v5682 = vrot.slane %v4829, 5
      %v5683 = vsel %vm2343, %v5681, %v5682
      %v5684 = vrot.slane %v5566, 5
      %v5685 = vrot.slane %v5684, 4
      %v5686 = vrot.slane %v4831, 5
      %v5687 = vsel %vm2343, %v5685, %v5686
      %v5688 = vrot.slane %v5686, 4
      %v5689 = vrot.slane %v4832, 5
      %v5690 = vsel %vm2343, %v5688, %v5689
      %v5691 = vrot.slane %v5567, 5
      %v5692 = vrot.slane %v5691, 4
      %v5693 = vrot.slane %v4834, 5
      %v5694 = vsel %vm2343, %v5692, %v5693
      %v5695 = vrot.slane %v5693, 4
      %v5696 = vrot.slane %v4835, 5
      %v5697 = vsel %vm2343, %v5695, %v5696
      %v5698 = vrot.slane %v5568, 5
      %v5699 = vrot.slane %v5698, 4
      %v5700 = vrot.slane %v4837, 5
      %v5701 = vsel %vm2343, %v5699, %v5700
      %v5702 = vrot.slane %v5700, 4
      %v5703 = vrot.slane %v4838, 5
      %v5704 = vsel %vm2343, %v5702, %v5703
      %v5705 = vrot.slane %v5569, 5
      %v5706 = vrot.slane %v5705, 4
      %v5707 = vrot.slane %v4840, 5
      %v5708 = vsel %vm2343, %v5706, %v5707
      %v5709 = vrot.slane %v5707, 4
      %v5710 = vrot.slane %v4841, 5
      %v5711 = vsel %vm2343, %v5709, %v5710
      %v5712 = vrot.slane %v5570, 5
      %v5713 = vrot.slane %v5712, 4
      %v5714 = vrot.slane %v4843, 5
      %v5715 = vsel %vm2343, %v5713, %v5714
      %v5716 = vrot.slane %v5714, 4
      %v5717 = vrot.slane %v4844, 5
      %v5718 = vsel %vm2343, %v5716, %v5717
      %v5719 = vrot.slane %v5571, 5
      %v5720 = vrot.slane %v5719, 4
      %v5721 = vrot.slane %v4846, 5
      %v5722 = vsel %vm2343, %v5720, %v5721
      %v5723 = vrot.slane %v5721, 4
      %v5724 = vrot.slane %v4847, 5
      %v5725 = vsel %vm2343, %v5723, %v5724
      %v5726 = vrot.slane %v5572, 5
      %v5727 = vrot.slane %v5726, 4
      %v5728 = vrot.slane %v4849, 5
      %v5729 = vsel %vm2343, %v5727, %v5728
      %v5730 = vrot.slane %v5728, 4
      %v5731 = vrot.slane %v4850, 5
      %v5732 = vsel %vm2343, %v5730, %v5731
      %s5733 = scalar_lea.vmem %s3, 512
      %v5734 = vld [vmem:[%s5733] sm:$0xf]
      %v5735 = vld [vmem:[%s5733 + $0x4] sm:$0xf]
      %v5736 = vld [vmem:[%s5733 + $0x8] sm:$0xf]
      %v5737 = vld [vmem:[%s5733 + $0xc] sm:$0xf]
      %v5738 = vld [vmem:[%s5733 + $0x10] sm:$0xf]
      %v5739 = vld [vmem:[%s5733 + $0x14] sm:$0xf]
      %v5740 = vld [vmem:[%s5733 + $0x18] sm:$0xf]
      %v5741 = vld [vmem:[%s5733 + $0x1c] sm:$0xf]
      %v5742 = vld [vmem:[%s5733 + $0x20] sm:$0xf]
      %v5743 = vld [vmem:[%s5733 + $0x24] sm:$0xf]
      %v5744 = vld [vmem:[%s5733 + $0x28] sm:$0xf]
      %v5745 = vld [vmem:[%s5733 + $0x2c] sm:$0xf]
      %v5746 = vld [vmem:[%s5733 + $0x30] sm:$0xf]
      %v5747 = vld [vmem:[%s5733 + $0x34] sm:$0xf]
      %v5748 = vld [vmem:[%s5733 + $0x38] sm:$0xf]
      %v5749 = vld [vmem:[%s5733 + $0x3c] sm:$0xf]
      %v5750 = vunpack.c.l.b16 %v5624
      %v5751 = vunpack.c.l.b16 %v5627
      %v5752 = vunpack.c.l.b16 %v5631
      %v5753 = vunpack.c.l.b16 %v5634
      %v5754 = vunpack.c.l.b16 %v5638
      %v5755 = vunpack.c.l.b16 %v5641
      %v5756 = vunpack.c.l.b16 %v5645
      %v5757 = vunpack.c.l.b16 %v5648
      %v5758 = vunpack.c.l.b16 %v5652
      %v5759 = vunpack.c.l.b16 %v5655
      %v5760 = vunpack.c.l.b16 %v5659
      %v5761 = vunpack.c.l.b16 %v5662
      %v5762 = vunpack.c.l.b16 %v5666
      %v5763 = vunpack.c.l.b16 %v5669
      %v5764 = vunpack.c.l.b16 %v5673
      %v5765 = vunpack.c.l.b16 %v5676
      %v5766 = vunpack.c.l.b16 %v5680
      %v5767 = vunpack.c.l.b16 %v5683
      %v5768 = vunpack.c.l.b16 %v5687
      %v5769 = vunpack.c.l.b16 %v5690
      %v5770 = vunpack.c.l.b16 %v5694
      %v5771 = vunpack.c.l.b16 %v5697
      %v5772 = vunpack.c.l.b16 %v5701
      %v5773 = vunpack.c.l.b16 %v5704
      %v5774 = vunpack.c.l.b16 %v5708
      %v5775 = vunpack.c.l.b16 %v5711
      %v5776 = vunpack.c.l.b16 %v5715
      %v5777 = vunpack.c.l.b16 %v5718
      %v5778 = vunpack.c.l.b16 %v5722
      %v5779 = vunpack.c.l.b16 %v5725
      %v5780 = vunpack.c.l.b16 %v5729
      %v5781 = vunpack.c.l.b16 %v5732
      %v5782 = vpack.c.b16 %v5751, %v5750
      %v5783 = vpack.c.b16 %v5753, %v5752
      %v5784 = vpack.c.b16 %v5755, %v5754
      %v5785 = vpack.c.b16 %v5757, %v5756
      %v5786 = vpack.c.b16 %v5759, %v5758
      %v5787 = vpack.c.b16 %v5761, %v5760
      %v5788 = vpack.c.b16 %v5763, %v5762
      %v5789 = vpack.c.b16 %v5765, %v5764
      %v5790 = vpack.c.b16 %v5767, %v5766
      %v5791 = vpack.c.b16 %v5769, %v5768
      %v5792 = vpack.c.b16 %v5771, %v5770
      %v5793 = vpack.c.b16 %v5773, %v5772
      %v5794 = vpack.c.b16 %v5775, %v5774
      %v5795 = vpack.c.b16 %v5777, %v5776
      %v5796 = vpack.c.b16 %v5779, %v5778
      %v5797 = vpack.c.b16 %v5781, %v5780
      %v5830 = vunpack.c.l.b16 %v5734
      %v5831 = vunpack.c.l.b16 %v5735
      %v5832 = vunpack.c.l.b16 %v5736
      %v5833 = vunpack.c.l.b16 %v5737
      %v5834 = vunpack.c.l.b16 %v5738
      %v5835 = vunpack.c.l.b16 %v5739
      %v5836 = vunpack.c.l.b16 %v5740
      %v5837 = vunpack.c.l.b16 %v5741
      %v5838 = vunpack.c.l.b16 %v5742
      %v5839 = vunpack.c.l.b16 %v5743
      %v5840 = vunpack.c.l.b16 %v5744
      %v5841 = vunpack.c.l.b16 %v5745
      %v5842 = vunpack.c.l.b16 %v5746
      %v5843 = vunpack.c.l.b16 %v5747
      %v5844 = vunpack.c.l.b16 %v5748
      %v5845 = vunpack.c.l.b16 %v5749
      %v5846 = vpack.c.b16 %v5831, %v5830
      %v5847 = vpack.c.b16 %v5833, %v5832
      %v5848 = vpack.c.b16 %v5835, %v5834
      %v5849 = vpack.c.b16 %v5837, %v5836
      %v5850 = vpack.c.b16 %v5839, %v5838
      %v5851 = vpack.c.b16 %v5841, %v5840
      %v5852 = vpack.c.b16 %v5843, %v5842
      %v5853 = vpack.c.b16 %v5845, %v5844
      %5862 = vmatprep.subr.bf16.mxu0 0
      %5863 = vmatpush1.bf16.msra.mxu0 %v5846
      %5864 = vmatprep.subr.bf16.mxu0 0
      %5865 = vmatpush1.bf16.msra.mxu0 %v5847
      %5866 = vmatprep.subr.bf16.mxu0 0
      %5867 = vmatpush1.bf16.msra.mxu0 %v5848
      %5868 = vmatprep.subr.bf16.mxu0 0
      %5869 = vmatpush1.bf16.msra.mxu0 %v5849
      %5870 = vmatprep.subr.bf16.mxu0 0
      %5871 = vmatpush1.bf16.msra.mxu0 %v5850
      %5872 = vmatprep.subr.bf16.mxu0 0
      %5873 = vmatpush1.bf16.msra.mxu0 %v5851
      %5874 = vmatprep.subr.bf16.mxu0 0
      %5875 = vmatpush1.bf16.msra.mxu0 %v5852
      %5876 = vmatprep.subr.bf16.mxu0 0
      %5877 = vmatpush1.bf16.msra.mxu0 %v5853
      %5878 = vmatprep.subr.bf16.mxu0 0
      %5879 = vmatpush1.bf16.msra.mxu0 0
      %5880 = vmatprep.subr.bf16.mxu0 0
      %5881 = vmatpush1.bf16.msra.mxu0 0
      %5882 = vmatprep.subr.bf16.mxu0 0
      %5883 = vmatpush1.bf16.msra.mxu0 0
      %5884 = vmatprep.subr.bf16.mxu0 0
      %5885 = vmatpush1.bf16.msra.mxu0 0
      %5886 = vmatprep.subr.bf16.mxu0 0
      %5887 = vmatpush1.bf16.msra.mxu0 0
      %5888 = vmatprep.subr.bf16.mxu0 0
      %5889 = vmatpush1.bf16.msra.mxu0 0
      %5890 = vmatprep.subr.bf16.mxu0 0
      %5891 = vmatpush1.bf16.msra.mxu0 0
      %5892 = vmatprep.subr.bf16.mxu0 0
      %5893 = vmatpush1.bf16.msra.mxu0 0
      %5894 = vmatprep.mubr.bf16.mxu0 0
      %5895 = vmatmul.mubr.bf16.gmra.mrb[0].mxu0 %v5782
      %v5896 = vpop.f32.mrb[0].mxu0
      %v5897 = vadd.f32 0.0, %v5896
      %v5898 = vpop.f32.mrb[0].mxu0
      %v5899 = vpop.f32.mrb[0].mxu0
      %v5900 = vadd.f32 0.0, %v5899
      %v5901 = vpop.f32.mrb[0].mxu0
      %5902 = vmatprep.mubr.bf16.mxu0 0
      %5903 = vmatmul.mubr.bf16.gmra.mrb[0].mxu0 %v5783
      %v5904 = vpop.f32.mrb[0].mxu0
      %v5905 = vadd.f32 0.0, %v5904
      %v5906 = vpop.f32.mrb[0].mxu0
      %v5907 = vpop.f32.mrb[0].mxu0
      %v5908 = vadd.f32 0.0, %v5907
      %v5909 = vpop.f32.mrb[0].mxu0
      %5910 = vmatprep.mubr.bf16.mxu0 0
      %5911 = vmatmul.mubr.bf16.gmra.mrb[0].mxu0 %v5784
      %v5912 = vpop.f32.mrb[0].mxu0
      %v5913 = vadd.f32 0.0, %v5912
      %v5914 = vpop.f32.mrb[0].mxu0
      %v5915 = vpop.f32.mrb[0].mxu0
      %v5916 = vadd.f32 0.0, %v5915
      %v5917 = vpop.f32.mrb[0].mxu0
      %5918 = vmatprep.mubr.bf16.mxu0 0
      %5919 = vmatmul.mubr.bf16.gmra.mrb[0].mxu0 %v5785
      %v5920 = vpop.f32.mrb[0].mxu0
      %v5921 = vadd.f32 0.0, %v5920
      %v5922 = vpop.f32.mrb[0].mxu0
      %v5923 = vpop.f32.mrb[0].mxu0
      %v5924 = vadd.f32 0.0, %v5923
      %v5925 = vpop.f32.mrb[0].mxu0
      %5926 = vmatprep.mubr.bf16.mxu0 0
      %5927 = vmatmul.mubr.bf16.gmra.mrb[0].mxu0 %v5786
      %v5928 = vpop.f32.mrb[0].mxu0
      %v5929 = vadd.f32 0.0, %v5928
      %v5930 = vpop.f32.mrb[0].mxu0
      %v5931 = vpop.f32.mrb[0].mxu0
      %v5932 = vadd.f32 0.0, %v5931
      %v5933 = vpop.f32.mrb[0].mxu0
      %5934 = vmatprep.mubr.bf16.mxu0 0
      %5935 = vmatmul.mubr.bf16.gmra.mrb[0].mxu0 %v5787
      %v5936 = vpop.f32.mrb[0].mxu0
      %v5937 = vadd.f32 0.0, %v5936
      %v5938 = vpop.f32.mrb[0].mxu0
      %v5939 = vpop.f32.mrb[0].mxu0
      %v5940 = vadd.f32 0.0, %v5939
      %v5941 = vpop.f32.mrb[0].mxu0
      %5942 = vmatprep.mubr.bf16.mxu0 0
      %5943 = vmatmul.mubr.bf16.gmra.mrb[0].mxu0 %v5788
      %v5944 = vpop.f32.mrb[0].mxu0
      %v5945 = vadd.f32 0.0, %v5944
      %v5946 = vpop.f32.mrb[0].mxu0
      %v5947 = vpop.f32.mrb[0].mxu0
      %v5948 = vadd.f32 0.0, %v5947
      %v5949 = vpop.f32.mrb[0].mxu0
      %5950 = vmatprep.mubr.bf16.mxu0 0
      %5951 = vmatmul.mubr.bf16.gmra.mrb[0].mxu0 %v5789
      %v5952 = vpop.f32.mrb[0].mxu0
      %v5953 = vadd.f32 0.0, %v5952
      %v5954 = vpop.f32.mrb[0].mxu0
      %v5955 = vpop.f32.mrb[0].mxu0
      %v5956 = vadd.f32 0.0, %v5955
      %v5957 = vpop.f32.mrb[0].mxu0
      %5958 = vmatprep.mubr.bf16.mxu0 0
      %5959 = vmatmul.mubr.bf16.gmra.mrb[0].mxu0 %v5790
      %v5960 = vpop.f32.mrb[0].mxu0
      %v5961 = vadd.f32 0.0, %v5960
      %v5962 = vpop.f32.mrb[0].mxu0
      %v5963 = vpop.f32.mrb[0].mxu0
      %v5964 = vadd.f32 0.0, %v5963
      %v5965 = vpop.f32.mrb[0].mxu0
      %5966 = vmatprep.mubr.bf16.mxu0 0
      %5967 = vmatmul.mubr.bf16.gmra.mrb[0].mxu0 %v5791
      %v5968 = vpop.f32.mrb[0].mxu0
      %v5969 = vadd.f32 0.0, %v5968
      %v5970 = vpop.f32.mrb[0].mxu0
      %v5971 = vpop.f32.mrb[0].mxu0
      %v5972 = vadd.f32 0.0, %v5971
      %v5973 = vpop.f32.mrb[0].mxu0
      %5974 = vmatprep.mubr.bf16.mxu0 0
      %5975 = vmatmul.mubr.bf16.gmra.mrb[0].mxu0 %v5792
      %v5976 = vpop.f32.mrb[0].mxu0
      %v5977 = vadd.f32 0.0, %v5976
      %v5978 = vpop.f32.mrb[0].mxu0
      %v5979 = vpop.f32.mrb[0].mxu0
      %v5980 = vadd.f32 0.0, %v5979
      %v5981 = vpop.f32.mrb[0].mxu0
      %5982 = vmatprep.mubr.bf16.mxu0 0
      %5983 = vmatmul.mubr.bf16.gmra.mrb[0].mxu0 %v5793
      %v5984 = vpop.f32.mrb[0].mxu0
      %v5985 = vadd.f32 0.0, %v5984
      %v5986 = vpop.f32.mrb[0].mxu0
      %v5987 = vpop.f32.mrb[0].mxu0
      %v5988 = vadd.f32 0.0, %v5987
      %v5989 = vpop.f32.mrb[0].mxu0
      %5990 = vmatprep.mubr.bf16.mxu0 0
      %5991 = vmatmul.mubr.bf16.gmra.mrb[0].mxu0 %v5794
      %v5992 = vpop.f32.mrb[0].mxu0
      %v5993 = vadd.f32 0.0, %v5992
      %v5994 = vpop.f32.mrb[0].mxu0
      %v5995 = vpop.f32.mrb[0].mxu0
      %v5996 = vadd.f32 0.0, %v5995
      %v5997 = vpop.f32.mrb[0].mxu0
      %5998 = vmatprep.mubr.bf16.mxu0 0
      %5999 = vmatmul.mubr.bf16.gmra.mrb[0].mxu0 %v5795
      %v6000 = vpop.f32.mrb[0].mxu0
      %v6001 = vadd.f32 0.0, %v6000
      %v6002 = vpop.f32.mrb[0].mxu0
      %v6003 = vpop.f32.mrb[0].mxu0
      %v6004 = vadd.f32 0.0, %v6003
      %v6005 = vpop.f32.mrb[0].mxu0
      %6006 = vmatprep.mubr.bf16.mxu0 0
      %6007 = vmatmul.mubr.bf16.gmra.mrb[0].mxu0 %v5796
      %v6008 = vpop.f32.mrb[0].mxu0
      %v6009 = vadd.f32 0.0, %v6008
      %v6010 = vpop.f32.mrb[0].mxu0
      %v6011 = vpop.f32.mrb[0].mxu0
      %v6012 = vadd.f32 0.0, %v6011
      %v6013 = vpop.f32.mrb[0].mxu0
      %6014 = vmatprep.mubr.bf16.mxu0 0
      %6015 = vmatmul.mubr.bf16.gmra.mrb[0].mxu0 %v5797
      %v6016 = vpop.f32.mrb[0].mxu0
      %v6017 = vadd.f32 0.0, %v6016
      %v6018 = vpop.f32.mrb[0].mxu0
      %v6019 = vpop.f32.mrb[0].mxu0
      %v6020 = vadd.f32 0.0, %v6019
      %v6021 = vpop.f32.mrb[0].mxu0
      %6022 = vdwg.mxu0
      %v6023 = vadd.f32 %v5525, %v5897
      %v6024 = vadd.f32 %v5526, %v5900
      %v6025 = vadd.f32 %v5527, %v5905
      %v6026 = vadd.f32 %v5528, %v5908
      %v6027 = vadd.f32 %v5529, %v5913
      %v6028 = vadd.f32 %v5530, %v5916
      %v6029 = vadd.f32 %v5531, %v5921
      %v6030 = vadd.f32 %v5532, %v5924
      %v6031 = vadd.f32 %v5533, %v5929
      %v6032 = vadd.f32 %v5534, %v5932
      %v6033 = vadd.f32 %v5535, %v5937
      %v6034 = vadd.f32 %v5536, %v5940
      %v6035 = vadd.f32 %v5537, %v5945
      %v6036 = vadd.f32 %v5538, %v5948
      %v6037 = vadd.f32 %v5539, %v5953
      %v6038 = vadd.f32 %v5540, %v5956
      %v6039 = vadd.f32 %v5541, %v5961
      %v6040 = vadd.f32 %v5542, %v5964
      %v6041 = vadd.f32 %v5543, %v5969
      %v6042 = vadd.f32 %v5544, %v5972
      %v6043 = vadd.f32 %v5545, %v5977
      %v6044 = vadd.f32 %v5546, %v5980
      %v6045 = vadd.f32 %v5547, %v5985
      %v6046 = vadd.f32 %v5548, %v5988
      %v6047 = vadd.f32 %v5549, %v5993
      %v6048 = vadd.f32 %v5550, %v5996
      %v6049 = vadd.f32 %v5551, %v6001
      %v6050 = vadd.f32 %v5552, %v6004
      %v6051 = vadd.f32 %v5553, %v6009
      %v6052 = vadd.f32 %v5554, %v6012
      %v6053 = vadd.f32 %v5555, %v6017
      %v6054 = vadd.f32 %v5556, %v6020
      %v6055 = vld [vmem:[%s4] sm:$0x1]
      %v6057 = vlaneseq
      %v6058 = vshrl.u32 %v6057, 7
      %v6059 = vsub.s32 0, %v6058
      %v6060 = vrot.slane %v6055, %v6059
      %v6062 = vadd.f32 %v6023, %v6060
      %v6063 = vadd.f32 %v6024, %v6060
      %v6064 = vadd.f32 %v6025, %v6060
      %v6065 = vadd.f32 %v6026, %v6060
      %v6066 = vadd.f32 %v6027, %v6060
      %v6067 = vadd.f32 %v6028, %v6060
      %v6068 = vadd.f32 %v6029, %v6060
      %v6069 = vadd.f32 %v6030, %v6060
      %v6070 = vadd.f32 %v6031, %v6060
      %v6071 = vadd.f32 %v6032, %v6060
      %v6072 = vadd.f32 %v6033, %v6060
      %v6073 = vadd.f32 %v6034, %v6060
      %v6074 = vadd.f32 %v6035, %v6060
      %v6075 = vadd.f32 %v6036, %v6060
      %v6076 = vadd.f32 %v6037, %v6060
      %v6077 = vadd.f32 %v6038, %v6060
      %v6078 = vadd.f32 %v6039, %v6060
      %v6079 = vadd.f32 %v6040, %v6060
      %v6080 = vadd.f32 %v6041, %v6060
      %v6081 = vadd.f32 %v6042, %v6060
      %v6082 = vadd.f32 %v6043, %v6060
      %v6083 = vadd.f32 %v6044, %v6060
      %v6084 = vadd.f32 %v6045, %v6060
      %v6085 = vadd.f32 %v6046, %v6060
      %v6086 = vadd.f32 %v6047, %v6060
      %v6087 = vadd.f32 %v6048, %v6060
      %v6088 = vadd.f32 %v6049, %v6060
      %v6089 = vadd.f32 %v6050, %v6060
      %v6090 = vadd.f32 %v6051, %v6060
      %v6091 = vadd.f32 %v6052, %v6060
      %v6092 = vadd.f32 %v6053, %v6060
      %v6093 = vadd.f32 %v6054, %v6060
      %vm6094 = vcmp.ge.f32.partialorder %v6062, 0.0
      %vm6095 = vcmp.ge.f32.partialorder %v6063, 0.0
      %vm6096 = vcmp.ge.f32.partialorder %v6064, 0.0
      %vm6097 = vcmp.ge.f32.partialorder %v6065, 0.0
      %vm6098 = vcmp.ge.f32.partialorder %v6066, 0.0
      %vm6099 = vcmp.ge.f32.partialorder %v6067, 0.0
      %vm6100 = vcmp.ge.f32.partialorder %v6068, 0.0
      %vm6101 = vcmp.ge.f32.partialorder %v6069, 0.0
      %vm6102 = vcmp.ge.f32.partialorder %v6070, 0.0
      %vm6103 = vcmp.ge.f32.partialorder %v6071, 0.0
      %vm6104 = vcmp.ge.f32.partialorder %v6072, 0.0
      %vm6105 = vcmp.ge.f32.partialorder %v6073, 0.0
      %vm6106 = vcmp.ge.f32.partialorder %v6074, 0.0
      %vm6107 = vcmp.ge.f32.partialorder %v6075, 0.0
      %vm6108 = vcmp.ge.f32.partialorder %v6076, 0.0
      %vm6109 = vcmp.ge.f32.partialorder %v6077, 0.0
      %vm6110 = vcmp.ge.f32.partialorder %v6078, 0.0
      %vm6111 = vcmp.ge.f32.partialorder %v6079, 0.0
      %vm6112 = vcmp.ge.f32.partialorder %v6080, 0.0
      %vm6113 = vcmp.ge.f32.partialorder %v6081, 0.0
      %vm6114 = vcmp.ge.f32.partialorder %v6082, 0.0
      %vm6115 = vcmp.ge.f32.partialorder %v6083, 0.0
      %vm6116 = vcmp.ge.f32.partialorder %v6084, 0.0
      %vm6117 = vcmp.ge.f32.partialorder %v6085, 0.0
      %vm6118 = vcmp.ge.f32.partialorder %v6086, 0.0
      %vm6119 = vcmp.ge.f32.partialorder %v6087, 0.0
      %vm6120 = vcmp.ge.f32.partialorder %v6088, 0.0
      %vm6121 = vcmp.ge.f32.partialorder %v6089, 0.0
      %vm6122 = vcmp.ge.f32.partialorder %v6090, 0.0
      %vm6123 = vcmp.ge.f32.partialorder %v6091, 0.0
      %vm6124 = vcmp.ge.f32.partialorder %v6092, 0.0
      %vm6125 = vcmp.ge.f32.partialorder %v6093, 0.0
      %v6126 = vmul.f32 %v6062, 0.01
      %v6127 = vmul.f32 %v6063, 0.01
      %v6128 = vmul.f32 %v6064, 0.01
      %v6129 = vmul.f32 %v6065, 0.01
      %v6130 = vmul.f32 %v6066, 0.01
      %v6131 = vmul.f32 %v6067, 0.01
      %v6132 = vmul.f32 %v6068, 0.01
      %v6133 = vmul.f32 %v6069, 0.01
      %v6134 = vmul.f32 %v6070, 0.01
      %v6135 = vmul.f32 %v6071, 0.01
      %v6136 = vmul.f32 %v6072, 0.01
      %v6137 = vmul.f32 %v6073, 0.01
      %v6138 = vmul.f32 %v6074, 0.01
      %v6139 = vmul.f32 %v6075, 0.01
      %v6140 = vmul.f32 %v6076, 0.01
      %v6141 = vmul.f32 %v6077, 0.01
      %v6142 = vmul.f32 %v6078, 0.01
      %v6143 = vmul.f32 %v6079, 0.01
      %v6144 = vmul.f32 %v6080, 0.01
      %v6145 = vmul.f32 %v6081, 0.01
      %v6146 = vmul.f32 %v6082, 0.01
      %v6147 = vmul.f32 %v6083, 0.01
      %v6148 = vmul.f32 %v6084, 0.01
      %v6149 = vmul.f32 %v6085, 0.01
      %v6150 = vmul.f32 %v6086, 0.01
      %v6151 = vmul.f32 %v6087, 0.01
      %v6152 = vmul.f32 %v6088, 0.01
      %v6153 = vmul.f32 %v6089, 0.01
      %v6154 = vmul.f32 %v6090, 0.01
      %v6155 = vmul.f32 %v6091, 0.01
      %v6156 = vmul.f32 %v6092, 0.01
      %v6157 = vmul.f32 %v6093, 0.01
      %v6158 = vsel %vm6094, %v6062, %v6126
      %v6159 = vsel %vm6095, %v6063, %v6127
      %v6160 = vsel %vm6096, %v6064, %v6128
      %v6161 = vsel %vm6097, %v6065, %v6129
      %v6162 = vsel %vm6098, %v6066, %v6130
      %v6163 = vsel %vm6099, %v6067, %v6131
      %v6164 = vsel %vm6100, %v6068, %v6132
      %v6165 = vsel %vm6101, %v6069, %v6133
      %v6166 = vsel %vm6102, %v6070, %v6134
      %v6167 = vsel %vm6103, %v6071, %v6135
      %v6168 = vsel %vm6104, %v6072, %v6136
      %v6169 = vsel %vm6105, %v6073, %v6137
      %v6170 = vsel %vm6106, %v6074, %v6138
      %v6171 = vsel %vm6107, %v6075, %v6139
      %v6172 = vsel %vm6108, %v6076, %v6140
      %v6173 = vsel %vm6109, %v6077, %v6141
      %v6174 = vsel %vm6110, %v6078, %v6142
      %v6175 = vsel %vm6111, %v6079, %v6143
      %v6176 = vsel %vm6112, %v6080, %v6144
      %v6177 = vsel %vm6113, %v6081, %v6145
      %v6178 = vsel %vm6114, %v6082, %v6146
      %v6179 = vsel %vm6115, %v6083, %v6147
      %v6180 = vsel %vm6116, %v6084, %v6148
      %v6181 = vsel %vm6117, %v6085, %v6149
      %v6182 = vsel %vm6118, %v6086, %v6150
      %v6183 = vsel %vm6119, %v6087, %v6151
      %v6184 = vsel %vm6120, %v6088, %v6152
      %v6185 = vsel %vm6121, %v6089, %v6153
      %v6186 = vsel %vm6122, %v6090, %v6154
      %v6187 = vsel %vm6123, %v6091, %v6155
      %v6188 = vsel %vm6124, %v6092, %v6156
      %v6189 = vsel %vm6125, %v6093, %v6157
      %v6190 = vpack.c.bf16 %v6159, %v6158
      %v6191 = vpack.c.bf16 %v6161, %v6160
      %v6192 = vpack.c.bf16 %v6163, %v6162
      %v6193 = vpack.c.bf16 %v6165, %v6164
      %v6194 = vpack.c.bf16 %v6167, %v6166
      %v6195 = vpack.c.bf16 %v6169, %v6168
      %v6196 = vpack.c.bf16 %v6171, %v6170
      %v6197 = vpack.c.bf16 %v6173, %v6172
      %v6198 = vpack.c.bf16 %v6175, %v6174
      %v6199 = vpack.c.bf16 %v6177, %v6176
      %v6200 = vpack.c.bf16 %v6179, %v6178
      %v6201 = vpack.c.bf16 %v6181, %v6180
      %v6202 = vpack.c.bf16 %v6183, %v6182
      %v6203 = vpack.c.bf16 %v6185, %v6184
      %v6204 = vpack.c.bf16 %v6187, %v6186
      %v6205 = vpack.c.bf16 %v6189, %v6188
      %v6206 = vld [vmem:[%s5] sm:$0xf]
      %v6207 = vld [vmem:[%s5 + $0x4] sm:$0xf]
      %v6208 = vld [vmem:[%s5 + $0x8] sm:$0xf]
      %v6209 = vld [vmem:[%s5 + $0xc] sm:$0xf]
      %v6210 = vld [vmem:[%s5 + $0x10] sm:$0xf]
      %v6211 = vld [vmem:[%s5 + $0x14] sm:$0xf]
      %v6212 = vld [vmem:[%s5 + $0x18] sm:$0xf]
      %v6213 = vld [vmem:[%s5 + $0x1c] sm:$0xf]
      %v6214 = vld [vmem:[%s6] sm:$0x1]
      %v6216 = vlaneseq
      %v6217 = vshrl.u32 %v6216, 7
      %v6218 = vsub.s32 0, %v6217
      %v6219 = vrot.slane %v6214, %v6218
      %v6229 = vunpack.c.l.b16 %v6206
      %v6230 = vunpack.c.l.b16 %v6207
      %v6231 = vunpack.c.l.b16 %v6208
      %v6232 = vunpack.c.l.b16 %v6209
      %v6233 = vunpack.c.l.b16 %v6210
      %v6234 = vunpack.c.l.b16 %v6211
      %v6235 = vunpack.c.l.b16 %v6212
      %v6236 = vunpack.c.l.b16 %v6213
      %v6237 = vpack.c.b16 %v6230, %v6229
      %v6238 = vpack.c.b16 %v6232, %v6231
      %v6239 = vpack.c.b16 %v6234, %v6233
      %v6240 = vpack.c.b16 %v6236, %v6235
      %vm6245 = vcmask 523264
      %v6247 = vsel %vm6245, %v6190, 0
      %v6250 = vsel %vm6245, %v6191, 0
      %v6253 = vsel %vm6245, %v6192, 0
      %v6256 = vsel %vm6245, %v6193, 0
      %v6259 = vsel %vm6245, %v6194, 0
      %v6262 = vsel %vm6245, %v6195, 0
      %v6265 = vsel %vm6245, %v6196, 0
      %v6268 = vsel %vm6245, %v6197, 0
      %v6271 = vsel %vm6245, %v6198, 0
      %v6274 = vsel %vm6245, %v6199, 0
      %v6277 = vsel %vm6245, %v6200, 0
      %v6280 = vsel %vm6245, %v6201, 0
      %v6283 = vsel %vm6245, %v6202, 0
      %v6286 = vsel %vm6245, %v6203, 0
      %v6289 = vsel %vm6245, %v6204, 0
      %v6292 = vsel %vm6245, %v6205, 0
      %6294 = vmatprep.subr.bf16.mxu0 0
      %6295 = vmatpush1.bf16.msra.mxu0 %v6237
      %6296 = vmatprep.subr.bf16.mxu0 0
      %6297 = vmatpush1.bf16.msra.mxu0 %v6238
      %6298 = vmatprep.subr.bf16.mxu0 0
      %6299 = vmatpush1.bf16.msra.mxu0 %v6239
      %6300 = vmatprep.subr.bf16.mxu0 0
      %6301 = vmatpush1.bf16.msra.mxu0 %v6240
      %6302 = vmatprep.subr.bf16.mxu0 0
      %6303 = vmatpush1.bf16.msra.mxu0 0
      %6304 = vmatprep.subr.bf16.mxu0 0
      %6305 = vmatpush1.bf16.msra.mxu0 0
      %6306 = vmatprep.subr.bf16.mxu0 0
      %6307 = vmatpush1.bf16.msra.mxu0 0
      %6308 = vmatprep.subr.bf16.mxu0 0
      %6309 = vmatpush1.bf16.msra.mxu0 0
      %6310 = vmatprep.subr.bf16.mxu0 0
      %6311 = vmatpush1.bf16.msra.mxu0 0
      %6312 = vmatprep.subr.bf16.mxu0 0
      %6313 = vmatpush1.bf16.msra.mxu0 0
      %6314 = vmatprep.subr.bf16.mxu0 0
      %6315 = vmatpush1.bf16.msra.mxu0 0
      %6316 = vmatprep.subr.bf16.mxu0 0
      %6317 = vmatpush1.bf16.msra.mxu0 0
      %6318 = vmatprep.subr.bf16.mxu0 0
      %6319 = vmatpush1.bf16.msra.mxu0 0
      %6320 = vmatprep.subr.bf16.mxu0 0
      %6321 = vmatpush1.bf16.msra.mxu0 0
      %6322 = vmatprep.subr.bf16.mxu0 0
      %6323 = vmatpush1.bf16.msra.mxu0 0
      %6324 = vmatprep.subr.bf16.mxu0 0
      %6325 = vmatpush1.bf16.msra.mxu0 0
      %6326 = vmatprep.mubr.bf16.mxu0 0
      %6327 = vmatmul.mubr.bf16.gmra.mrb[0].mxu0 %v6247
      %v6328 = vpop.f32.mrb[0].mxu0
      %v6329 = vadd.f32 %v6219, %v6328
      %v6330 = vpop.f32.mrb[0].mxu0
      %v6331 = vpop.f32.mrb[0].mxu0
      %v6332 = vadd.f32 %v6219, %v6331
      %v6333 = vpop.f32.mrb[0].mxu0
      %6334 = vmatprep.mubr.bf16.mxu0 0
      %6335 = vmatmul.mubr.bf16.gmra.mrb[0].mxu0 %v6250
      %v6336 = vpop.f32.mrb[0].mxu0
      %v6337 = vadd.f32 %v6219, %v6336
      %v6338 = vpop.f32.mrb[0].mxu0
      %v6339 = vpop.f32.mrb[0].mxu0
      %v6340 = vadd.f32 %v6219, %v6339
      %v6341 = vpop.f32.mrb[0].mxu0
      %6342 = vmatprep.mubr.bf16.mxu0 0
      %6343 = vmatmul.mubr.bf16.gmra.mrb[0].mxu0 %v6253
      %v6344 = vpop.f32.mrb[0].mxu0
      %v6345 = vadd.f32 %v6219, %v6344
      %v6346 = vpop.f32.mrb[0].mxu0
      %v6347 = vpop.f32.mrb[0].mxu0
      %v6348 = vadd.f32 %v6219, %v6347
      %v6349 = vpop.f32.mrb[0].mxu0
      %6350 = vmatprep.mubr.bf16.mxu0 0
      %6351 = vmatmul.mubr.bf16.gmra.mrb[0].mxu0 %v6256
      %v6352 = vpop.f32.mrb[0].mxu0
      %v6353 = vadd.f32 %v6219, %v6352
      %v6354 = vpop.f32.mrb[0].mxu0
      %v6355 = vpop.f32.mrb[0].mxu0
      %v6356 = vadd.f32 %v6219, %v6355
      %v6357 = vpop.f32.mrb[0].mxu0
      %6358 = vmatprep.mubr.bf16.mxu0 0
      %6359 = vmatmul.mubr.bf16.gmra.mrb[0].mxu0 %v6259
      %v6360 = vpop.f32.mrb[0].mxu0
      %v6361 = vadd.f32 %v6219, %v6360
      %v6362 = vpop.f32.mrb[0].mxu0
      %v6363 = vpop.f32.mrb[0].mxu0
      %v6364 = vadd.f32 %v6219, %v6363
      %v6365 = vpop.f32.mrb[0].mxu0
      %6366 = vmatprep.mubr.bf16.mxu0 0
      %6367 = vmatmul.mubr.bf16.gmra.mrb[0].mxu0 %v6262
      %v6368 = vpop.f32.mrb[0].mxu0
      %v6369 = vadd.f32 %v6219, %v6368
      %v6370 = vpop.f32.mrb[0].mxu0
      %v6371 = vpop.f32.mrb[0].mxu0
      %v6372 = vadd.f32 %v6219, %v6371
      %v6373 = vpop.f32.mrb[0].mxu0
      %6374 = vmatprep.mubr.bf16.mxu0 0
      %6375 = vmatmul.mubr.bf16.gmra.mrb[0].mxu0 %v6265
      %v6376 = vpop.f32.mrb[0].mxu0
      %v6377 = vadd.f32 %v6219, %v6376
      %v6378 = vpop.f32.mrb[0].mxu0
      %v6379 = vpop.f32.mrb[0].mxu0
      %v6380 = vadd.f32 %v6219, %v6379
      %v6381 = vpop.f32.mrb[0].mxu0
      %6382 = vmatprep.mubr.bf16.mxu0 0
      %6383 = vmatmul.mubr.bf16.gmra.mrb[0].mxu0 %v6268
      %v6384 = vpop.f32.mrb[0].mxu0
      %v6385 = vadd.f32 %v6219, %v6384
      %v6386 = vpop.f32.mrb[0].mxu0
      %v6387 = vpop.f32.mrb[0].mxu0
      %v6388 = vadd.f32 %v6219, %v6387
      %v6389 = vpop.f32.mrb[0].mxu0
      %6390 = vmatprep.mubr.bf16.mxu0 0
      %6391 = vmatmul.mubr.bf16.gmra.mrb[0].mxu0 %v6271
      %v6392 = vpop.f32.mrb[0].mxu0
      %v6393 = vadd.f32 %v6219, %v6392
      %v6394 = vpop.f32.mrb[0].mxu0
      %v6395 = vpop.f32.mrb[0].mxu0
      %v6396 = vadd.f32 %v6219, %v6395
      %v6397 = vpop.f32.mrb[0].mxu0
      %6398 = vmatprep.mubr.bf16.mxu0 0
      %6399 = vmatmul.mubr.bf16.gmra.mrb[0].mxu0 %v6274
      %v6400 = vpop.f32.mrb[0].mxu0
      %v6401 = vadd.f32 %v6219, %v6400
      %v6402 = vpop.f32.mrb[0].mxu0
      %v6403 = vpop.f32.mrb[0].mxu0
      %v6404 = vadd.f32 %v6219, %v6403
      %v6405 = vpop.f32.mrb[0].mxu0
      %6406 = vmatprep.mubr.bf16.mxu0 0
      %6407 = vmatmul.mubr.bf16.gmra.mrb[0].mxu0 %v6277
      %v6408 = vpop.f32.mrb[0].mxu0
      %v6409 = vadd.f32 %v6219, %v6408
      %v6410 = vpop.f32.mrb[0].mxu0
      %v6411 = vpop.f32.mrb[0].mxu0
      %v6412 = vadd.f32 %v6219, %v6411
      %v6413 = vpop.f32.mrb[0].mxu0
      %6414 = vmatprep.mubr.bf16.mxu0 0
      %6415 = vmatmul.mubr.bf16.gmra.mrb[0].mxu0 %v6280
      %v6416 = vpop.f32.mrb[0].mxu0
      %v6417 = vadd.f32 %v6219, %v6416
      %v6418 = vpop.f32.mrb[0].mxu0
      %v6419 = vpop.f32.mrb[0].mxu0
      %v6420 = vadd.f32 %v6219, %v6419
      %v6421 = vpop.f32.mrb[0].mxu0
      %6422 = vmatprep.mubr.bf16.mxu0 0
      %6423 = vmatmul.mubr.bf16.gmra.mrb[0].mxu0 %v6283
      %v6424 = vpop.f32.mrb[0].mxu0
      %v6425 = vadd.f32 %v6219, %v6424
      %v6426 = vpop.f32.mrb[0].mxu0
      %v6427 = vpop.f32.mrb[0].mxu0
      %v6428 = vadd.f32 %v6219, %v6427
      %v6429 = vpop.f32.mrb[0].mxu0
      %6430 = vmatprep.mubr.bf16.mxu0 0
      %6431 = vmatmul.mubr.bf16.gmra.mrb[0].mxu0 %v6286
      %v6432 = vpop.f32.mrb[0].mxu0
      %v6433 = vadd.f32 %v6219, %v6432
      %v6434 = vpop.f32.mrb[0].mxu0
      %v6435 = vpop.f32.mrb[0].mxu0
      %v6436 = vadd.f32 %v6219, %v6435
      %v6437 = vpop.f32.mrb[0].mxu0
      %6438 = vmatprep.mubr.bf16.mxu0 0
      %6439 = vmatmul.mubr.bf16.gmra.mrb[0].mxu0 %v6289
      %v6440 = vpop.f32.mrb[0].mxu0
      %v6441 = vadd.f32 %v6219, %v6440
      %v6442 = vpop.f32.mrb[0].mxu0
      %v6443 = vpop.f32.mrb[0].mxu0
      %v6444 = vadd.f32 %v6219, %v6443
      %v6445 = vpop.f32.mrb[0].mxu0
      %6446 = vmatprep.mubr.bf16.mxu0 0
      %6447 = vmatmul.mubr.bf16.gmra.mrb[0].mxu0 %v6292
      %v6448 = vpop.f32.mrb[0].mxu0
      %v6449 = vadd.f32 %v6219, %v6448
      %v6450 = vpop.f32.mrb[0].mxu0
      %v6451 = vpop.f32.mrb[0].mxu0
      %v6452 = vadd.f32 %v6219, %v6451
      %v6453 = vpop.f32.mrb[0].mxu0
      %6454 = vdwg.mxu0
      %vm6455 = vcmp.ge.f32.partialorder %v6329, 0.0
      %vm6456 = vcmp.ge.f32.partialorder %v6332, 0.0
      %vm6457 = vcmp.ge.f32.partialorder %v6337, 0.0
      %vm6458 = vcmp.ge.f32.partialorder %v6340, 0.0
      %vm6459 = vcmp.ge.f32.partialorder %v6345, 0.0
      %vm6460 = vcmp.ge.f32.partialorder %v6348, 0.0
      %vm6461 = vcmp.ge.f32.partialorder %v6353, 0.0
      %vm6462 = vcmp.ge.f32.partialorder %v6356, 0.0
      %vm6463 = vcmp.ge.f32.partialorder %v6361, 0.0
      %vm6464 = vcmp.ge.f32.partialorder %v6364, 0.0
      %vm6465 = vcmp.ge.f32.partialorder %v6369, 0.0
      %vm6466 = vcmp.ge.f32.partialorder %v6372, 0.0
      %vm6467 = vcmp.ge.f32.partialorder %v6377, 0.0
      %vm6468 = vcmp.ge.f32.partialorder %v6380, 0.0
      %vm6469 = vcmp.ge.f32.partialorder %v6385, 0.0
      %vm6470 = vcmp.ge.f32.partialorder %v6388, 0.0
      %vm6471 = vcmp.ge.f32.partialorder %v6393, 0.0
      %vm6472 = vcmp.ge.f32.partialorder %v6396, 0.0
      %vm6473 = vcmp.ge.f32.partialorder %v6401, 0.0
      %vm6474 = vcmp.ge.f32.partialorder %v6404, 0.0
      %vm6475 = vcmp.ge.f32.partialorder %v6409, 0.0
      %vm6476 = vcmp.ge.f32.partialorder %v6412, 0.0
      %vm6477 = vcmp.ge.f32.partialorder %v6417, 0.0
      %vm6478 = vcmp.ge.f32.partialorder %v6420, 0.0
      %vm6479 = vcmp.ge.f32.partialorder %v6425, 0.0
      %vm6480 = vcmp.ge.f32.partialorder %v6428, 0.0
      %vm6481 = vcmp.ge.f32.partialorder %v6433, 0.0
      %vm6482 = vcmp.ge.f32.partialorder %v6436, 0.0
      %vm6483 = vcmp.ge.f32.partialorder %v6441, 0.0
      %vm6484 = vcmp.ge.f32.partialorder %v6444, 0.0
      %vm6485 = vcmp.ge.f32.partialorder %v6449, 0.0
      %vm6486 = vcmp.ge.f32.partialorder %v6452, 0.0
      %v6487 = vmul.f32 %v6329, 0.01
      %v6488 = vmul.f32 %v6332, 0.01
      %v6489 = vmul.f32 %v6337, 0.01
      %v6490 = vmul.f32 %v6340, 0.01
      %v6491 = vmul.f32 %v6345, 0.01
      %v6492 = vmul.f32 %v6348, 0.01
      %v6493 = vmul.f32 %v6353, 0.01
      %v6494 = vmul.f32 %v6356, 0.01
      %v6495 = vmul.f32 %v6361, 0.01
      %v6496 = vmul.f32 %v6364, 0.01
      %v6497 = vmul.f32 %v6369, 0.01
      %v6498 = vmul.f32 %v6372, 0.01
      %v6499 = vmul.f32 %v6377, 0.01
      %v6500 = vmul.f32 %v6380, 0.01
      %v6501 = vmul.f32 %v6385, 0.01
      %v6502 = vmul.f32 %v6388, 0.01
      %v6503 = vmul.f32 %v6393, 0.01
      %v6504 = vmul.f32 %v6396, 0.01
      %v6505 = vmul.f32 %v6401, 0.01
      %v6506 = vmul.f32 %v6404, 0.01
      %v6507 = vmul.f32 %v6409, 0.01
      %v6508 = vmul.f32 %v6412, 0.01
      %v6509 = vmul.f32 %v6417, 0.01
      %v6510 = vmul.f32 %v6420, 0.01
      %v6511 = vmul.f32 %v6425, 0.01
      %v6512 = vmul.f32 %v6428, 0.01
      %v6513 = vmul.f32 %v6433, 0.01
      %v6514 = vmul.f32 %v6436, 0.01
      %v6515 = vmul.f32 %v6441, 0.01
      %v6516 = vmul.f32 %v6444, 0.01
      %v6517 = vmul.f32 %v6449, 0.01
      %v6518 = vmul.f32 %v6452, 0.01
      %v6519 = vsel %vm6455, %v6329, %v6487
      %v6520 = vsel %vm6456, %v6332, %v6488
      %v6521 = vsel %vm6457, %v6337, %v6489
      %v6522 = vsel %vm6458, %v6340, %v6490
      %v6523 = vsel %vm6459, %v6345, %v6491
      %v6524 = vsel %vm6460, %v6348, %v6492
      %v6525 = vsel %vm6461, %v6353, %v6493
      %v6526 = vsel %vm6462, %v6356, %v6494
      %v6527 = vsel %vm6463, %v6361, %v6495
      %v6528 = vsel %vm6464, %v6364, %v6496
      %v6529 = vsel %vm6465, %v6369, %v6497
      %v6530 = vsel %vm6466, %v6372, %v6498
      %v6531 = vsel %vm6467, %v6377, %v6499
      %v6532 = vsel %vm6468, %v6380, %v6500
      %v6533 = vsel %vm6469, %v6385, %v6501
      %v6534 = vsel %vm6470, %v6388, %v6502
      %v6535 = vsel %vm6471, %v6393, %v6503
      %v6536 = vsel %vm6472, %v6396, %v6504
      %v6537 = vsel %vm6473, %v6401, %v6505
      %v6538 = vsel %vm6474, %v6404, %v6506
      %v6539 = vsel %vm6475, %v6409, %v6507
      %v6540 = vsel %vm6476, %v6412, %v6508
      %v6541 = vsel %vm6477, %v6417, %v6509
      %v6542 = vsel %vm6478, %v6420, %v6510
      %v6543 = vsel %vm6479, %v6425, %v6511
      %v6544 = vsel %vm6480, %v6428, %v6512
      %v6545 = vsel %vm6481, %v6433, %v6513
      %v6546 = vsel %vm6482, %v6436, %v6514
      %v6547 = vsel %vm6483, %v6441, %v6515
      %v6548 = vsel %vm6484, %v6444, %v6516
      %v6549 = vsel %vm6485, %v6449, %v6517
      %v6550 = vsel %vm6486, %v6452, %v6518
      %vm6551 = vcmask 23552
      %6552 = vst.msk [vmem:[%s278] sm:$0xff] %vm6551, %v6519
      %6553 = vst.msk [vmem:[%s278 + $0x8] sm:$0xff] %vm6551, %v6520
      %6554 = vst.msk [vmem:[%s278 + $0x10] sm:$0xff] %vm6551, %v6521
      %6555 = vst.msk [vmem:[%s278 + $0x18] sm:$0xff] %vm6551, %v6522
      %6556 = vst.msk [vmem:[%s278 + $0x20] sm:$0xff] %vm6551, %v6523
      %6557 = vst.msk [vmem:[%s278 + $0x28] sm:$0xff] %vm6551, %v6524
      %6558 = vst.msk [vmem:[%s278 + $0x30] sm:$0xff] %vm6551, %v6525
      %6559 = vst.msk [vmem:[%s278 + $0x38] sm:$0xff] %vm6551, %v6526
      %6560 = vst.msk [vmem:[%s278 + $0x40] sm:$0xff] %vm6551, %v6527
      %6561 = vst.msk [vmem:[%s278 + $0x48] sm:$0xff] %vm6551, %v6528
      %6562 = vst.msk [vmem:[%s278 + $0x50] sm:$0xff] %vm6551, %v6529
      %6563 = vst.msk [vmem:[%s278 + $0x58] sm:$0xff] %vm6551, %v6530
      %6564 = vst.msk [vmem:[%s278 + $0x60] sm:$0xff] %vm6551, %v6531
      %6565 = vst.msk [vmem:[%s278 + $0x68] sm:$0xff] %vm6551, %v6532
      %6566 = vst.msk [vmem:[%s278 + $0x70] sm:$0xff] %vm6551, %v6533
      %6567 = vst.msk [vmem:[%s278 + $0x78] sm:$0xff] %vm6551, %v6534
      %6568 = vst.msk [vmem:[%s278 + $0x80] sm:$0xff] %vm6551, %v6535
      %6569 = vst.msk [vmem:[%s278 + $0x88] sm:$0xff] %vm6551, %v6536
      %6570 = vst.msk [vmem:[%s278 + $0x90] sm:$0xff] %vm6551, %v6537
      %6571 = vst.msk [vmem:[%s278 + $0x98] sm:$0xff] %vm6551, %v6538
      %6572 = vst.msk [vmem:[%s278 + $0xa0] sm:$0xff] %vm6551, %v6539
      %6573 = vst.msk [vmem:[%s278 + $0xa8] sm:$0xff] %vm6551, %v6540
      %6574 = vst.msk [vmem:[%s278 + $0xb0] sm:$0xff] %vm6551, %v6541
      %6575 = vst.msk [vmem:[%s278 + $0xb8] sm:$0xff] %vm6551, %v6542
      %6576 = vst.msk [vmem:[%s278 + $0xc0] sm:$0xff] %vm6551, %v6543
      %6577 = vst.msk [vmem:[%s278 + $0xc8] sm:$0xff] %vm6551, %v6544
      %6578 = vst.msk [vmem:[%s278 + $0xd0] sm:$0xff] %vm6551, %v6545
      %6579 = vst.msk [vmem:[%s278 + $0xd8] sm:$0xff] %vm6551, %v6546
      %6580 = vst.msk [vmem:[%s278 + $0xe0] sm:$0xff] %vm6551, %v6547
      %6581 = vst.msk [vmem:[%s278 + $0xe8] sm:$0xff] %vm6551, %v6548
      %6582 = vst.msk [vmem:[%s278 + $0xf0] sm:$0xff] %vm6551, %v6549
      %6583 = vst.msk [vmem:[%s278 + $0xf8] sm:$0xff] %vm6551, %v6550
      %p6584 = scmp.lt.s32.totalorder %s18, 1
      %s6585 = scalar_select %p6584, %s18, 1
      %s6586 = smul.addr %s6585, 32
      %s6587 = smul.addr %s6586, 8
      %s6588 = scalar_lea.vmem %s7, %s6587
      // Predicated region
      $region49: #{tpu_custom_call.1} parent=47 // pred_check
        %p6589 = pneg %p188
      $region50: #{tpu_custom_call.1} parent=47 // pred_check_branch
        %6591 = sbr.rel (%p6589) target = $region52
      $region51: #{tpu_custom_call.1} parent=47 // pred_region
        _
      $region52: #{tpu_custom_call.1} parent=47 // pred_fallthru
        _
    $region48: #{tpu_custom_call.1} parent=5 // pred_fallthru
      _
    %p6592 = scmp.le.s32.totalorder 2, %s13
    // Predicated region
    $region53: #{tpu_custom_call.1} parent=5 // pred_check
      %p6593 = pneg %p6592
    $region54: #{tpu_custom_call.1} parent=5 // pred_check_branch
      %6595 = sbr.rel (%p6593) target = $region56
    $region55: #{tpu_custom_call.1} parent=5 // pred_region
      %s6596 = ssub.s32 %s13, 2
      // Predicated region
      $region57: #{tpu_custom_call.1} parent=55 // pred_check
        %p6597 = pneg %p194
      $region58: #{tpu_custom_call.1} parent=55 // pred_check_branch
        %6599 = sbr.rel (%p6597) target = $region60
      $region59: #{tpu_custom_call.1} parent=55 // pred_region
        %p6600 = scmp.lt.s32.totalorder %s19, 1
        %s6601 = scalar_select %p6600, %s19, 1
        %s6602 = smul.addr %s6601, 32
        %s6603 = smul.addr %s6602, 8
        %s6604 = scalar_lea.vmem %s7, %s6603
      $region60: #{tpu_custom_call.1} parent=55 // pred_fallthru
        _
    $region56: #{tpu_custom_call.1} parent=5 // pred_fallthru
      _
  $region6: #{tpu_custom_call.1} parent=0 // loop_footer
    %s17 = sadd.s32 1, %s13
  $region7: #{tpu_custom_call.1} parent=0 // loop_footer_branch
    %12 = sbr.rel target = $region3
  $region8: #{tpu_custom_call.1} parent=0 // loop_exit
    _

</llo_original>
